<compile_context>
chip_gen: v6e
topology: v6e:2x2x1
jax: 0.10.0
libtpu: 0.0.40
codegen_flags: <defaults>
</compile_context>

<pallas_src>
import functools

import jax
import jax.numpy as jnp
from jax.experimental import pallas as pl
from jax.experimental.pallas import tpu as pltpu

INPUT_SIZE = 2
CONDITION_SIZE = 4
HIDDEN_SIZE = 128
LATENT_SIZE = 32


def cvae_kernel(
    # data
    enc_in_ref,    # (T*B, input+1)   time-major, flattened encoder input
    cond_ref,      # (B, condition)
    eps_ref,       # (B, latent)      reparameterization noise
    sp_ref,        # (B, input)       decoder start point
    # encoder LSTM
    wih_e_ref,     # (input+1, 4H)
    whh_e_ref,     # (H, 4H)
    b_e_ref,       # (1, 4H)          b_ih + b_hh
    # fc_mu / fc_logvar
    wmu_ref,       # (H+cond, latent)
    bmu_ref,       # (1, latent)
    wlv_ref,       # (H+cond, latent)
    blv_ref,       # (1, latent)
    # decoder LSTM (preprocessed in the wrapper)
    wxd_ref,       # (input, 4H)                  x-rows of wih_d
    wzcd_ref,      # (latent+cond, 4H)            z/cond-rows of wih_d
    bd_ref,        # (1, 4H)                      b_d + 0.05 * W_dt row
    whhd_ref,      # (H, 4H)                      whh_d + wo @ W_x  (output fold)
    bowx_ref,      # (1, 4H)                      bo @ W_x
    # output layer
    wo_ref,        # (H, input)
    bo_ref,        # (1, input)
    # outputs
    out_ref,       # (T*B, input)     time-major, flattened decoded sequence
    mu_ref,        # (B, latent)
    lv_ref,        # (B, latent)
):
    B = cond_ref.shape[0]
    TB = enc_in_ref.shape[0]
    T = TB // B
    H = whh_e_ref.shape[0]

    # Hoist loop-invariant reads out of the recurrences.
    whh_e = whh_e_ref[...]
    whh_d = whhd_ref[...]
    cond = cond_ref[...]

    def apply_gates(gates, c):
        # PyTorch LSTM gate order: i, f, g, o.  Aligned 128-lane slices.
        i = jax.nn.sigmoid(gates[:, 0 * H:1 * H])
        f = jax.nn.sigmoid(gates[:, 1 * H:2 * H])
        g = jnp.tanh(gates[:, 2 * H:3 * H])
        o = jax.nn.sigmoid(gates[:, 3 * H:4 * H])
        c_new = (i * g) if c is None else (f * c + i * g)
        h_new = o * jnp.tanh(c_new)
        return h_new, c_new

    # ---------------- encoder ----------------
    # Hoisted input projection: all T timesteps in one MXU push, bias folded in.
    pre_enc = (
        jnp.dot(enc_in_ref[...], wih_e_ref[...], preferred_element_type=jnp.float32)
        + b_e_ref[...]
    )  # (T*B, 4H)

    # Step 0: h = c = 0, so gates are just the precomputed input projection.
    h, c = apply_gates(pre_enc[0:B, :], None)
    # Fully unrolled recurrence: a single serialized h @ W_hh matmul per step.
    for t in range(1, T):
        gates = pre_enc[t * B:(t + 1) * B, :] + jnp.dot(
            h, whh_e, preferred_element_type=jnp.float32)
        h, c = apply_gates(gates, c)

    # ---------------- latent heads ----------------
    h_cat = jnp.concatenate([h, cond], axis=-1)  # (B, H+cond), concat at lane 128
    mu = jnp.dot(h_cat, wmu_ref[...], preferred_element_type=jnp.float32) + bmu_ref[...]
    logvar = jnp.dot(h_cat, wlv_ref[...], preferred_element_type=jnp.float32) + blv_ref[...]
    mu_ref[...] = mu
    lv_ref[...] = logvar

    # ---------------- reparameterize ----------------
    z = mu + eps_ref[...] * jnp.exp(0.5 * logvar)  # (B, latent)

    # ---------------- decoder ----------------
    # Time-invariant gate contribution (z, cond, delta_t, biases) computed once.
    zc = jnp.concatenate([z, cond], axis=-1)                          # (B, latent+cond)
    static_base = (
        jnp.dot(zc, wzcd_ref[...], preferred_element_type=jnp.float32) + bd_ref[...]
    )                                                                 # (B, 4H)
    static_rest = static_base + bowx_ref[...]                         # adds bo @ W_x

    # Step 0: x_0 = start_point, h = c = 0.
    gates0 = (
        jnp.dot(sp_ref[...], wxd_ref[...], preferred_element_type=jnp.float32)
        + static_base
    )
    h, c = apply_gates(gates0, None)
    hs = [h]
    # Steps 1..T-1: output projection folded into W_hh, one matmul per step.
    for t in range(1, T):
        gates = jnp.dot(h, whh_d, preferred_element_type=jnp.float32) + static_rest
        h, c = apply_gates(gates, c)
        hs.append(h)

    # Batched output projection + single store (out[t] = h_t @ wo + bo).
    h_all = jnp.concatenate(hs, axis=0)  # (T*B, H)
    out_ref[...] = (
        jnp.dot(h_all, wo_ref[...], preferred_element_type=jnp.float32) + bo_ref[...]
    )


def init_params(key, input_size=INPUT_SIZE, condition_size=CONDITION_SIZE,
                hidden_size=HIDDEN_SIZE, latent_size=LATENT_SIZE):
    """Deterministic synthetic parameters (PyTorch-like uniform init),
    already transposed to (in, out) layout."""
    ks = jax.random.split(key, 16)
    H = hidden_size
    s = 1.0 / jnp.sqrt(jnp.float32(H))

    def u(k, shape, scale):
        return jax.random.uniform(k, shape, jnp.float32, -scale, scale)

    enc_in_dim = input_size + 1
    dec_in_dim = input_size + latent_size + condition_size + 1
    fc_in_dim = H + condition_size
    sf = 1.0 / jnp.sqrt(jnp.float32(fc_in_dim))

    return dict(
        # encoder LSTM
        wih_e=u(ks[0], (enc_in_dim, 4 * H), s),
        whh_e=u(ks[1], (H, 4 * H), s),
        b_e=(u(ks[2], (1, 4 * H), s) + u(ks[3], (1, 4 * H), s)),
        # fc_mu / fc_logvar
        wmu=u(ks[4], (fc_in_dim, latent_size), sf),
        bmu=u(ks[5], (1, latent_size), sf),
        wlv=u(ks[6], (fc_in_dim, latent_size), sf),
        blv=u(ks[7], (1, latent_size), sf),
        # decoder LSTM
        wih_d=u(ks[8], (dec_in_dim, 4 * H), s),
        whh_d=u(ks[9], (H, 4 * H), s),
        b_d=(u(ks[10], (1, 4 * H), s) + u(ks[11], (1, 4 * H), s)),
        # output layer
        wo=u(ks[12], (H, input_size), s),
        bo=u(ks[13], (1, input_size), s),
    )


@functools.partial(jax.jit, static_argnames=("seq_len",))
def cvae_forward(x, time_intervals, condition, eps, params, seq_len):
    """x: (B, T, input), time_intervals: (B, T), condition: (B, cond), eps: (B, latent)."""
    B, T, _ = x.shape
    assert seq_len == T
    p = params

    # Glue: concat time intervals, go time-major and flatten for the kernel.
    enc_in = jnp.concatenate([x, time_intervals[..., None]], axis=-1)          # (B, T, 3)
    enc_in_flat = (
        jnp.transpose(enc_in, (1, 0, 2)).reshape(T * B, INPUT_SIZE + 1)
    ).astype(jnp.float32)                                                      # (T*B, 3)
    start_point = x[:, 0, :].astype(jnp.float32)

    # ---- parameter-only algebraic folds (see kernel header) ----
    zc_hi = INPUT_SIZE + LATENT_SIZE + CONDITION_SIZE
    w_x_d = p["wih_d"][:INPUT_SIZE, :]                 # (2, 4H)
    w_zc_d = p["wih_d"][INPUT_SIZE:zc_hi, :]           # (36, 4H)
    w_dt_d = p["wih_d"][zc_hi:, :]                     # (1, 4H)
    b_d_eff = p["b_d"] + 0.05 * w_dt_d                 # fold constant delta_t into bias
    whh_d_fused = p["whh_d"] + p["wo"] @ w_x_d         # fold output proj into recurrence
    bo_wx = p["bo"] @ w_x_d                            # (1, 4H)

    inputs = (
        enc_in_flat, condition.astype(jnp.float32), eps.astype(jnp.float32), start_point,
        p["wih_e"], p["whh_e"], p["b_e"],
        p["wmu"], p["bmu"], p["wlv"], p["blv"],
        w_x_d, w_zc_d, b_d_eff, whh_d_fused, bo_wx,
        p["wo"], p["bo"],
    )

    vmem = pl.BlockSpec(memory_space=pltpu.MemorySpace.VMEM)
    out_flat, mu, logvar = pl.pallas_call(
        cvae_kernel,
        out_shape=(
            jax.ShapeDtypeStruct((T * B, INPUT_SIZE), jnp.float32),
            jax.ShapeDtypeStruct((B, LATENT_SIZE), jnp.float32),
            jax.ShapeDtypeStruct((B, LATENT_SIZE), jnp.float32),
        ),
        in_specs=[vmem] * len(inputs),
        out_specs=(vmem, vmem, vmem),
    )(*inputs)

    outputs = out_flat.reshape(T, B, INPUT_SIZE).transpose(1, 0, 2)  # (B, T, input)
    return outputs, mu, logvar


def cvae_forward_ref(x, time_intervals, condition, eps, params, seq_len):
    """Pure-JAX reference using the ORIGINAL (unfused) parameters — validates
    the algebraic folds done in the wrapper/kernel."""
    B, T, _ = x.shape
    H = HIDDEN_SIZE
    p = params
    enc_in = jnp.concatenate([x, time_intervals[..., None]], axis=-1)

    def cell(x_t, h, c, wih, whh, b):
        g = x_t @ wih + h @ whh + b
        i = jax.nn.sigmoid(g[:, :H]); f = jax.nn.sigmoid(g[:, H:2 * H])
        gg = jnp.tanh(g[:, 2 * H:3 * H]); o = jax.nn.sigmoid(g[:, 3 * H:])
        c = f * c + i * gg
        return o * jnp.tanh(c), c

    h = jnp.zeros((B, H)); c = jnp.zeros((B, H))
    for t in range(T):
        h, c = cell(enc_in[:, t, :], h, c, p["wih_e"], p["whh_e"], p["b_e"])
    h_cat = jnp.concatenate([h, condition], axis=-1)
    mu = h_cat @ p["wmu"] + p["bmu"]
    logvar = h_cat @ p["wlv"] + p["blv"]
    z = mu + eps * jnp.exp(0.5 * logvar)

    hd = jnp.zeros((B, H)); cd = jnp.zeros((B, H))
    x_t = x[:, 0, :]
    delta = jnp.full((B, 1), 0.05)
    outs = []
    for t in range(seq_len):
        din = jnp.concatenate([x_t, z, condition, delta], axis=-1)
        hd, cd = cell(din, hd, cd, p["wih_d"], p["whh_d"], p["b_d"])
        x_t = hd @ p["wo"] + p["bo"]
        outs.append(x_t[:, None, :])
    return jnp.concatenate(outs, axis=1), mu, logvar


if __name__ == "__main__":
    import numpy as np

    B, T = 2, 8
    key = jax.random.PRNGKey(0)
    k_x, k_ti, k_c, k_eps, k_p = jax.random.split(key, 5)

    x = jax.random.normal(k_x, (B, T, INPUT_SIZE), jnp.float32)
    time_intervals = jax.random.uniform(k_ti, (B, T), jnp.float32, 0.01, 0.1)
    condition = jax.random.normal(k_c, (B, CONDITION_SIZE), jnp.float32)
    eps = jax.random.normal(k_eps, (B, LATENT_SIZE), jnp.float32)
    params = init_params(k_p)

    outputs, mu, logvar = cvae_forward(x, time_intervals, condition, eps, params, seq_len=T)
    jax.block_until_ready((outputs, mu, logvar))

    ref_out, ref_mu, ref_lv = cvae_forward_ref(x, time_intervals, condition, eps, params, seq_len=T)
    np.testing.assert_allclose(np.asarray(mu), np.asarray(ref_mu), rtol=2e-4, atol=2e-5)
    np.testing.assert_allclose(np.asarray(logvar), np.asarray(ref_lv), rtol=2e-4, atol=2e-5)
    np.testing.assert_allclose(np.asarray(outputs), np.asarray(ref_out), rtol=5e-4, atol=5e-5)

    assert outputs.shape == (B, T, INPUT_SIZE)
    assert mu.shape == (B, LATENT_SIZE) and logvar.shape == (B, LATENT_SIZE)
    print("KERNEL_OK")
</pallas_src>

<mosaic_0001>
module attributes {stable_mosaic.version = 11 : i64} {
  func.func @cvae_kernel(%arg0: memref<16x3xf32, #tpu.memory_space<vmem>>, %arg1: memref<2x4xf32, #tpu.memory_space<vmem>>, %arg2: memref<2x32xf32, #tpu.memory_space<vmem>>, %arg3: memref<2x2xf32, #tpu.memory_space<vmem>>, %arg4: memref<3x512xf32, #tpu.memory_space<vmem>>, %arg5: memref<128x512xf32, #tpu.memory_space<vmem>>, %arg6: memref<1x512xf32, #tpu.memory_space<vmem>>, %arg7: memref<132x32xf32, #tpu.memory_space<vmem>>, %arg8: memref<1x32xf32, #tpu.memory_space<vmem>>, %arg9: memref<132x32xf32, #tpu.memory_space<vmem>>, %arg10: memref<1x32xf32, #tpu.memory_space<vmem>>, %arg11: memref<2x512xf32, #tpu.memory_space<vmem>>, %arg12: memref<36x512xf32, #tpu.memory_space<vmem>>, %arg13: memref<1x512xf32, #tpu.memory_space<vmem>>, %arg14: memref<128x512xf32, #tpu.memory_space<vmem>>, %arg15: memref<1x512xf32, #tpu.memory_space<vmem>>, %arg16: memref<128x2xf32, #tpu.memory_space<vmem>>, %arg17: memref<1x2xf32, #tpu.memory_space<vmem>>, %arg18: memref<16x2xf32, #tpu.memory_space<vmem>>, %arg19: memref<2x32xf32, #tpu.memory_space<vmem>>, %arg20: memref<2x32xf32, #tpu.memory_space<vmem>>) attributes {dimension_semantics = [], scalar_prefetch = 0 : i64, scratch_operands = 0 : i64, tpu.core_type = #tpu.core_type<tc>} {
    %c0 = arith.constant 0 : index
    %c0_0 = arith.constant 0 : index
    %0 = vector.load %arg5[%c0, %c0_0] : memref<128x512xf32, #tpu.memory_space<vmem>>, vector<128x512xf32>
    %c0_1 = arith.constant 0 : index
    %c0_2 = arith.constant 0 : index
    %1 = vector.load %arg14[%c0_1, %c0_2] : memref<128x512xf32, #tpu.memory_space<vmem>>, vector<128x512xf32>
    %c0_3 = arith.constant 0 : index
    %c0_4 = arith.constant 0 : index
    %2 = vector.load %arg1[%c0_3, %c0_4] : memref<2x4xf32, #tpu.memory_space<vmem>>, vector<2x4xf32>
    %c0_5 = arith.constant 0 : index
    %c0_6 = arith.constant 0 : index
    %3 = vector.load %arg0[%c0_5, %c0_6] : memref<16x3xf32, #tpu.memory_space<vmem>>, vector<16x3xf32>
    %c0_7 = arith.constant 0 : index
    %c0_8 = arith.constant 0 : index
    %4 = vector.load %arg4[%c0_7, %c0_8] : memref<3x512xf32, #tpu.memory_space<vmem>>, vector<3x512xf32>
    %cst = arith.constant dense<0.000000e+00> : vector<16x512xf32>
    %5 = tpu.matmul %3, %4, %cst {dimension_numbers = #tpu.dot_dimension_numbers<[1], [0], [0], [1], [0, 0, 1, 1], [], []>} : vector<16x3xf32>, vector<3x512xf32>, vector<16x512xf32> -> vector<16x512xf32>
    %c0_9 = arith.constant 0 : index
    %c0_10 = arith.constant 0 : index
    %6 = vector.load %arg6[%c0_9, %c0_10] : memref<1x512xf32, #tpu.memory_space<vmem>>, vector<1x512xf32>
    %7 = vector.broadcast %6 : vector<1x512xf32> to vector<16x512xf32>
    %8 = arith.addf %5, %7 : vector<16x512xf32>
    %9 = vector.extract_strided_slice %8 {offsets = [0, 0], sizes = [2, 512], strides = [1, 1]} : vector<16x512xf32> to vector<2x512xf32>
    %10 = vector.extract_strided_slice %9 {offsets = [0, 0], sizes = [2, 128], strides = [1, 1]} : vector<2x512xf32> to vector<2x128xf32>
    %11 = arith.negf %10 : vector<2x128xf32>
    %12 = math.exp %11 : vector<2x128xf32>
    %cst_11 = arith.constant 1.000000e+00 : f32
    %13 = vector.broadcast %cst_11 : f32 to vector<2x128xf32>
    %14 = arith.addf %13, %12 : vector<2x128xf32>
    %15 = arith.divf %13, %14 : vector<2x128xf32>
    %16 = vector.extract_strided_slice %9 {offsets = [0, 256], sizes = [2, 128], strides = [1, 1]} : vector<2x512xf32> to vector<2x128xf32>
    %17 = math.tanh %16 : vector<2x128xf32>
    %18 = vector.extract_strided_slice %9 {offsets = [0, 384], sizes = [2, 128], strides = [1, 1]} : vector<2x512xf32> to vector<2x128xf32>
    %19 = arith.negf %18 : vector<2x128xf32>
    %20 = math.exp %19 : vector<2x128xf32>
    %cst_12 = arith.constant 1.000000e+00 : f32
    %21 = vector.broadcast %cst_12 : f32 to vector<2x128xf32>
    %22 = arith.addf %21, %20 : vector<2x128xf32>
    %23 = arith.divf %21, %22 : vector<2x128xf32>
    %24 = arith.mulf %15, %17 : vector<2x128xf32>
    %25 = math.tanh %24 : vector<2x128xf32>
    %26 = arith.mulf %23, %25 : vector<2x128xf32>
    %27 = vector.extract_strided_slice %8 {offsets = [2, 0], sizes = [2, 512], strides = [1, 1]} : vector<16x512xf32> to vector<2x512xf32>
    %cst_13 = arith.constant dense<0.000000e+00> : vector<2x512xf32>
    %28 = tpu.matmul %26, %0, %cst_13 {dimension_numbers = #tpu.dot_dimension_numbers<[1], [0], [0], [1], [0, 0, 1, 1], [], []>} : vector<2x128xf32>, vector<128x512xf32>, vector<2x512xf32> -> vector<2x512xf32>
    %29 = arith.addf %27, %28 : vector<2x512xf32>
    %30 = vector.extract_strided_slice %29 {offsets = [0, 0], sizes = [2, 128], strides = [1, 1]} : vector<2x512xf32> to vector<2x128xf32>
    %31 = arith.negf %30 : vector<2x128xf32>
    %32 = math.exp %31 : vector<2x128xf32>
    %cst_14 = arith.constant 1.000000e+00 : f32
    %33 = vector.broadcast %cst_14 : f32 to vector<2x128xf32>
    %34 = arith.addf %33, %32 : vector<2x128xf32>
    %35 = arith.divf %33, %34 : vector<2x128xf32>
    %36 = vector.extract_strided_slice %29 {offsets = [0, 128], sizes = [2, 128], strides = [1, 1]} : vector<2x512xf32> to vector<2x128xf32>
    %37 = arith.negf %36 : vector<2x128xf32>
    %38 = math.exp %37 : vector<2x128xf32>
    %cst_15 = arith.constant 1.000000e+00 : f32
    %39 = vector.broadcast %cst_15 : f32 to vector<2x128xf32>
    %40 = arith.addf %39, %38 : vector<2x128xf32>
    %41 = arith.divf %39, %40 : vector<2x128xf32>
    %42 = vector.extract_strided_slice %29 {offsets = [0, 256], sizes = [2, 128], strides = [1, 1]} : vector<2x512xf32> to vector<2x128xf32>
    %43 = math.tanh %42 : vector<2x128xf32>
    %44 = vector.extract_strided_slice %29 {offsets = [0, 384], sizes = [2, 128], strides = [1, 1]} : vector<2x512xf32> to vector<2x128xf32>
    %45 = arith.negf %44 : vector<2x128xf32>
    %46 = math.exp %45 : vector<2x128xf32>
    %cst_16 = arith.constant 1.000000e+00 : f32
    %47 = vector.broadcast %cst_16 : f32 to vector<2x128xf32>
    %48 = arith.addf %47, %46 : vector<2x128xf32>
    %49 = arith.divf %47, %48 : vector<2x128xf32>
    %50 = arith.mulf %41, %24 : vector<2x128xf32>
    %51 = arith.mulf %35, %43 : vector<2x128xf32>
    %52 = arith.addf %50, %51 : vector<2x128xf32>
    %53 = math.tanh %52 : vector<2x128xf32>
    %54 = arith.mulf %49, %53 : vector<2x128xf32>
    %55 = vector.extract_strided_slice %8 {offsets = [4, 0], sizes = [2, 512], strides = [1, 1]} : vector<16x512xf32> to vector<2x512xf32>
    %cst_17 = arith.constant dense<0.000000e+00> : vector<2x512xf32>
    %56 = tpu.matmul %54, %0, %cst_17 {dimension_numbers = #tpu.dot_dimension_numbers<[1], [0], [0], [1], [0, 0, 1, 1], [], []>} : vector<2x128xf32>, vector<128x512xf32>, vector<2x512xf32> -> vector<2x512xf32>
    %57 = arith.addf %55, %56 : vector<2x512xf32>
    %58 = vector.extract_strided_slice %57 {offsets = [0, 0], sizes = [2, 128], strides = [1, 1]} : vector<2x512xf32> to vector<2x128xf32>
    %59 = arith.negf %58 : vector<2x128xf32>
    %60 = math.exp %59 : vector<2x128xf32>
    %cst_18 = arith.constant 1.000000e+00 : f32
    %61 = vector.broadcast %cst_18 : f32 to vector<2x128xf32>
    %62 = arith.addf %61, %60 : vector<2x128xf32>
    %63 = arith.divf %61, %62 : vector<2x128xf32>
    %64 = vector.extract_strided_slice %57 {offsets = [0, 128], sizes = [2, 128], strides = [1, 1]} : vector<2x512xf32> to vector<2x128xf32>
    %65 = arith.negf %64 : vector<2x128xf32>
    %66 = math.exp %65 : vector<2x128xf32>
    %cst_19 = arith.constant 1.000000e+00 : f32
    %67 = vector.broadcast %cst_19 : f32 to vector<2x128xf32>
    %68 = arith.addf %67, %66 : vector<2x128xf32>
    %69 = arith.divf %67, %68 : vector<2x128xf32>
    %70 = vector.extract_strided_slice %57 {offsets = [0, 256], sizes = [2, 128], strides = [1, 1]} : vector<2x512xf32> to vector<2x128xf32>
    %71 = math.tanh %70 : vector<2x128xf32>
    %72 = vector.extract_strided_slice %57 {offsets = [0, 384], sizes = [2, 128], strides = [1, 1]} : vector<2x512xf32> to vector<2x128xf32>
    %73 = arith.negf %72 : vector<2x128xf32>
    %74 = math.exp %73 : vector<2x128xf32>
    %cst_20 = arith.constant 1.000000e+00 : f32
    %75 = vector.broadcast %cst_20 : f32 to vector<2x128xf32>
    %76 = arith.addf %75, %74 : vector<2x128xf32>
    %77 = arith.divf %75, %76 : vector<2x128xf32>
    %78 = arith.mulf %69, %52 : vector<2x128xf32>
    %79 = arith.mulf %63, %71 : vector<2x128xf32>
    %80 = arith.addf %78, %79 : vector<2x128xf32>
    %81 = math.tanh %80 : vector<2x128xf32>
    %82 = arith.mulf %77, %81 : vector<2x128xf32>
    %83 = vector.extract_strided_slice %8 {offsets = [6, 0], sizes = [2, 512], strides = [1, 1]} : vector<16x512xf32> to vector<2x512xf32>
    %cst_21 = arith.constant dense<0.000000e+00> : vector<2x512xf32>
    %84 = tpu.matmul %82, %0, %cst_21 {dimension_numbers = #tpu.dot_dimension_numbers<[1], [0], [0], [1], [0, 0, 1, 1], [], []>} : vector<2x128xf32>, vector<128x512xf32>, vector<2x512xf32> -> vector<2x512xf32>
    %85 = arith.addf %83, %84 : vector<2x512xf32>
    %86 = vector.extract_strided_slice %85 {offsets = [0, 0], sizes = [2, 128], strides = [1, 1]} : vector<2x512xf32> to vector<2x128xf32>
    %87 = arith.negf %86 : vector<2x128xf32>
    %88 = math.exp %87 : vector<2x128xf32>
    %cst_22 = arith.constant 1.000000e+00 : f32
    %89 = vector.broadcast %cst_22 : f32 to vector<2x128xf32>
    %90 = arith.addf %89, %88 : vector<2x128xf32>
    %91 = arith.divf %89, %90 : vector<2x128xf32>
    %92 = vector.extract_strided_slice %85 {offsets = [0, 128], sizes = [2, 128], strides = [1, 1]} : vector<2x512xf32> to vector<2x128xf32>
    %93 = arith.negf %92 : vector<2x128xf32>
    %94 = math.exp %93 : vector<2x128xf32>
    %cst_23 = arith.constant 1.000000e+00 : f32
    %95 = vector.broadcast %cst_23 : f32 to vector<2x128xf32>
    %96 = arith.addf %95, %94 : vector<2x128xf32>
    %97 = arith.divf %95, %96 : vector<2x128xf32>
    %98 = vector.extract_strided_slice %85 {offsets = [0, 256], sizes = [2, 128], strides = [1, 1]} : vector<2x512xf32> to vector<2x128xf32>
    %99 = math.tanh %98 : vector<2x128xf32>
    %100 = vector.extract_strided_slice %85 {offsets = [0, 384], sizes = [2, 128], strides = [1, 1]} : vector<2x512xf32> to vector<2x128xf32>
    %101 = arith.negf %100 : vector<2x128xf32>
    %102 = math.exp %101 : vector<2x128xf32>
    %cst_24 = arith.constant 1.000000e+00 : f32
    %103 = vector.broadcast %cst_24 : f32 to vector<2x128xf32>
    %104 = arith.addf %103, %102 : vector<2x128xf32>
    %105 = arith.divf %103, %104 : vector<2x128xf32>
    %106 = arith.mulf %97, %80 : vector<2x128xf32>
    %107 = arith.mulf %91, %99 : vector<2x128xf32>
    %108 = arith.addf %106, %107 : vector<2x128xf32>
    %109 = math.tanh %108 : vector<2x128xf32>
    %110 = arith.mulf %105, %109 : vector<2x128xf32>
    %111 = vector.extract_strided_slice %8 {offsets = [8, 0], sizes = [2, 512], strides = [1, 1]} : vector<16x512xf32> to vector<2x512xf32>
    %cst_25 = arith.constant dense<0.000000e+00> : vector<2x512xf32>
    %112 = tpu.matmul %110, %0, %cst_25 {dimension_numbers = #tpu.dot_dimension_numbers<[1], [0], [0], [1], [0, 0, 1, 1], [], []>} : vector<2x128xf32>, vector<128x512xf32>, vector<2x512xf32> -> vector<2x512xf32>
    %113 = arith.addf %111, %112 : vector<2x512xf32>
    %114 = vector.extract_strided_slice %113 {offsets = [0, 0], sizes = [2, 128], strides = [1, 1]} : vector<2x512xf32> to vector<2x128xf32>
    %115 = arith.negf %114 : vector<2x128xf32>
    %116 = math.exp %115 : vector<2x128xf32>
    %cst_26 = arith.constant 1.000000e+00 : f32
    %117 = vector.broadcast %cst_26 : f32 to vector<2x128xf32>
    %118 = arith.addf %117, %116 : vector<2x128xf32>
    %119 = arith.divf %117, %118 : vector<2x128xf32>
    %120 = vector.extract_strided_slice %113 {offsets = [0, 128], sizes = [2, 128], strides = [1, 1]} : vector<2x512xf32> to vector<2x128xf32>
    %121 = arith.negf %120 : vector<2x128xf32>
    %122 = math.exp %121 : vector<2x128xf32>
    %cst_27 = arith.constant 1.000000e+00 : f32
    %123 = vector.broadcast %cst_27 : f32 to vector<2x128xf32>
    %124 = arith.addf %123, %122 : vector<2x128xf32>
    %125 = arith.divf %123, %124 : vector<2x128xf32>
    %126 = vector.extract_strided_slice %113 {offsets = [0, 256], sizes = [2, 128], strides = [1, 1]} : vector<2x512xf32> to vector<2x128xf32>
    %127 = math.tanh %126 : vector<2x128xf32>
    %128 = vector.extract_strided_slice %113 {offsets = [0, 384], sizes = [2, 128], strides = [1, 1]} : vector<2x512xf32> to vector<2x128xf32>
    %129 = arith.negf %128 : vector<2x128xf32>
    %130 = math.exp %129 : vector<2x128xf32>
    %cst_28 = arith.constant 1.000000e+00 : f32
    %131 = vector.broadcast %cst_28 : f32 to vector<2x128xf32>
    %132 = arith.addf %131, %130 : vector<2x128xf32>
    %133 = arith.divf %131, %132 : vector<2x128xf32>
    %134 = arith.mulf %125, %108 : vector<2x128xf32>
    %135 = arith.mulf %119, %127 : vector<2x128xf32>
    %136 = arith.addf %134, %135 : vector<2x128xf32>
    %137 = math.tanh %136 : vector<2x128xf32>
    %138 = arith.mulf %133, %137 : vector<2x128xf32>
    %139 = vector.extract_strided_slice %8 {offsets = [10, 0], sizes = [2, 512], strides = [1, 1]} : vector<16x512xf32> to vector<2x512xf32>
    %cst_29 = arith.constant dense<0.000000e+00> : vector<2x512xf32>
    %140 = tpu.matmul %138, %0, %cst_29 {dimension_numbers = #tpu.dot_dimension_numbers<[1], [0], [0], [1], [0, 0, 1, 1], [], []>} : vector<2x128xf32>, vector<128x512xf32>, vector<2x512xf32> -> vector<2x512xf32>
    %141 = arith.addf %139, %140 : vector<2x512xf32>
    %142 = vector.extract_strided_slice %141 {offsets = [0, 0], sizes = [2, 128], strides = [1, 1]} : vector<2x512xf32> to vector<2x128xf32>
    %143 = arith.negf %142 : vector<2x128xf32>
    %144 = math.exp %143 : vector<2x128xf32>
    %cst_30 = arith.constant 1.000000e+00 : f32
    %145 = vector.broadcast %cst_30 : f32 to vector<2x128xf32>
    %146 = arith.addf %145, %144 : vector<2x128xf32>
    %147 = arith.divf %145, %146 : vector<2x128xf32>
    %148 = vector.extract_strided_slice %141 {offsets = [0, 128], sizes = [2, 128], strides = [1, 1]} : vector<2x512xf32> to vector<2x128xf32>
    %149 = arith.negf %148 : vector<2x128xf32>
    %150 = math.exp %149 : vector<2x128xf32>
    %cst_31 = arith.constant 1.000000e+00 : f32
    %151 = vector.broadcast %cst_31 : f32 to vector<2x128xf32>
    %152 = arith.addf %151, %150 : vector<2x128xf32>
    %153 = arith.divf %151, %152 : vector<2x128xf32>
    %154 = vector.extract_strided_slice %141 {offsets = [0, 256], sizes = [2, 128], strides = [1, 1]} : vector<2x512xf32> to vector<2x128xf32>
    %155 = math.tanh %154 : vector<2x128xf32>
    %156 = vector.extract_strided_slice %141 {offsets = [0, 384], sizes = [2, 128], strides = [1, 1]} : vector<2x512xf32> to vector<2x128xf32>
    %157 = arith.negf %156 : vector<2x128xf32>
    %158 = math.exp %157 : vector<2x128xf32>
    %cst_32 = arith.constant 1.000000e+00 : f32
    %159 = vector.broadcast %cst_32 : f32 to vector<2x128xf32>
    %160 = arith.addf %159, %158 : vector<2x128xf32>
    %161 = arith.divf %159, %160 : vector<2x128xf32>
    %162 = arith.mulf %153, %136 : vector<2x128xf32>
    %163 = arith.mulf %147, %155 : vector<2x128xf32>
    %164 = arith.addf %162, %163 : vector<2x128xf32>
    %165 = math.tanh %164 : vector<2x128xf32>
    %166 = arith.mulf %161, %165 : vector<2x128xf32>
    %167 = vector.extract_strided_slice %8 {offsets = [12, 0], sizes = [2, 512], strides = [1, 1]} : vector<16x512xf32> to vector<2x512xf32>
    %cst_33 = arith.constant dense<0.000000e+00> : vector<2x512xf32>
    %168 = tpu.matmul %166, %0, %cst_33 {dimension_numbers = #tpu.dot_dimension_numbers<[1], [0], [0], [1], [0, 0, 1, 1], [], []>} : vector<2x128xf32>, vector<128x512xf32>, vector<2x512xf32> -> vector<2x512xf32>
    %169 = arith.addf %167, %168 : vector<2x512xf32>
    %170 = vector.extract_strided_slice %169 {offsets = [0, 0], sizes = [2, 128], strides = [1, 1]} : vector<2x512xf32> to vector<2x128xf32>
    %171 = arith.negf %170 : vector<2x128xf32>
    %172 = math.exp %171 : vector<2x128xf32>
    %cst_34 = arith.constant 1.000000e+00 : f32
    %173 = vector.broadcast %cst_34 : f32 to vector<2x128xf32>
    %174 = arith.addf %173, %172 : vector<2x128xf32>
    %175 = arith.divf %173, %174 : vector<2x128xf32>
    %176 = vector.extract_strided_slice %169 {offsets = [0, 128], sizes = [2, 128], strides = [1, 1]} : vector<2x512xf32> to vector<2x128xf32>
    %177 = arith.negf %176 : vector<2x128xf32>
    %178 = math.exp %177 : vector<2x128xf32>
    %cst_35 = arith.constant 1.000000e+00 : f32
    %179 = vector.broadcast %cst_35 : f32 to vector<2x128xf32>
    %180 = arith.addf %179, %178 : vector<2x128xf32>
    %181 = arith.divf %179, %180 : vector<2x128xf32>
    %182 = vector.extract_strided_slice %169 {offsets = [0, 256], sizes = [2, 128], strides = [1, 1]} : vector<2x512xf32> to vector<2x128xf32>
    %183 = math.tanh %182 : vector<2x128xf32>
    %184 = vector.extract_strided_slice %169 {offsets = [0, 384], sizes = [2, 128], strides = [1, 1]} : vector<2x512xf32> to vector<2x128xf32>
    %185 = arith.negf %184 : vector<2x128xf32>
    %186 = math.exp %185 : vector<2x128xf32>
    %cst_36 = arith.constant 1.000000e+00 : f32
    %187 = vector.broadcast %cst_36 : f32 to vector<2x128xf32>
    %188 = arith.addf %187, %186 : vector<2x128xf32>
    %189 = arith.divf %187, %188 : vector<2x128xf32>
    %190 = arith.mulf %181, %164 : vector<2x128xf32>
    %191 = arith.mulf %175, %183 : vector<2x128xf32>
    %192 = arith.addf %190, %191 : vector<2x128xf32>
    %193 = math.tanh %192 : vector<2x128xf32>
    %194 = arith.mulf %189, %193 : vector<2x128xf32>
    %195 = vector.extract_strided_slice %8 {offsets = [14, 0], sizes = [2, 512], strides = [1, 1]} : vector<16x512xf32> to vector<2x512xf32>
    %cst_37 = arith.constant dense<0.000000e+00> : vector<2x512xf32>
    %196 = tpu.matmul %194, %0, %cst_37 {dimension_numbers = #tpu.dot_dimension_numbers<[1], [0], [0], [1], [0, 0, 1, 1], [], []>} : vector<2x128xf32>, vector<128x512xf32>, vector<2x512xf32> -> vector<2x512xf32>
    %197 = arith.addf %195, %196 : vector<2x512xf32>
    %198 = vector.extract_strided_slice %197 {offsets = [0, 0], sizes = [2, 128], strides = [1, 1]} : vector<2x512xf32> to vector<2x128xf32>
    %199 = arith.negf %198 : vector<2x128xf32>
    %200 = math.exp %199 : vector<2x128xf32>
    %cst_38 = arith.constant 1.000000e+00 : f32
    %201 = vector.broadcast %cst_38 : f32 to vector<2x128xf32>
    %202 = arith.addf %201, %200 : vector<2x128xf32>
    %203 = arith.divf %201, %202 : vector<2x128xf32>
    %204 = vector.extract_strided_slice %197 {offsets = [0, 128], sizes = [2, 128], strides = [1, 1]} : vector<2x512xf32> to vector<2x128xf32>
    %205 = arith.negf %204 : vector<2x128xf32>
    %206 = math.exp %205 : vector<2x128xf32>
    %cst_39 = arith.constant 1.000000e+00 : f32
    %207 = vector.broadcast %cst_39 : f32 to vector<2x128xf32>
    %208 = arith.addf %207, %206 : vector<2x128xf32>
    %209 = arith.divf %207, %208 : vector<2x128xf32>
    %210 = vector.extract_strided_slice %197 {offsets = [0, 256], sizes = [2, 128], strides = [1, 1]} : vector<2x512xf32> to vector<2x128xf32>
    %211 = math.tanh %210 : vector<2x128xf32>
    %212 = vector.extract_strided_slice %197 {offsets = [0, 384], sizes = [2, 128], strides = [1, 1]} : vector<2x512xf32> to vector<2x128xf32>
    %213 = arith.negf %212 : vector<2x128xf32>
    %214 = math.exp %213 : vector<2x128xf32>
    %cst_40 = arith.constant 1.000000e+00 : f32
    %215 = vector.broadcast %cst_40 : f32 to vector<2x128xf32>
    %216 = arith.addf %215, %214 : vector<2x128xf32>
    %217 = arith.divf %215, %216 : vector<2x128xf32>
    %218 = arith.mulf %209, %192 : vector<2x128xf32>
    %219 = arith.mulf %203, %211 : vector<2x128xf32>
    %220 = arith.addf %218, %219 : vector<2x128xf32>
    %221 = math.tanh %220 : vector<2x128xf32>
    %222 = arith.mulf %217, %221 : vector<2x128xf32>
    %223 = tpu.concatenate %222, %2 in 1 : vector<2x128xf32>, vector<2x4xf32> -> vector<2x132xf32>
    %c0_41 = arith.constant 0 : index
    %c0_42 = arith.constant 0 : index
    %224 = vector.load %arg7[%c0_41, %c0_42] : memref<132x32xf32, #tpu.memory_space<vmem>>, vector<132x32xf32>
    %cst_43 = arith.constant dense<0.000000e+00> : vector<2x32xf32>
    %225 = tpu.matmul %223, %224, %cst_43 {dimension_numbers = #tpu.dot_dimension_numbers<[1], [0], [0], [1], [0, 0, 1, 1], [], []>} : vector<2x132xf32>, vector<132x32xf32>, vector<2x32xf32> -> vector<2x32xf32>
    %c0_44 = arith.constant 0 : index
    %c0_45 = arith.constant 0 : index
    %226 = vector.load %arg8[%c0_44, %c0_45] : memref<1x32xf32, #tpu.memory_space<vmem>>, vector<1x32xf32>
    %227 = vector.broadcast %226 : vector<1x32xf32> to vector<2x32xf32>
    %228 = arith.addf %225, %227 : vector<2x32xf32>
    %c0_46 = arith.constant 0 : index
    %c0_47 = arith.constant 0 : index
    %229 = vector.load %arg9[%c0_46, %c0_47] : memref<132x32xf32, #tpu.memory_space<vmem>>, vector<132x32xf32>
    %cst_48 = arith.constant dense<0.000000e+00> : vector<2x32xf32>
    %230 = tpu.matmul %223, %229, %cst_48 {dimension_numbers = #tpu.dot_dimension_numbers<[1], [0], [0], [1], [0, 0, 1, 1], [], []>} : vector<2x132xf32>, vector<132x32xf32>, vector<2x32xf32> -> vector<2x32xf32>
    %c0_49 = arith.constant 0 : index
    %c0_50 = arith.constant 0 : index
    %231 = vector.load %arg10[%c0_49, %c0_50] : memref<1x32xf32, #tpu.memory_space<vmem>>, vector<1x32xf32>
    %232 = vector.broadcast %231 : vector<1x32xf32> to vector<2x32xf32>
    %233 = arith.addf %230, %232 : vector<2x32xf32>
    %c0_51 = arith.constant 0 : index
    %c0_52 = arith.constant 0 : index
    %234 = vector.load %arg19[%c0_51, %c0_52] : memref<2x32xf32, #tpu.memory_space<vmem>>, vector<2x32xf32>
    tpu.vector_store %arg19[%c0_51, %c0_52], %228 {strides = array<i32>} : memref<2x32xf32, #tpu.memory_space<vmem>>, vector<2x32xf32>,
    %c0_53 = arith.constant 0 : index
    %c0_54 = arith.constant 0 : index
    %235 = vector.load %arg20[%c0_53, %c0_54] : memref<2x32xf32, #tpu.memory_space<vmem>>, vector<2x32xf32>
    tpu.vector_store %arg20[%c0_53, %c0_54], %233 {strides = array<i32>} : memref<2x32xf32, #tpu.memory_space<vmem>>, vector<2x32xf32>,
    %c0_55 = arith.constant 0 : index
    %c0_56 = arith.constant 0 : index
    %236 = vector.load %arg2[%c0_55, %c0_56] : memref<2x32xf32, #tpu.memory_space<vmem>>, vector<2x32xf32>
    %cst_57 = arith.constant 5.000000e-01 : f32
    %237 = vector.broadcast %cst_57 : f32 to vector<2x32xf32>
    %238 = arith.mulf %237, %233 : vector<2x32xf32>
    %239 = math.exp %238 : vector<2x32xf32>
    %240 = arith.mulf %236, %239 : vector<2x32xf32>
    %241 = arith.addf %228, %240 : vector<2x32xf32>
    %242 = tpu.concatenate %241, %2 in 1 : vector<2x32xf32>, vector<2x4xf32> -> vector<2x36xf32>
    %c0_58 = arith.constant 0 : index
    %c0_59 = arith.constant 0 : index
    %243 = vector.load %arg12[%c0_58, %c0_59] : memref<36x512xf32, #tpu.memory_space<vmem>>, vector<36x512xf32>
    %cst_60 = arith.constant dense<0.000000e+00> : vector<2x512xf32>
    %244 = tpu.matmul %242, %243, %cst_60 {dimension_numbers = #tpu.dot_dimension_numbers<[1], [0], [0], [1], [0, 0, 1, 1], [], []>} : vector<2x36xf32>, vector<36x512xf32>, vector<2x512xf32> -> vector<2x512xf32>
    %c0_61 = arith.constant 0 : index
    %c0_62 = arith.constant 0 : index
    %245 = vector.load %arg13[%c0_61, %c0_62] : memref<1x512xf32, #tpu.memory_space<vmem>>, vector<1x512xf32>
    %246 = vector.broadcast %245 : vector<1x512xf32> to vector<2x512xf32>
    %247 = arith.addf %244, %246 : vector<2x512xf32>
    %c0_63 = arith.constant 0 : index
    %c0_64 = arith.constant 0 : index
    %248 = vector.load %arg15[%c0_63, %c0_64] : memref<1x512xf32, #tpu.memory_space<vmem>>, vector<1x512xf32>
    %249 = vector.broadcast %248 : vector<1x512xf32> to vector<2x512xf32>
    %250 = arith.addf %247, %249 : vector<2x512xf32>
    %c0_65 = arith.constant 0 : index
    %c0_66 = arith.constant 0 : index
    %251 = vector.load %arg3[%c0_65, %c0_66] : memref<2x2xf32, #tpu.memory_space<vmem>>, vector<2x2xf32>
    %c0_67 = arith.constant 0 : index
    %c0_68 = arith.constant 0 : index
    %252 = vector.load %arg11[%c0_67, %c0_68] : memref<2x512xf32, #tpu.memory_space<vmem>>, vector<2x512xf32>
    %cst_69 = arith.constant dense<0.000000e+00> : vector<2x512xf32>
    %253 = tpu.matmul %251, %252, %cst_69 {dimension_numbers = #tpu.dot_dimension_numbers<[1], [0], [0], [1], [0, 0, 1, 1], [], []>} : vector<2x2xf32>, vector<2x512xf32>, vector<2x512xf32> -> vector<2x512xf32>
    %254 = arith.addf %253, %247 : vector<2x512xf32>
    %255 = vector.extract_strided_slice %254 {offsets = [0, 0], sizes = [2, 128], strides = [1, 1]} : vector<2x512xf32> to vector<2x128xf32>
    %256 = arith.negf %255 : vector<2x128xf32>
    %257 = math.exp %256 : vector<2x128xf32>
    %cst_70 = arith.constant 1.000000e+00 : f32
    %258 = vector.broadcast %cst_70 : f32 to vector<2x128xf32>
    %259 = arith.addf %258, %257 : vector<2x128xf32>
    %260 = arith.divf %258, %259 : vector<2x128xf32>
    %261 = vector.extract_strided_slice %254 {offsets = [0, 256], sizes = [2, 128], strides = [1, 1]} : vector<2x512xf32> to vector<2x128xf32>
    %262 = math.tanh %261 : vector<2x128xf32>
    %263 = vector.extract_strided_slice %254 {offsets = [0, 384], sizes = [2, 128], strides = [1, 1]} : vector<2x512xf32> to vector<2x128xf32>
    %264 = arith.negf %263 : vector<2x128xf32>
    %265 = math.exp %264 : vector<2x128xf32>
    %cst_71 = arith.constant 1.000000e+00 : f32
    %266 = vector.broadcast %cst_71 : f32 to vector<2x128xf32>
    %267 = arith.addf %266, %265 : vector<2x128xf32>
    %268 = arith.divf %266, %267 : vector<2x128xf32>
    %269 = arith.mulf %260, %262 : vector<2x128xf32>
    %270 = math.tanh %269 : vector<2x128xf32>
    %271 = arith.mulf %268, %270 : vector<2x128xf32>
    %cst_72 = arith.constant dense<0.000000e+00> : vector<2x512xf32>
    %272 = tpu.matmul %271, %1, %cst_72 {dimension_numbers = #tpu.dot_dimension_numbers<[1], [0], [0], [1], [0, 0, 1, 1], [], []>} : vector<2x128xf32>, vector<128x512xf32>, vector<2x512xf32> -> vector<2x512xf32>
    %273 = arith.addf %272, %250 : vector<2x512xf32>
    %274 = vector.extract_strided_slice %273 {offsets = [0, 0], sizes = [2, 128], strides = [1, 1]} : vector<2x512xf32> to vector<2x128xf32>
    %275 = arith.negf %274 : vector<2x128xf32>
    %276 = math.exp %275 : vector<2x128xf32>
    %cst_73 = arith.constant 1.000000e+00 : f32
    %277 = vector.broadcast %cst_73 : f32 to vector<2x128xf32>
    %278 = arith.addf %277, %276 : vector<2x128xf32>
    %279 = arith.divf %277, %278 : vector<2x128xf32>
    %280 = vector.extract_strided_slice %273 {offsets = [0, 128], sizes = [2, 128], strides = [1, 1]} : vector<2x512xf32> to vector<2x128xf32>
    %281 = arith.negf %280 : vector<2x128xf32>
    %282 = math.exp %281 : vector<2x128xf32>
    %cst_74 = arith.constant 1.000000e+00 : f32
    %283 = vector.broadcast %cst_74 : f32 to vector<2x128xf32>
    %284 = arith.addf %283, %282 : vector<2x128xf32>
    %285 = arith.divf %283, %284 : vector<2x128xf32>
    %286 = vector.extract_strided_slice %273 {offsets = [0, 256], sizes = [2, 128], strides = [1, 1]} : vector<2x512xf32> to vector<2x128xf32>
    %287 = math.tanh %286 : vector<2x128xf32>
    %288 = vector.extract_strided_slice %273 {offsets = [0, 384], sizes = [2, 128], strides = [1, 1]} : vector<2x512xf32> to vector<2x128xf32>
    %289 = arith.negf %288 : vector<2x128xf32>
    %290 = math.exp %289 : vector<2x128xf32>
    %cst_75 = arith.constant 1.000000e+00 : f32
    %291 = vector.broadcast %cst_75 : f32 to vector<2x128xf32>
    %292 = arith.addf %291, %290 : vector<2x128xf32>
    %293 = arith.divf %291, %292 : vector<2x128xf32>
    %294 = arith.mulf %285, %269 : vector<2x128xf32>
    %295 = arith.mulf %279, %287 : vector<2x128xf32>
    %296 = arith.addf %294, %295 : vector<2x128xf32>
    %297 = math.tanh %296 : vector<2x128xf32>
    %298 = arith.mulf %293, %297 : vector<2x128xf32>
    %cst_76 = arith.constant dense<0.000000e+00> : vector<2x512xf32>
    %299 = tpu.matmul %298, %1, %cst_76 {dimension_numbers = #tpu.dot_dimension_numbers<[1], [0], [0], [1], [0, 0, 1, 1], [], []>} : vector<2x128xf32>, vector<128x512xf32>, vector<2x512xf32> -> vector<2x512xf32>
    %300 = arith.addf %299, %250 : vector<2x512xf32>
    %301 = vector.extract_strided_slice %300 {offsets = [0, 0], sizes = [2, 128], strides = [1, 1]} : vector<2x512xf32> to vector<2x128xf32>
    %302 = arith.negf %301 : vector<2x128xf32>
    %303 = math.exp %302 : vector<2x128xf32>
    %cst_77 = arith.constant 1.000000e+00 : f32
    %304 = vector.broadcast %cst_77 : f32 to vector<2x128xf32>
    %305 = arith.addf %304, %303 : vector<2x128xf32>
    %306 = arith.divf %304, %305 : vector<2x128xf32>
    %307 = vector.extract_strided_slice %300 {offsets = [0, 128], sizes = [2, 128], strides = [1, 1]} : vector<2x512xf32> to vector<2x128xf32>
    %308 = arith.negf %307 : vector<2x128xf32>
    %309 = math.exp %308 : vector<2x128xf32>
    %cst_78 = arith.constant 1.000000e+00 : f32
    %310 = vector.broadcast %cst_78 : f32 to vector<2x128xf32>
    %311 = arith.addf %310, %309 : vector<2x128xf32>
    %312 = arith.divf %310, %311 : vector<2x128xf32>
    %313 = vector.extract_strided_slice %300 {offsets = [0, 256], sizes = [2, 128], strides = [1, 1]} : vector<2x512xf32> to vector<2x128xf32>
    %314 = math.tanh %313 : vector<2x128xf32>
    %315 = vector.extract_strided_slice %300 {offsets = [0, 384], sizes = [2, 128], strides = [1, 1]} : vector<2x512xf32> to vector<2x128xf32>
    %316 = arith.negf %315 : vector<2x128xf32>
    %317 = math.exp %316 : vector<2x128xf32>
    %cst_79 = arith.constant 1.000000e+00 : f32
    %318 = vector.broadcast %cst_79 : f32 to vector<2x128xf32>
    %319 = arith.addf %318, %317 : vector<2x128xf32>
    %320 = arith.divf %318, %319 : vector<2x128xf32>
    %321 = arith.mulf %312, %296 : vector<2x128xf32>
    %322 = arith.mulf %306, %314 : vector<2x128xf32>
    %323 = arith.addf %321, %322 : vector<2x128xf32>
    %324 = math.tanh %323 : vector<2x128xf32>
    %325 = arith.mulf %320, %324 : vector<2x128xf32>
    %cst_80 = arith.constant dense<0.000000e+00> : vector<2x512xf32>
    %326 = tpu.matmul %325, %1, %cst_80 {dimension_numbers = #tpu.dot_dimension_numbers<[1], [0], [0], [1], [0, 0, 1, 1], [], []>} : vector<2x128xf32>, vector<128x512xf32>, vector<2x512xf32> -> vector<2x512xf32>
    %327 = arith.addf %326, %250 : vector<2x512xf32>
    %328 = vector.extract_strided_slice %327 {offsets = [0, 0], sizes = [2, 128], strides = [1, 1]} : vector<2x512xf32> to vector<2x128xf32>
    %329 = arith.negf %328 : vector<2x128xf32>
    %330 = math.exp %329 : vector<2x128xf32>
    %cst_81 = arith.constant 1.000000e+00 : f32
    %331 = vector.broadcast %cst_81 : f32 to vector<2x128xf32>
    %332 = arith.addf %331, %330 : vector<2x128xf32>
    %333 = arith.divf %331, %332 : vector<2x128xf32>
    %334 = vector.extract_strided_slice %327 {offsets = [0, 128], sizes = [2, 128], strides = [1, 1]} : vector<2x512xf32> to vector<2x128xf32>
    %335 = arith.negf %334 : vector<2x128xf32>
    %336 = math.exp %335 : vector<2x128xf32>
    %cst_82 = arith.constant 1.000000e+00 : f32
    %337 = vector.broadcast %cst_82 : f32 to vector<2x128xf32>
    %338 = arith.addf %337, %336 : vector<2x128xf32>
    %339 = arith.divf %337, %338 : vector<2x128xf32>
    %340 = vector.extract_strided_slice %327 {offsets = [0, 256], sizes = [2, 128], strides = [1, 1]} : vector<2x512xf32> to vector<2x128xf32>
    %341 = math.tanh %340 : vector<2x128xf32>
    %342 = vector.extract_strided_slice %327 {offsets = [0, 384], sizes = [2, 128], strides = [1, 1]} : vector<2x512xf32> to vector<2x128xf32>
    %343 = arith.negf %342 : vector<2x128xf32>
    %344 = math.exp %343 : vector<2x128xf32>
    %cst_83 = arith.constant 1.000000e+00 : f32
    %345 = vector.broadcast %cst_83 : f32 to vector<2x128xf32>
    %346 = arith.addf %345, %344 : vector<2x128xf32>
    %347 = arith.divf %345, %346 : vector<2x128xf32>
    %348 = arith.mulf %339, %323 : vector<2x128xf32>
    %349 = arith.mulf %333, %341 : vector<2x128xf32>
    %350 = arith.addf %348, %349 : vector<2x128xf32>
    %351 = math.tanh %350 : vector<2x128xf32>
    %352 = arith.mulf %347, %351 : vector<2x128xf32>
    %cst_84 = arith.constant dense<0.000000e+00> : vector<2x512xf32>
    %353 = tpu.matmul %352, %1, %cst_84 {dimension_numbers = #tpu.dot_dimension_numbers<[1], [0], [0], [1], [0, 0, 1, 1], [], []>} : vector<2x128xf32>, vector<128x512xf32>, vector<2x512xf32> -> vector<2x512xf32>
    %354 = arith.addf %353, %250 : vector<2x512xf32>
    %355 = vector.extract_strided_slice %354 {offsets = [0, 0], sizes = [2, 128], strides = [1, 1]} : vector<2x512xf32> to vector<2x128xf32>
    %356 = arith.negf %355 : vector<2x128xf32>
    %357 = math.exp %356 : vector<2x128xf32>
    %cst_85 = arith.constant 1.000000e+00 : f32
    %358 = vector.broadcast %cst_85 : f32 to vector<2x128xf32>
    %359 = arith.addf %358, %357 : vector<2x128xf32>
    %360 = arith.divf %358, %359 : vector<2x128xf32>
    %361 = vector.extract_strided_slice %354 {offsets = [0, 128], sizes = [2, 128], strides = [1, 1]} : vector<2x512xf32> to vector<2x128xf32>
    %362 = arith.negf %361 : vector<2x128xf32>
    %363 = math.exp %362 : vector<2x128xf32>
    %cst_86 = arith.constant 1.000000e+00 : f32
    %364 = vector.broadcast %cst_86 : f32 to vector<2x128xf32>
    %365 = arith.addf %364, %363 : vector<2x128xf32>
    %366 = arith.divf %364, %365 : vector<2x128xf32>
    %367 = vector.extract_strided_slice %354 {offsets = [0, 256], sizes = [2, 128], strides = [1, 1]} : vector<2x512xf32> to vector<2x128xf32>
    %368 = math.tanh %367 : vector<2x128xf32>
    %369 = vector.extract_strided_slice %354 {offsets = [0, 384], sizes = [2, 128], strides = [1, 1]} : vector<2x512xf32> to vector<2x128xf32>
    %370 = arith.negf %369 : vector<2x128xf32>
    %371 = math.exp %370 : vector<2x128xf32>
    %cst_87 = arith.constant 1.000000e+00 : f32
    %372 = vector.broadcast %cst_87 : f32 to vector<2x128xf32>
    %373 = arith.addf %372, %371 : vector<2x128xf32>
    %374 = arith.divf %372, %373 : vector<2x128xf32>
    %375 = arith.mulf %366, %350 : vector<2x128xf32>
    %376 = arith.mulf %360, %368 : vector<2x128xf32>
    %377 = arith.addf %375, %376 : vector<2x128xf32>
    %378 = math.tanh %377 : vector<2x128xf32>
    %379 = arith.mulf %374, %378 : vector<2x128xf32>
    %cst_88 = arith.constant dense<0.000000e+00> : vector<2x512xf32>
    %380 = tpu.matmul %379, %1, %cst_88 {dimension_numbers = #tpu.dot_dimension_numbers<[1], [0], [0], [1], [0, 0, 1, 1], [], []>} : vector<2x128xf32>, vector<128x512xf32>, vector<2x512xf32> -> vector<2x512xf32>
    %381 = arith.addf %380, %250 : vector<2x512xf32>
    %382 = vector.extract_strided_slice %381 {offsets = [0, 0], sizes = [2, 128], strides = [1, 1]} : vector<2x512xf32> to vector<2x128xf32>
    %383 = arith.negf %382 : vector<2x128xf32>
    %384 = math.exp %383 : vector<2x128xf32>
    %cst_89 = arith.constant 1.000000e+00 : f32
    %385 = vector.broadcast %cst_89 : f32 to vector<2x128xf32>
    %386 = arith.addf %385, %384 : vector<2x128xf32>
    %387 = arith.divf %385, %386 : vector<2x128xf32>
    %388 = vector.extract_strided_slice %381 {offsets = [0, 128], sizes = [2, 128], strides = [1, 1]} : vector<2x512xf32> to vector<2x128xf32>
    %389 = arith.negf %388 : vector<2x128xf32>
    %390 = math.exp %389 : vector<2x128xf32>
    %cst_90 = arith.constant 1.000000e+00 : f32
    %391 = vector.broadcast %cst_90 : f32 to vector<2x128xf32>
    %392 = arith.addf %391, %390 : vector<2x128xf32>
    %393 = arith.divf %391, %392 : vector<2x128xf32>
    %394 = vector.extract_strided_slice %381 {offsets = [0, 256], sizes = [2, 128], strides = [1, 1]} : vector<2x512xf32> to vector<2x128xf32>
    %395 = math.tanh %394 : vector<2x128xf32>
    %396 = vector.extract_strided_slice %381 {offsets = [0, 384], sizes = [2, 128], strides = [1, 1]} : vector<2x512xf32> to vector<2x128xf32>
    %397 = arith.negf %396 : vector<2x128xf32>
    %398 = math.exp %397 : vector<2x128xf32>
    %cst_91 = arith.constant 1.000000e+00 : f32
    %399 = vector.broadcast %cst_91 : f32 to vector<2x128xf32>
    %400 = arith.addf %399, %398 : vector<2x128xf32>
    %401 = arith.divf %399, %400 : vector<2x128xf32>
    %402 = arith.mulf %393, %377 : vector<2x128xf32>
    %403 = arith.mulf %387, %395 : vector<2x128xf32>
    %404 = arith.addf %402, %403 : vector<2x128xf32>
    %405 = math.tanh %404 : vector<2x128xf32>
    %406 = arith.mulf %401, %405 : vector<2x128xf32>
    %cst_92 = arith.constant dense<0.000000e+00> : vector<2x512xf32>
    %407 = tpu.matmul %406, %1, %cst_92 {dimension_numbers = #tpu.dot_dimension_numbers<[1], [0], [0], [1], [0, 0, 1, 1], [], []>} : vector<2x128xf32>, vector<128x512xf32>, vector<2x512xf32> -> vector<2x512xf32>
    %408 = arith.addf %407, %250 : vector<2x512xf32>
    %409 = vector.extract_strided_slice %408 {offsets = [0, 0], sizes = [2, 128], strides = [1, 1]} : vector<2x512xf32> to vector<2x128xf32>
    %410 = arith.negf %409 : vector<2x128xf32>
    %411 = math.exp %410 : vector<2x128xf32>
    %cst_93 = arith.constant 1.000000e+00 : f32
    %412 = vector.broadcast %cst_93 : f32 to vector<2x128xf32>
    %413 = arith.addf %412, %411 : vector<2x128xf32>
    %414 = arith.divf %412, %413 : vector<2x128xf32>
    %415 = vector.extract_strided_slice %408 {offsets = [0, 128], sizes = [2, 128], strides = [1, 1]} : vector<2x512xf32> to vector<2x128xf32>
    %416 = arith.negf %415 : vector<2x128xf32>
    %417 = math.exp %416 : vector<2x128xf32>
    %cst_94 = arith.constant 1.000000e+00 : f32
    %418 = vector.broadcast %cst_94 : f32 to vector<2x128xf32>
    %419 = arith.addf %418, %417 : vector<2x128xf32>
    %420 = arith.divf %418, %419 : vector<2x128xf32>
    %421 = vector.extract_strided_slice %408 {offsets = [0, 256], sizes = [2, 128], strides = [1, 1]} : vector<2x512xf32> to vector<2x128xf32>
    %422 = math.tanh %421 : vector<2x128xf32>
    %423 = vector.extract_strided_slice %408 {offsets = [0, 384], sizes = [2, 128], strides = [1, 1]} : vector<2x512xf32> to vector<2x128xf32>
    %424 = arith.negf %423 : vector<2x128xf32>
    %425 = math.exp %424 : vector<2x128xf32>
    %cst_95 = arith.constant 1.000000e+00 : f32
    %426 = vector.broadcast %cst_95 : f32 to vector<2x128xf32>
    %427 = arith.addf %426, %425 : vector<2x128xf32>
    %428 = arith.divf %426, %427 : vector<2x128xf32>
    %429 = arith.mulf %420, %404 : vector<2x128xf32>
    %430 = arith.mulf %414, %422 : vector<2x128xf32>
    %431 = arith.addf %429, %430 : vector<2x128xf32>
    %432 = math.tanh %431 : vector<2x128xf32>
    %433 = arith.mulf %428, %432 : vector<2x128xf32>
    %cst_96 = arith.constant dense<0.000000e+00> : vector<2x512xf32>
    %434 = tpu.matmul %433, %1, %cst_96 {dimension_numbers = #tpu.dot_dimension_numbers<[1], [0], [0], [1], [0, 0, 1, 1], [], []>} : vector<2x128xf32>, vector<128x512xf32>, vector<2x512xf32> -> vector<2x512xf32>
    %435 = arith.addf %434, %250 : vector<2x512xf32>
    %436 = vector.extract_strided_slice %435 {offsets = [0, 0], sizes = [2, 128], strides = [1, 1]} : vector<2x512xf32> to vector<2x128xf32>
    %437 = arith.negf %436 : vector<2x128xf32>
    %438 = math.exp %437 : vector<2x128xf32>
    %cst_97 = arith.constant 1.000000e+00 : f32
    %439 = vector.broadcast %cst_97 : f32 to vector<2x128xf32>
    %440 = arith.addf %439, %438 : vector<2x128xf32>
    %441 = arith.divf %439, %440 : vector<2x128xf32>
    %442 = vector.extract_strided_slice %435 {offsets = [0, 128], sizes = [2, 128], strides = [1, 1]} : vector<2x512xf32> to vector<2x128xf32>
    %443 = arith.negf %442 : vector<2x128xf32>
    %444 = math.exp %443 : vector<2x128xf32>
    %cst_98 = arith.constant 1.000000e+00 : f32
    %445 = vector.broadcast %cst_98 : f32 to vector<2x128xf32>
    %446 = arith.addf %445, %444 : vector<2x128xf32>
    %447 = arith.divf %445, %446 : vector<2x128xf32>
    %448 = vector.extract_strided_slice %435 {offsets = [0, 256], sizes = [2, 128], strides = [1, 1]} : vector<2x512xf32> to vector<2x128xf32>
    %449 = math.tanh %448 : vector<2x128xf32>
    %450 = vector.extract_strided_slice %435 {offsets = [0, 384], sizes = [2, 128], strides = [1, 1]} : vector<2x512xf32> to vector<2x128xf32>
    %451 = arith.negf %450 : vector<2x128xf32>
    %452 = math.exp %451 : vector<2x128xf32>
    %cst_99 = arith.constant 1.000000e+00 : f32
    %453 = vector.broadcast %cst_99 : f32 to vector<2x128xf32>
    %454 = arith.addf %453, %452 : vector<2x128xf32>
    %455 = arith.divf %453, %454 : vector<2x128xf32>
    %456 = arith.mulf %447, %431 : vector<2x128xf32>
    %457 = arith.mulf %441, %449 : vector<2x128xf32>
    %458 = arith.addf %456, %457 : vector<2x128xf32>
    %459 = math.tanh %458 : vector<2x128xf32>
    %460 = arith.mulf %455, %459 : vector<2x128xf32>
    %461 = tpu.concatenate %271, %298, %325, %352, %379, %406, %433, %460 in 0 : vector<2x128xf32>, vector<2x128xf32>, vector<2x128xf32>, vector<2x128xf32>, vector<2x128xf32>, vector<2x128xf32>, vector<2x128xf32>, vector<2x128xf32> -> vector<16x128xf32>
    %c0_100 = arith.constant 0 : index
    %c0_101 = arith.constant 0 : index
    %462 = vector.load %arg16[%c0_100, %c0_101] : memref<128x2xf32, #tpu.memory_space<vmem>>, vector<128x2xf32>
    %cst_102 = arith.constant dense<0.000000e+00> : vector<16x2xf32>
    %463 = tpu.matmul %461, %462, %cst_102 {dimension_numbers = #tpu.dot_dimension_numbers<[1], [0], [0], [1], [0, 0, 1, 1], [], []>} : vector<16x128xf32>, vector<128x2xf32>, vector<16x2xf32> -> vector<16x2xf32>
    %c0_103 = arith.constant 0 : index
    %c0_104 = arith.constant 0 : index
    %464 = vector.load %arg17[%c0_103, %c0_104] : memref<1x2xf32, #tpu.memory_space<vmem>>, vector<1x2xf32>
    %465 = vector.broadcast %464 : vector<1x2xf32> to vector<16x2xf32>
    %466 = arith.addf %463, %465 : vector<16x2xf32>
    %c0_105 = arith.constant 0 : index
    %c0_106 = arith.constant 0 : index
    %467 = vector.load %arg18[%c0_105, %c0_106] : memref<16x2xf32, #tpu.memory_space<vmem>>, vector<16x2xf32>
    tpu.vector_store %arg18[%c0_105, %c0_106], %466 {strides = array<i32>} : memref<16x2xf32, #tpu.memory_space<vmem>>, vector<16x2xf32>,
    return
  }
}

</mosaic_0001>

<llo_original>
// kernel: cvae_forward.1
$region0: #{cvae_forward.1}
  #allocation0 [shape = 'u32[]', space=smem, size = 0x4, offset = 0x4, fixed_abs, tag = 'smem constant byte address 0x4 - core index']
  #allocation1 [shape = 'u32[144,128]{1,0:T(1,128)}', space=vmem, size = 0x12000, scoped, tag = 'internal scratch']
  %s0 = inlined_call_operand.vmem [shape: f32[16,3], index: 0, kind: input, shape index: {}]
  %s1 = inlined_call_operand.vmem [shape: f32[2,4], index: 1, kind: input, shape index: {}]
  %s2 = inlined_call_operand.vmem [shape: f32[2,32], index: 2, kind: input, shape index: {}]
  %s3 = inlined_call_operand.vmem [shape: f32[2,2], index: 3, kind: input, shape index: {}]
  %s4 = inlined_call_operand.vmem [shape: f32[3,512], index: 4, kind: input, shape index: {}]
  %s5 = inlined_call_operand.vmem [shape: f32[128,512], index: 5, kind: input, shape index: {}]
  %s6 = inlined_call_operand.vmem [shape: f32[1,512], index: 6, kind: input, shape index: {}]
  %s7 = inlined_call_operand.vmem [shape: f32[132,32], index: 7, kind: input, shape index: {}]
  %s8 = inlined_call_operand.vmem [shape: f32[1,32], index: 8, kind: input, shape index: {}]
  %s9 = inlined_call_operand.vmem [shape: f32[132,32], index: 9, kind: input, shape index: {}]
  %s10 = inlined_call_operand.vmem [shape: f32[1,32], index: 10, kind: input, shape index: {}]
  %s11 = inlined_call_operand.vmem [shape: f32[2,512], index: 11, kind: input, shape index: {}]
  %s12 = inlined_call_operand.vmem [shape: f32[36,512], index: 12, kind: input, shape index: {}]
  %s13 = inlined_call_operand.vmem [shape: f32[1,512], index: 13, kind: input, shape index: {}]
  %s14 = inlined_call_operand.vmem [shape: f32[128,512], index: 14, kind: input, shape index: {}]
  %s15 = inlined_call_operand.vmem [shape: f32[1,512], index: 15, kind: input, shape index: {}]
  %s16 = inlined_call_operand.vmem [shape: f32[128,2], index: 16, kind: input, shape index: {}]
  %s17 = inlined_call_operand.vmem [shape: f32[1,2], index: 17, kind: input, shape index: {}]
  %s18 = inlined_call_operand.vmem [shape: f32[16,2], index: 18, kind: output, shape index: {0}]
  %s19 = inlined_call_operand.hbm [shape: f32[2,32], index: 19, kind: output, shape index: {1}]
  %s20 = inlined_call_operand.hbm [shape: f32[2,32], index: 20, kind: output, shape index: {2}]
  %21 = xla_tuple %s18, %s19, %s20
  %s22 = sld [smem:[#allocation0]]
  $region98: #{cvae_forward.1} parent=0
    _
  %s24 = ssub.s32 1, %s22
  %s25 = scalar_select 0, %s24, %s22
  $region1: #{cvae_forward.1} parent=0
    #allocation2 [shape = 'u8[1024]{0}', space=vmem, size = 0x400, scoped, tag = 'output window, operand 1, single buffered']
    #allocation3 [shape = 's32[1]{0}', space=sflag, size = 0x4, scoped, tag = 'scoped memory for cvae_forward.1']
    #allocation4 [shape = 'u8[1024]{0}', space=vmem, size = 0x400, scoped, tag = 'output window, operand 2, single buffered']
    #allocation5 [shape = 's32[1]{0}', space=sflag, size = 0x4, scoped, tag = 'scoped memory for cvae_forward.1']
    %26 = vsyncpa [#allocation3], 0
    %27 = vsyncpa [#allocation5], 0
    // Predicated region
    $region2: #{cvae_forward.1} parent=1 // pred_check
      _
    $region3: #{cvae_forward.1} parent=1 // pred_check_branch
      %29 = sbr.rel (0) target = $region5
    $region4: #{cvae_forward.1} parent=1 // pred_region
      _
    $region5: #{cvae_forward.1} parent=1 // pred_fallthru
      _
    // Predicated region
    $region6: #{cvae_forward.1} parent=1 // pred_check
      _
    $region7: #{cvae_forward.1} parent=1 // pred_check_branch
      %31 = sbr.rel (0) target = $region9
    $region8: #{cvae_forward.1} parent=1 // pred_region
      _
    $region9: #{cvae_forward.1} parent=1 // pred_fallthru
      _
    // Predicated region
    $region10: #{cvae_forward.1} parent=1 // pred_check
      _
    $region11: #{cvae_forward.1} parent=1 // pred_check_branch
      %33 = sbr.rel (0) target = $region13
    $region12: #{cvae_forward.1} parent=1 // pred_region
      _
    $region13: #{cvae_forward.1} parent=1 // pred_fallthru
      _
    // Predicated region
    $region14: #{cvae_forward.1} parent=1 // pred_check
      _
    $region15: #{cvae_forward.1} parent=1 // pred_check_branch
      %35 = sbr.rel (0) target = $region17
    $region16: #{cvae_forward.1} parent=1 // pred_region
      _
    $region17: #{cvae_forward.1} parent=1 // pred_fallthru
      _
    // Predicated region
    $region18: #{cvae_forward.1} parent=1 // pred_check
      _
    $region19: #{cvae_forward.1} parent=1 // pred_check_branch
      %37 = sbr.rel (0) target = $region21
    $region20: #{cvae_forward.1} parent=1 // pred_region
      _
    $region21: #{cvae_forward.1} parent=1 // pred_fallthru
      _
    // Predicated region
    $region22: #{cvae_forward.1} parent=1 // pred_check
      _
    $region23: #{cvae_forward.1} parent=1 // pred_check_branch
      %39 = sbr.rel (0) target = $region25
    $region24: #{cvae_forward.1} parent=1 // pred_region
      _
    $region25: #{cvae_forward.1} parent=1 // pred_fallthru
      _
    // Predicated region
    $region26: #{cvae_forward.1} parent=1 // pred_check
      _
    $region27: #{cvae_forward.1} parent=1 // pred_check_branch
      %41 = sbr.rel (0) target = $region29
    $region28: #{cvae_forward.1} parent=1 // pred_region
      _
    $region29: #{cvae_forward.1} parent=1 // pred_fallthru
      _
    // Predicated region
    $region30: #{cvae_forward.1} parent=1 // pred_check
      _
    $region31: #{cvae_forward.1} parent=1 // pred_check_branch
      %43 = sbr.rel (0) target = $region33
    $region32: #{cvae_forward.1} parent=1 // pred_region
      _
    $region33: #{cvae_forward.1} parent=1 // pred_fallthru
      _
    // Predicated region
    $region34: #{cvae_forward.1} parent=1 // pred_check
      _
    $region35: #{cvae_forward.1} parent=1 // pred_check_branch
      %45 = sbr.rel (0) target = $region37
    $region36: #{cvae_forward.1} parent=1 // pred_region
      _
    $region37: #{cvae_forward.1} parent=1 // pred_fallthru
      _
    // Predicated region
    $region38: #{cvae_forward.1} parent=1 // pred_check
      _
    $region39: #{cvae_forward.1} parent=1 // pred_check_branch
      %47 = sbr.rel (0) target = $region41
    $region40: #{cvae_forward.1} parent=1 // pred_region
      _
    $region41: #{cvae_forward.1} parent=1 // pred_fallthru
      _
    // Predicated region
    $region42: #{cvae_forward.1} parent=1 // pred_check
      _
    $region43: #{cvae_forward.1} parent=1 // pred_check_branch
      %49 = sbr.rel (0) target = $region45
    $region44: #{cvae_forward.1} parent=1 // pred_region
      _
    $region45: #{cvae_forward.1} parent=1 // pred_fallthru
      _
    // Predicated region
    $region46: #{cvae_forward.1} parent=1 // pred_check
      _
    $region47: #{cvae_forward.1} parent=1 // pred_check_branch
      %51 = sbr.rel (0) target = $region49
    $region48: #{cvae_forward.1} parent=1 // pred_region
      _
    $region49: #{cvae_forward.1} parent=1 // pred_fallthru
      _
    // Predicated region
    $region50: #{cvae_forward.1} parent=1 // pred_check
      _
    $region51: #{cvae_forward.1} parent=1 // pred_check_branch
      %53 = sbr.rel (0) target = $region53
    $region52: #{cvae_forward.1} parent=1 // pred_region
      _
    $region53: #{cvae_forward.1} parent=1 // pred_fallthru
      _
    // Predicated region
    $region54: #{cvae_forward.1} parent=1 // pred_check
      _
    $region55: #{cvae_forward.1} parent=1 // pred_check_branch
      %55 = sbr.rel (0) target = $region57
    $region56: #{cvae_forward.1} parent=1 // pred_region
      _
    $region57: #{cvae_forward.1} parent=1 // pred_fallthru
      _
    // Predicated region
    $region58: #{cvae_forward.1} parent=1 // pred_check
      _
    $region59: #{cvae_forward.1} parent=1 // pred_check_branch
      %57 = sbr.rel (0) target = $region61
    $region60: #{cvae_forward.1} parent=1 // pred_region
      _
    $region61: #{cvae_forward.1} parent=1 // pred_fallthru
      _
    // Predicated region
    $region62: #{cvae_forward.1} parent=1 // pred_check
      _
    $region63: #{cvae_forward.1} parent=1 // pred_check_branch
      %59 = sbr.rel (0) target = $region65
    $region64: #{cvae_forward.1} parent=1 // pred_region
      _
    $region65: #{cvae_forward.1} parent=1 // pred_fallthru
      _
    // Predicated region
    $region66: #{cvae_forward.1} parent=1 // pred_check
      _
    $region67: #{cvae_forward.1} parent=1 // pred_check_branch
      %61 = sbr.rel (0) target = $region69
    $region68: #{cvae_forward.1} parent=1 // pred_region
      _
    $region69: #{cvae_forward.1} parent=1 // pred_fallthru
      _
    // Predicated region
    $region70: #{cvae_forward.1} parent=1 // pred_check
      _
    $region71: #{cvae_forward.1} parent=1 // pred_check_branch
      %63 = sbr.rel (0) target = $region73
    $region72: #{cvae_forward.1} parent=1 // pred_region
      _
    $region73: #{cvae_forward.1} parent=1 // pred_fallthru
      _
    %v64 = vld [vmem:[%s5] sm:$0xff]
    %v65 = vld [vmem:[%s5 + $0x8] sm:$0xff]
    %v66 = vld [vmem:[%s5 + $0x10] sm:$0xff]
    %v67 = vld [vmem:[%s5 + $0x18] sm:$0xff]
    %v68 = vld [vmem:[%s5 + $0x20] sm:$0xff]
    %v69 = vld [vmem:[%s5 + $0x28] sm:$0xff]
    %v70 = vld [vmem:[%s5 + $0x30] sm:$0xff]
    %v71 = vld [vmem:[%s5 + $0x38] sm:$0xff]
    %v72 = vld [vmem:[%s5 + $0x40] sm:$0xff]
    %v73 = vld [vmem:[%s5 + $0x48] sm:$0xff]
    %v74 = vld [vmem:[%s5 + $0x50] sm:$0xff]
    %v75 = vld [vmem:[%s5 + $0x58] sm:$0xff]
    %v76 = vld [vmem:[%s5 + $0x60] sm:$0xff]
    %v77 = vld [vmem:[%s5 + $0x68] sm:$0xff]
    %v78 = vld [vmem:[%s5 + $0x70] sm:$0xff]
    %v79 = vld [vmem:[%s5 + $0x78] sm:$0xff]
    %v80 = vld [vmem:[%s5 + $0x80] sm:$0xff]
    %v81 = vld [vmem:[%s5 + $0x88] sm:$0xff]
    %v82 = vld [vmem:[%s5 + $0x90] sm:$0xff]
    %v83 = vld [vmem:[%s5 + $0x98] sm:$0xff]
    %v84 = vld [vmem:[%s5 + $0xa0] sm:$0xff]
    %v85 = vld [vmem:[%s5 + $0xa8] sm:$0xff]
    %v86 = vld [vmem:[%s5 + $0xb0] sm:$0xff]
    %v87 = vld [vmem:[%s5 + $0xb8] sm:$0xff]
    %v88 = vld [vmem:[%s5 + $0xc0] sm:$0xff]
    %v89 = vld [vmem:[%s5 + $0xc8] sm:$0xff]
    %v90 = vld [vmem:[%s5 + $0xd0] sm:$0xff]
    %v91 = vld [vmem:[%s5 + $0xd8] sm:$0xff]
    %v92 = vld [vmem:[%s5 + $0xe0] sm:$0xff]
    %v93 = vld [vmem:[%s5 + $0xe8] sm:$0xff]
    %v94 = vld [vmem:[%s5 + $0xf0] sm:$0xff]
    %v95 = vld [vmem:[%s5 + $0xf8] sm:$0xff]
    %v96 = vld [vmem:[%s5 + $0x100] sm:$0xff]
    %v97 = vld [vmem:[%s5 + $0x108] sm:$0xff]
    %v98 = vld [vmem:[%s5 + $0x110] sm:$0xff]
    %v99 = vld [vmem:[%s5 + $0x118] sm:$0xff]
    %v100 = vld [vmem:[%s5 + $0x120] sm:$0xff]
    %v101 = vld [vmem:[%s5 + $0x128] sm:$0xff]
    %v102 = vld [vmem:[%s5 + $0x130] sm:$0xff]
    %v103 = vld [vmem:[%s5 + $0x138] sm:$0xff]
    %v104 = vld [vmem:[%s5 + $0x140] sm:$0xff]
    %v105 = vld [vmem:[%s5 + $0x148] sm:$0xff]
    %v106 = vld [vmem:[%s5 + $0x150] sm:$0xff]
    %v107 = vld [vmem:[%s5 + $0x158] sm:$0xff]
    %v108 = vld [vmem:[%s5 + $0x160] sm:$0xff]
    %v109 = vld [vmem:[%s5 + $0x168] sm:$0xff]
    %v110 = vld [vmem:[%s5 + $0x170] sm:$0xff]
    %v111 = vld [vmem:[%s5 + $0x178] sm:$0xff]
    %v112 = vld [vmem:[%s5 + $0x180] sm:$0xff]
    %v113 = vld [vmem:[%s5 + $0x188] sm:$0xff]
    %v114 = vld [vmem:[%s5 + $0x190] sm:$0xff]
    %v115 = vld [vmem:[%s5 + $0x198] sm:$0xff]
    %v116 = vld [vmem:[%s5 + $0x1a0] sm:$0xff]
    %v117 = vld [vmem:[%s5 + $0x1a8] sm:$0xff]
    %v118 = vld [vmem:[%s5 + $0x1b0] sm:$0xff]
    %v119 = vld [vmem:[%s5 + $0x1b8] sm:$0xff]
    %v120 = vld [vmem:[%s5 + $0x1c0] sm:$0xff]
    %v121 = vld [vmem:[%s5 + $0x1c8] sm:$0xff]
    %v122 = vld [vmem:[%s5 + $0x1d0] sm:$0xff]
    %v123 = vld [vmem:[%s5 + $0x1d8] sm:$0xff]
    %v124 = vld [vmem:[%s5 + $0x1e0] sm:$0xff]
    %v125 = vld [vmem:[%s5 + $0x1e8] sm:$0xff]
    %v126 = vld [vmem:[%s5 + $0x1f0] sm:$0xff]
    %v127 = vld [vmem:[%s5 + $0x1f8] sm:$0xff]
    %v128 = vld [vmem:[%s14] sm:$0xff]
    %v129 = vld [vmem:[%s14 + $0x8] sm:$0xff]
    %v130 = vld [vmem:[%s14 + $0x10] sm:$0xff]
    %v131 = vld [vmem:[%s14 + $0x18] sm:$0xff]
    %v132 = vld [vmem:[%s14 + $0x20] sm:$0xff]
    %v133 = vld [vmem:[%s14 + $0x28] sm:$0xff]
    %v134 = vld [vmem:[%s14 + $0x30] sm:$0xff]
    %v135 = vld [vmem:[%s14 + $0x38] sm:$0xff]
    %v136 = vld [vmem:[%s14 + $0x40] sm:$0xff]
    %v137 = vld [vmem:[%s14 + $0x48] sm:$0xff]
    %v138 = vld [vmem:[%s14 + $0x50] sm:$0xff]
    %v139 = vld [vmem:[%s14 + $0x58] sm:$0xff]
    %v140 = vld [vmem:[%s14 + $0x60] sm:$0xff]
    %v141 = vld [vmem:[%s14 + $0x68] sm:$0xff]
    %v142 = vld [vmem:[%s14 + $0x70] sm:$0xff]
    %v143 = vld [vmem:[%s14 + $0x78] sm:$0xff]
    %v144 = vld [vmem:[%s14 + $0x80] sm:$0xff]
    %v145 = vld [vmem:[%s14 + $0x88] sm:$0xff]
    %v146 = vld [vmem:[%s14 + $0x90] sm:$0xff]
    %v147 = vld [vmem:[%s14 + $0x98] sm:$0xff]
    %v148 = vld [vmem:[%s14 + $0xa0] sm:$0xff]
    %v149 = vld [vmem:[%s14 + $0xa8] sm:$0xff]
    %v150 = vld [vmem:[%s14 + $0xb0] sm:$0xff]
    %v151 = vld [vmem:[%s14 + $0xb8] sm:$0xff]
    %v152 = vld [vmem:[%s14 + $0xc0] sm:$0xff]
    %v153 = vld [vmem:[%s14 + $0xc8] sm:$0xff]
    %v154 = vld [vmem:[%s14 + $0xd0] sm:$0xff]
    %v155 = vld [vmem:[%s14 + $0xd8] sm:$0xff]
    %v156 = vld [vmem:[%s14 + $0xe0] sm:$0xff]
    %v157 = vld [vmem:[%s14 + $0xe8] sm:$0xff]
    %v158 = vld [vmem:[%s14 + $0xf0] sm:$0xff]
    %v159 = vld [vmem:[%s14 + $0xf8] sm:$0xff]
    %v160 = vld [vmem:[%s14 + $0x100] sm:$0xff]
    %v161 = vld [vmem:[%s14 + $0x108] sm:$0xff]
    %v162 = vld [vmem:[%s14 + $0x110] sm:$0xff]
    %v163 = vld [vmem:[%s14 + $0x118] sm:$0xff]
    %v164 = vld [vmem:[%s14 + $0x120] sm:$0xff]
    %v165 = vld [vmem:[%s14 + $0x128] sm:$0xff]
    %v166 = vld [vmem:[%s14 + $0x130] sm:$0xff]
    %v167 = vld [vmem:[%s14 + $0x138] sm:$0xff]
    %v168 = vld [vmem:[%s14 + $0x140] sm:$0xff]
    %v169 = vld [vmem:[%s14 + $0x148] sm:$0xff]
    %v170 = vld [vmem:[%s14 + $0x150] sm:$0xff]
    %v171 = vld [vmem:[%s14 + $0x158] sm:$0xff]
    %v172 = vld [vmem:[%s14 + $0x160] sm:$0xff]
    %v173 = vld [vmem:[%s14 + $0x168] sm:$0xff]
    %v174 = vld [vmem:[%s14 + $0x170] sm:$0xff]
    %v175 = vld [vmem:[%s14 + $0x178] sm:$0xff]
    %v176 = vld [vmem:[%s14 + $0x180] sm:$0xff]
    %v177 = vld [vmem:[%s14 + $0x188] sm:$0xff]
    %v178 = vld [vmem:[%s14 + $0x190] sm:$0xff]
    %v179 = vld [vmem:[%s14 + $0x198] sm:$0xff]
    %v180 = vld [vmem:[%s14 + $0x1a0] sm:$0xff]
    %v181 = vld [vmem:[%s14 + $0x1a8] sm:$0xff]
    %v182 = vld [vmem:[%s14 + $0x1b0] sm:$0xff]
    %v183 = vld [vmem:[%s14 + $0x1b8] sm:$0xff]
    %v184 = vld [vmem:[%s14 + $0x1c0] sm:$0xff]
    %v185 = vld [vmem:[%s14 + $0x1c8] sm:$0xff]
    %v186 = vld [vmem:[%s14 + $0x1d0] sm:$0xff]
    %v187 = vld [vmem:[%s14 + $0x1d8] sm:$0xff]
    %v188 = vld [vmem:[%s14 + $0x1e0] sm:$0xff]
    %v189 = vld [vmem:[%s14 + $0x1e8] sm:$0xff]
    %v190 = vld [vmem:[%s14 + $0x1f0] sm:$0xff]
    %v191 = vld [vmem:[%s14 + $0x1f8] sm:$0xff]
    %v192 = vld [vmem:[%s1] sm:$0x3]
    %v193 = vld [vmem:[%s0] sm:$0xff]
    %v194 = vld [vmem:[%s0 + $0x8] sm:$0xff]
    %v195 = vld [vmem:[%s4] sm:$0x77]
    %v196 = vld [vmem:[%s4 + $0x8] sm:$0x77]
    %v197 = vld [vmem:[%s6] sm:$0xf]
    %v199 = vlaneseq
    %v200 = vshrl.u32 %v199, 7
    %v201 = vsub.s32 0, %v200
    %v202 = vrot.slane %v197, %v201
    %v203 = vlaneseq
    %v204 = vshrl.u32 %v203, 7
    %v205 = vsub.s32 1, %v204
    %v206 = vrot.slane %v197, %v205
    %v207 = vlaneseq
    %v208 = vshrl.u32 %v207, 7
    %v209 = vsub.s32 2, %v208
    %v210 = vrot.slane %v197, %v209
    %v211 = vlaneseq
    %v212 = vshrl.u32 %v211, 7
    %v213 = vsub.s32 3, %v212
    %v214 = vrot.slane %v197, %v213
    %v221 = vcombine.high %v195, %v195
    %v222 = vcombine.high %v196, %v196
    %vm223 = vcmask 23552
    %v225 = vsel %vm223, %v193, 0
    %v228 = vsel %vm223, %v194, 0
    %vm230 = vcmask 1042432
    %v231 = vsel %vm230, %v195, 0
    %v233 = vsel %vm230, %v221, 0
    %v235 = vsel %vm230, %v196, 0
    %v237 = vsel %vm230, %v222, 0
    %239 = vmatprep.subr.mxu0 0.0
    %240 = vmatpush1.msra.mxu0 0.0
    %241 = vmatprep.subr.mxu0 0.0
    %242 = vmatpush1.msra.mxu0 0.0
    %243 = vmatprep.subr.mxu0 0.0
    %244 = vmatpush1.msra.mxu0 0.0
    %245 = vmatprep.subr.mxu0 0.0
    %246 = vmatpush1.msra.mxu0 0.0
    %247 = vmatprep.subr.mxu0 0.0
    %248 = vmatpush1.msra.mxu0 0.0
    %249 = vmatprep.subr.mxu0 0.0
    %250 = vmatpush1.msra.mxu0 0.0
    %251 = vmatprep.subr.mxu0 0.0
    %252 = vmatpush1.msra.mxu0 0.0
    %253 = vmatprep.subr.mxu0 0.0
    %254 = vmatpush1.msra.mxu0 0.0
    %255 = vmatprep.subr.mxu0 0.0
    %256 = vmatpush1.msra.mxu0 0.0
    %257 = vmatprep.subr.mxu0 0.0
    %258 = vmatpush1.msra.mxu0 0.0
    %259 = vmatprep.subr.mxu0 0.0
    %260 = vmatpush1.msra.mxu0 0.0
    %261 = vmatprep.subr.mxu0 0.0
    %262 = vmatpush1.msra.mxu0 0.0
    %263 = vmatprep.subr.mxu0 0.0
    %264 = vmatpush1.msra.mxu0 0.0
    %265 = vmatprep.subr.mxu0 0.0
    %266 = vmatpush1.msra.mxu0 0.0
    %267 = vmatprep.subr.mxu0 0.0
    %268 = vmatpush1.msra.mxu0 0.0
    %269 = vmatprep.subr.mxu0 %v233
    %270 = vmatpush1.msra.mxu0 %v231
    %271 = vmatprep.subr.mxu0 0.0
    %272 = vmatpush2.msra.mxu0 0.0
    %273 = vmatprep.subr.mxu0 0.0
    %274 = vmatpush2.msra.mxu0 0.0
    %275 = vmatprep.subr.mxu0 0.0
    %276 = vmatpush2.msra.mxu0 0.0
    %277 = vmatprep.subr.mxu0 0.0
    %278 = vmatpush2.msra.mxu0 0.0
    %279 = vmatprep.subr.mxu0 0.0
    %280 = vmatpush2.msra.mxu0 0.0
    %281 = vmatprep.subr.mxu0 0.0
    %282 = vmatpush2.msra.mxu0 0.0
    %283 = vmatprep.subr.mxu0 0.0
    %284 = vmatpush2.msra.mxu0 0.0
    %285 = vmatprep.subr.mxu0 0.0
    %286 = vmatpush2.msra.mxu0 0.0
    %287 = vmatprep.subr.mxu0 0.0
    %288 = vmatpush2.msra.mxu0 0.0
    %289 = vmatprep.subr.mxu0 0.0
    %290 = vmatpush2.msra.mxu0 0.0
    %291 = vmatprep.subr.mxu0 0.0
    %292 = vmatpush2.msra.mxu0 0.0
    %293 = vmatprep.subr.mxu0 0.0
    %294 = vmatpush2.msra.mxu0 0.0
    %295 = vmatprep.subr.mxu0 0.0
    %296 = vmatpush2.msra.mxu0 0.0
    %297 = vmatprep.subr.mxu0 0.0
    %298 = vmatpush2.msra.mxu0 0.0
    %299 = vmatprep.subr.mxu0 0.0
    %300 = vmatpush2.msra.mxu0 0.0
    %301 = vmatprep.subr.mxu0 0.0
    %302 = vmatpush2.msra.mxu0 0.0
    %303 = vmatprep.mubr.f32.mxu0 0.0
    %304 = vmatmul.mubr.f32.gmra.mxu0 %v225
    %v305 = vpop.f32.mrf.mxu0
    %v306 = vadd.f32 %v202, %v305
    %v307 = vpop.f32.mrf.mxu0
    %v308 = vadd.f32 %v206, %v307
    %309 = vmatprep.mubr.f32.mxu0 0.0
    %310 = vmatmul.mubr.f32.gmra.mxu0 %v228
    %v311 = vpop.f32.mrf.mxu0
    %v312 = vadd.f32 %v202, %v311
    %v313 = vpop.f32.mrf.mxu0
    %v314 = vadd.f32 %v206, %v313
    %315 = vdwg.mxu0
    %316 = vmatprep.subr.mxu0 0.0
    %317 = vmatpush1.msra.mxu0 0.0
    %318 = vmatprep.subr.mxu0 0.0
    %319 = vmatpush1.msra.mxu0 0.0
    %320 = vmatprep.subr.mxu0 0.0
    %321 = vmatpush1.msra.mxu0 0.0
    %322 = vmatprep.subr.mxu0 0.0
    %323 = vmatpush1.msra.mxu0 0.0
    %324 = vmatprep.subr.mxu0 0.0
    %325 = vmatpush1.msra.mxu0 0.0
    %326 = vmatprep.subr.mxu0 0.0
    %327 = vmatpush1.msra.mxu0 0.0
    %328 = vmatprep.subr.mxu0 0.0
    %329 = vmatpush1.msra.mxu0 0.0
    %330 = vmatprep.subr.mxu0 0.0
    %331 = vmatpush1.msra.mxu0 0.0
    %332 = vmatprep.subr.mxu0 0.0
    %333 = vmatpush1.msra.mxu0 0.0
    %334 = vmatprep.subr.mxu0 0.0
    %335 = vmatpush1.msra.mxu0 0.0
    %336 = vmatprep.subr.mxu0 0.0
    %337 = vmatpush1.msra.mxu0 0.0
    %338 = vmatprep.subr.mxu0 0.0
    %339 = vmatpush1.msra.mxu0 0.0
    %340 = vmatprep.subr.mxu0 0.0
    %341 = vmatpush1.msra.mxu0 0.0
    %342 = vmatprep.subr.mxu0 0.0
    %343 = vmatpush1.msra.mxu0 0.0
    %344 = vmatprep.subr.mxu0 0.0
    %345 = vmatpush1.msra.mxu0 0.0
    %346 = vmatprep.subr.mxu0 %v237
    %347 = vmatpush1.msra.mxu0 %v235
    %348 = vmatprep.subr.mxu0 0.0
    %349 = vmatpush2.msra.mxu0 0.0
    %350 = vmatprep.subr.mxu0 0.0
    %351 = vmatpush2.msra.mxu0 0.0
    %352 = vmatprep.subr.mxu0 0.0
    %353 = vmatpush2.msra.mxu0 0.0
    %354 = vmatprep.subr.mxu0 0.0
    %355 = vmatpush2.msra.mxu0 0.0
    %356 = vmatprep.subr.mxu0 0.0
    %357 = vmatpush2.msra.mxu0 0.0
    %358 = vmatprep.subr.mxu0 0.0
    %359 = vmatpush2.msra.mxu0 0.0
    %360 = vmatprep.subr.mxu0 0.0
    %361 = vmatpush2.msra.mxu0 0.0
    %362 = vmatprep.subr.mxu0 0.0
    %363 = vmatpush2.msra.mxu0 0.0
    %364 = vmatprep.subr.mxu0 0.0
    %365 = vmatpush2.msra.mxu0 0.0
    %366 = vmatprep.subr.mxu0 0.0
    %367 = vmatpush2.msra.mxu0 0.0
    %368 = vmatprep.subr.mxu0 0.0
    %369 = vmatpush2.msra.mxu0 0.0
    %370 = vmatprep.subr.mxu0 0.0
    %371 = vmatpush2.msra.mxu0 0.0
    %372 = vmatprep.subr.mxu0 0.0
    %373 = vmatpush2.msra.mxu0 0.0
    %374 = vmatprep.subr.mxu0 0.0
    %375 = vmatpush2.msra.mxu0 0.0
    %376 = vmatprep.subr.mxu0 0.0
    %377 = vmatpush2.msra.mxu0 0.0
    %378 = vmatprep.subr.mxu0 0.0
    %379 = vmatpush2.msra.mxu0 0.0
    %380 = vmatprep.mubr.f32.mxu0 0.0
    %381 = vmatmul.mubr.f32.gmra.mxu0 %v225
    %v382 = vpop.f32.mrf.mxu0
    %v383 = vadd.f32 %v210, %v382
    %v384 = vpop.f32.mrf.mxu0
    %v385 = vadd.f32 %v214, %v384
    %386 = vmatprep.mubr.f32.mxu0 0.0
    %387 = vmatmul.mubr.f32.gmra.mxu0 %v228
    %v388 = vpop.f32.mrf.mxu0
    %v389 = vadd.f32 %v210, %v388
    %v390 = vpop.f32.mrf.mxu0
    %v391 = vadd.f32 %v214, %v390
    %392 = vdwg.mxu0
    %v393 = vxor.u32 %v306, 2147483648
    %v394 = vmul.f32 %v393, 1.442695
    %v395 = vpow.pop %v394
    %v396 = vadd.f32 %v395, 1.0
    %v397 = vrcp.pop %v396
    %v398 = vmul.f32 1.0, %v397
    %v399 = vtanh.pop %v383
    %v400 = vxor.u32 %v385, 2147483648
    %v401 = vmul.f32 %v400, 1.442695
    %v402 = vpow.pop %v401
    %v403 = vadd.f32 %v402, 1.0
    %v404 = vrcp.pop %v403
    %v405 = vmul.f32 1.0, %v404
    %v406 = vmul.f32 %v398, %v399
    %v407 = vtanh.pop %v406
    %v408 = vmul.f32 %v405, %v407
    %409 = vmatprep.subr.mxu0 %v125
    %410 = vmatpush1.msra.mxu0 %v124
    %411 = vmatprep.subr.mxu0 %v121
    %412 = vmatpush1.msra.mxu0 %v120
    %413 = vmatprep.subr.mxu0 %v117
    %414 = vmatpush1.msra.mxu0 %v116
    %415 = vmatprep.subr.mxu0 %v113
    %416 = vmatpush1.msra.mxu0 %v112
    %417 = vmatprep.subr.mxu0 %v109
    %418 = vmatpush1.msra.mxu0 %v108
    %419 = vmatprep.subr.mxu0 %v105
    %420 = vmatpush1.msra.mxu0 %v104
    %421 = vmatprep.subr.mxu0 %v101
    %422 = vmatpush1.msra.mxu0 %v100
    %423 = vmatprep.subr.mxu0 %v97
    %424 = vmatpush1.msra.mxu0 %v96
    %425 = vmatprep.subr.mxu0 %v93
    %426 = vmatpush1.msra.mxu0 %v92
    %427 = vmatprep.subr.mxu0 %v89
    %428 = vmatpush1.msra.mxu0 %v88
    %429 = vmatprep.subr.mxu0 %v85
    %430 = vmatpush1.msra.mxu0 %v84
    %431 = vmatprep.subr.mxu0 %v81
    %432 = vmatpush1.msra.mxu0 %v80
    %433 = vmatprep.subr.mxu0 %v77
    %434 = vmatpush1.msra.mxu0 %v76
    %435 = vmatprep.subr.mxu0 %v73
    %436 = vmatpush1.msra.mxu0 %v72
    %437 = vmatprep.subr.mxu0 %v69
    %438 = vmatpush1.msra.mxu0 %v68
    %439 = vmatprep.subr.mxu0 %v65
    %440 = vmatpush1.msra.mxu0 %v64
    %441 = vmatprep.subr.mxu0 0.0
    %442 = vmatpush2.msra.mxu0 0.0
    %443 = vmatprep.subr.mxu0 0.0
    %444 = vmatpush2.msra.mxu0 0.0
    %445 = vmatprep.subr.mxu0 0.0
    %446 = vmatpush2.msra.mxu0 0.0
    %447 = vmatprep.subr.mxu0 0.0
    %448 = vmatpush2.msra.mxu0 0.0
    %449 = vmatprep.subr.mxu0 0.0
    %450 = vmatpush2.msra.mxu0 0.0
    %451 = vmatprep.subr.mxu0 0.0
    %452 = vmatpush2.msra.mxu0 0.0
    %453 = vmatprep.subr.mxu0 0.0
    %454 = vmatpush2.msra.mxu0 0.0
    %455 = vmatprep.subr.mxu0 0.0
    %456 = vmatpush2.msra.mxu0 0.0
    %457 = vmatprep.subr.mxu0 0.0
    %458 = vmatpush2.msra.mxu0 0.0
    %459 = vmatprep.subr.mxu0 0.0
    %460 = vmatpush2.msra.mxu0 0.0
    %461 = vmatprep.subr.mxu0 0.0
    %462 = vmatpush2.msra.mxu0 0.0
    %463 = vmatprep.subr.mxu0 0.0
    %464 = vmatpush2.msra.mxu0 0.0
    %465 = vmatprep.subr.mxu0 0.0
    %466 = vmatpush2.msra.mxu0 0.0
    %467 = vmatprep.subr.mxu0 0.0
    %468 = vmatpush2.msra.mxu0 0.0
    %469 = vmatprep.subr.mxu0 0.0
    %470 = vmatpush2.msra.mxu0 0.0
    %471 = vmatprep.subr.mxu0 0.0
    %472 = vmatpush2.msra.mxu0 0.0
    %473 = vmatprep.mubr.f32.mxu0 0.0
    %474 = vmatmul.mubr.f32.gmra.mxu0 %v408
    %v475 = vpop.f32.mrf.mxu0
    %v476 = vadd.f32 0.0, %v475
    %v477 = vpop.f32.mrf.mxu0
    %v478 = vadd.f32 0.0, %v477
    %479 = vdwg.mxu0
    %480 = vmatprep.subr.mxu0 %v127
    %481 = vmatpush1.msra.mxu0 %v126
    %482 = vmatprep.subr.mxu0 %v123
    %483 = vmatpush1.msra.mxu0 %v122
    %484 = vmatprep.subr.mxu0 %v119
    %485 = vmatpush1.msra.mxu0 %v118
    %486 = vmatprep.subr.mxu0 %v115
    %487 = vmatpush1.msra.mxu0 %v114
    %488 = vmatprep.subr.mxu0 %v111
    %489 = vmatpush1.msra.mxu0 %v110
    %490 = vmatprep.subr.mxu0 %v107
    %491 = vmatpush1.msra.mxu0 %v106
    %492 = vmatprep.subr.mxu0 %v103
    %493 = vmatpush1.msra.mxu0 %v102
    %494 = vmatprep.subr.mxu0 %v99
    %495 = vmatpush1.msra.mxu0 %v98
    %496 = vmatprep.subr.mxu0 %v95
    %497 = vmatpush1.msra.mxu0 %v94
    %498 = vmatprep.subr.mxu0 %v91
    %499 = vmatpush1.msra.mxu0 %v90
    %500 = vmatprep.subr.mxu0 %v87
    %501 = vmatpush1.msra.mxu0 %v86
    %502 = vmatprep.subr.mxu0 %v83
    %503 = vmatpush1.msra.mxu0 %v82
    %504 = vmatprep.subr.mxu0 %v79
    %505 = vmatpush1.msra.mxu0 %v78
    %506 = vmatprep.subr.mxu0 %v75
    %507 = vmatpush1.msra.mxu0 %v74
    %508 = vmatprep.subr.mxu0 %v71
    %509 = vmatpush1.msra.mxu0 %v70
    %510 = vmatprep.subr.mxu0 %v67
    %511 = vmatpush1.msra.mxu0 %v66
    %512 = vmatprep.subr.mxu0 0.0
    %513 = vmatpush2.msra.mxu0 0.0
    %514 = vmatprep.subr.mxu0 0.0
    %515 = vmatpush2.msra.mxu0 0.0
    %516 = vmatprep.subr.mxu0 0.0
    %517 = vmatpush2.msra.mxu0 0.0
    %518 = vmatprep.subr.mxu0 0.0
    %519 = vmatpush2.msra.mxu0 0.0
    %520 = vmatprep.subr.mxu0 0.0
    %521 = vmatpush2.msra.mxu0 0.0
    %522 = vmatprep.subr.mxu0 0.0
    %523 = vmatpush2.msra.mxu0 0.0
    %524 = vmatprep.subr.mxu0 0.0
    %525 = vmatpush2.msra.mxu0 0.0
    %526 = vmatprep.subr.mxu0 0.0
    %527 = vmatpush2.msra.mxu0 0.0
    %528 = vmatprep.subr.mxu0 0.0
    %529 = vmatpush2.msra.mxu0 0.0
    %530 = vmatprep.subr.mxu0 0.0
    %531 = vmatpush2.msra.mxu0 0.0
    %532 = vmatprep.subr.mxu0 0.0
    %533 = vmatpush2.msra.mxu0 0.0
    %534 = vmatprep.subr.mxu0 0.0
    %535 = vmatpush2.msra.mxu0 0.0
    %536 = vmatprep.subr.mxu0 0.0
    %537 = vmatpush2.msra.mxu0 0.0
    %538 = vmatprep.subr.mxu0 0.0
    %539 = vmatpush2.msra.mxu0 0.0
    %540 = vmatprep.subr.mxu0 0.0
    %541 = vmatpush2.msra.mxu0 0.0
    %542 = vmatprep.subr.mxu0 0.0
    %543 = vmatpush2.msra.mxu0 0.0
    %544 = vmatprep.mubr.f32.mxu0 0.0
    %545 = vmatmul.mubr.f32.gmra.mxu0 %v408
    %v546 = vpop.f32.mrf.mxu0
    %v547 = vadd.f32 0.0, %v546
    %v548 = vpop.f32.mrf.mxu0
    %v549 = vadd.f32 0.0, %v548
    %550 = vdwg.mxu0
    %v555 = vrot.slane %v476, 6
    %v556 = vrot.slane %v478, 6
    %v557 = vrot.slane %v547, 6
    %v558 = vrot.slane %v549, 6
    %v563 = vadd.f32 %v306, %v555
    %v564 = vadd.f32 %v308, %v556
    %v565 = vadd.f32 %v383, %v557
    %v566 = vadd.f32 %v385, %v558
    %v567 = vxor.u32 %v563, 2147483648
    %v568 = vmul.f32 %v567, 1.442695
    %v569 = vpow.pop %v568
    %v570 = vadd.f32 %v569, 1.0
    %v571 = vrcp.pop %v570
    %v572 = vmul.f32 1.0, %v571
    %v573 = vxor.u32 %v564, 2147483648
    %v574 = vmul.f32 %v573, 1.442695
    %v575 = vpow.pop %v574
    %v576 = vadd.f32 %v575, 1.0
    %v577 = vrcp.pop %v576
    %v578 = vmul.f32 1.0, %v577
    %v579 = vtanh.pop %v565
    %v580 = vxor.u32 %v566, 2147483648
    %v581 = vmul.f32 %v580, 1.442695
    %v582 = vpow.pop %v581
    %v583 = vadd.f32 %v582, 1.0
    %v584 = vrcp.pop %v583
    %v585 = vmul.f32 1.0, %v584
    %v587 = vrot.slane %v406, 6
    %v589 = vmul.f32 %v578, %v587
    %v590 = vmul.f32 %v572, %v579
    %v591 = vadd.f32 %v589, %v590
    %v592 = vtanh.pop %v591
    %v593 = vmul.f32 %v585, %v592
    %v595 = vrot.slane %v593, 2
    %597 = vmatprep.subr.mxu0 %v125
    %598 = vmatpush1.msra.mxu0 %v124
    %599 = vmatprep.subr.mxu0 %v121
    %600 = vmatpush1.msra.mxu0 %v120
    %601 = vmatprep.subr.mxu0 %v117
    %602 = vmatpush1.msra.mxu0 %v116
    %603 = vmatprep.subr.mxu0 %v113
    %604 = vmatpush1.msra.mxu0 %v112
    %605 = vmatprep.subr.mxu0 %v109
    %606 = vmatpush1.msra.mxu0 %v108
    %607 = vmatprep.subr.mxu0 %v105
    %608 = vmatpush1.msra.mxu0 %v104
    %609 = vmatprep.subr.mxu0 %v101
    %610 = vmatpush1.msra.mxu0 %v100
    %611 = vmatprep.subr.mxu0 %v97
    %612 = vmatpush1.msra.mxu0 %v96
    %613 = vmatprep.subr.mxu0 %v93
    %614 = vmatpush1.msra.mxu0 %v92
    %615 = vmatprep.subr.mxu0 %v89
    %616 = vmatpush1.msra.mxu0 %v88
    %617 = vmatprep.subr.mxu0 %v85
    %618 = vmatpush1.msra.mxu0 %v84
    %619 = vmatprep.subr.mxu0 %v81
    %620 = vmatpush1.msra.mxu0 %v80
    %621 = vmatprep.subr.mxu0 %v77
    %622 = vmatpush1.msra.mxu0 %v76
    %623 = vmatprep.subr.mxu0 %v73
    %624 = vmatpush1.msra.mxu0 %v72
    %625 = vmatprep.subr.mxu0 %v69
    %626 = vmatpush1.msra.mxu0 %v68
    %627 = vmatprep.subr.mxu0 %v65
    %628 = vmatpush1.msra.mxu0 %v64
    %629 = vmatprep.subr.mxu0 0.0
    %630 = vmatpush2.msra.mxu0 0.0
    %631 = vmatprep.subr.mxu0 0.0
    %632 = vmatpush2.msra.mxu0 0.0
    %633 = vmatprep.subr.mxu0 0.0
    %634 = vmatpush2.msra.mxu0 0.0
    %635 = vmatprep.subr.mxu0 0.0
    %636 = vmatpush2.msra.mxu0 0.0
    %637 = vmatprep.subr.mxu0 0.0
    %638 = vmatpush2.msra.mxu0 0.0
    %639 = vmatprep.subr.mxu0 0.0
    %640 = vmatpush2.msra.mxu0 0.0
    %641 = vmatprep.subr.mxu0 0.0
    %642 = vmatpush2.msra.mxu0 0.0
    %643 = vmatprep.subr.mxu0 0.0
    %644 = vmatpush2.msra.mxu0 0.0
    %645 = vmatprep.subr.mxu0 0.0
    %646 = vmatpush2.msra.mxu0 0.0
    %647 = vmatprep.subr.mxu0 0.0
    %648 = vmatpush2.msra.mxu0 0.0
    %649 = vmatprep.subr.mxu0 0.0
    %650 = vmatpush2.msra.mxu0 0.0
    %651 = vmatprep.subr.mxu0 0.0
    %652 = vmatpush2.msra.mxu0 0.0
    %653 = vmatprep.subr.mxu0 0.0
    %654 = vmatpush2.msra.mxu0 0.0
    %655 = vmatprep.subr.mxu0 0.0
    %656 = vmatpush2.msra.mxu0 0.0
    %657 = vmatprep.subr.mxu0 0.0
    %658 = vmatpush2.msra.mxu0 0.0
    %659 = vmatprep.subr.mxu0 0.0
    %660 = vmatpush2.msra.mxu0 0.0
    %661 = vmatprep.mubr.f32.mxu0 0.0
    %662 = vmatmul.mubr.f32.gmra.mxu0 %v595
    %v663 = vpop.f32.mrf.mxu0
    %v664 = vadd.f32 0.0, %v663
    %v665 = vpop.f32.mrf.mxu0
    %v666 = vadd.f32 0.0, %v665
    %667 = vdwg.mxu0
    %668 = vmatprep.subr.mxu0 %v127
    %669 = vmatpush1.msra.mxu0 %v126
    %670 = vmatprep.subr.mxu0 %v123
    %671 = vmatpush1.msra.mxu0 %v122
    %672 = vmatprep.subr.mxu0 %v119
    %673 = vmatpush1.msra.mxu0 %v118
    %674 = vmatprep.subr.mxu0 %v115
    %675 = vmatpush1.msra.mxu0 %v114
    %676 = vmatprep.subr.mxu0 %v111
    %677 = vmatpush1.msra.mxu0 %v110
    %678 = vmatprep.subr.mxu0 %v107
    %679 = vmatpush1.msra.mxu0 %v106
    %680 = vmatprep.subr.mxu0 %v103
    %681 = vmatpush1.msra.mxu0 %v102
    %682 = vmatprep.subr.mxu0 %v99
    %683 = vmatpush1.msra.mxu0 %v98
    %684 = vmatprep.subr.mxu0 %v95
    %685 = vmatpush1.msra.mxu0 %v94
    %686 = vmatprep.subr.mxu0 %v91
    %687 = vmatpush1.msra.mxu0 %v90
    %688 = vmatprep.subr.mxu0 %v87
    %689 = vmatpush1.msra.mxu0 %v86
    %690 = vmatprep.subr.mxu0 %v83
    %691 = vmatpush1.msra.mxu0 %v82
    %692 = vmatprep.subr.mxu0 %v79
    %693 = vmatpush1.msra.mxu0 %v78
    %694 = vmatprep.subr.mxu0 %v75
    %695 = vmatpush1.msra.mxu0 %v74
    %696 = vmatprep.subr.mxu0 %v71
    %697 = vmatpush1.msra.mxu0 %v70
    %698 = vmatprep.subr.mxu0 %v67
    %699 = vmatpush1.msra.mxu0 %v66
    %700 = vmatprep.subr.mxu0 0.0
    %701 = vmatpush2.msra.mxu0 0.0
    %702 = vmatprep.subr.mxu0 0.0
    %703 = vmatpush2.msra.mxu0 0.0
    %704 = vmatprep.subr.mxu0 0.0
    %705 = vmatpush2.msra.mxu0 0.0
    %706 = vmatprep.subr.mxu0 0.0
    %707 = vmatpush2.msra.mxu0 0.0
    %708 = vmatprep.subr.mxu0 0.0
    %709 = vmatpush2.msra.mxu0 0.0
    %710 = vmatprep.subr.mxu0 0.0
    %711 = vmatpush2.msra.mxu0 0.0
    %712 = vmatprep.subr.mxu0 0.0
    %713 = vmatpush2.msra.mxu0 0.0
    %714 = vmatprep.subr.mxu0 0.0
    %715 = vmatpush2.msra.mxu0 0.0
    %716 = vmatprep.subr.mxu0 0.0
    %717 = vmatpush2.msra.mxu0 0.0
    %718 = vmatprep.subr.mxu0 0.0
    %719 = vmatpush2.msra.mxu0 0.0
    %720 = vmatprep.subr.mxu0 0.0
    %721 = vmatpush2.msra.mxu0 0.0
    %722 = vmatprep.subr.mxu0 0.0
    %723 = vmatpush2.msra.mxu0 0.0
    %724 = vmatprep.subr.mxu0 0.0
    %725 = vmatpush2.msra.mxu0 0.0
    %726 = vmatprep.subr.mxu0 0.0
    %727 = vmatpush2.msra.mxu0 0.0
    %728 = vmatprep.subr.mxu0 0.0
    %729 = vmatpush2.msra.mxu0 0.0
    %730 = vmatprep.subr.mxu0 0.0
    %731 = vmatpush2.msra.mxu0 0.0
    %732 = vmatprep.mubr.f32.mxu0 0.0
    %733 = vmatmul.mubr.f32.gmra.mxu0 %v595
    %v734 = vpop.f32.mrf.mxu0
    %v735 = vadd.f32 0.0, %v734
    %v736 = vpop.f32.mrf.mxu0
    %v737 = vadd.f32 0.0, %v736
    %738 = vdwg.mxu0
    %v743 = vrot.slane %v664, 4
    %v744 = vrot.slane %v666, 4
    %v745 = vrot.slane %v735, 4
    %v746 = vrot.slane %v737, 4
    %v751 = vadd.f32 %v306, %v743
    %v752 = vadd.f32 %v308, %v744
    %v753 = vadd.f32 %v383, %v745
    %v754 = vadd.f32 %v385, %v746
    %v755 = vxor.u32 %v751, 2147483648
    %v756 = vmul.f32 %v755, 1.442695
    %v757 = vpow.pop %v756
    %v758 = vadd.f32 %v757, 1.0
    %v759 = vrcp.pop %v758
    %v760 = vmul.f32 1.0, %v759
    %v761 = vxor.u32 %v752, 2147483648
    %v762 = vmul.f32 %v761, 1.442695
    %v763 = vpow.pop %v762
    %v764 = vadd.f32 %v763, 1.0
    %v765 = vrcp.pop %v764
    %v766 = vmul.f32 1.0, %v765
    %v767 = vtanh.pop %v753
    %v768 = vxor.u32 %v754, 2147483648
    %v769 = vmul.f32 %v768, 1.442695
    %v770 = vpow.pop %v769
    %v771 = vadd.f32 %v770, 1.0
    %v772 = vrcp.pop %v771
    %v773 = vmul.f32 1.0, %v772
    %v775 = vrot.slane %v591, 6
    %v777 = vmul.f32 %v766, %v775
    %v778 = vmul.f32 %v760, %v767
    %v779 = vadd.f32 %v777, %v778
    %v780 = vtanh.pop %v779
    %v781 = vmul.f32 %v773, %v780
    %v783 = vrot.slane %v781, 4
    %785 = vmatprep.subr.mxu0 %v125
    %786 = vmatpush1.msra.mxu0 %v124
    %787 = vmatprep.subr.mxu0 %v121
    %788 = vmatpush1.msra.mxu0 %v120
    %789 = vmatprep.subr.mxu0 %v117
    %790 = vmatpush1.msra.mxu0 %v116
    %791 = vmatprep.subr.mxu0 %v113
    %792 = vmatpush1.msra.mxu0 %v112
    %793 = vmatprep.subr.mxu0 %v109
    %794 = vmatpush1.msra.mxu0 %v108
    %795 = vmatprep.subr.mxu0 %v105
    %796 = vmatpush1.msra.mxu0 %v104
    %797 = vmatprep.subr.mxu0 %v101
    %798 = vmatpush1.msra.mxu0 %v100
    %799 = vmatprep.subr.mxu0 %v97
    %800 = vmatpush1.msra.mxu0 %v96
    %801 = vmatprep.subr.mxu0 %v93
    %802 = vmatpush1.msra.mxu0 %v92
    %803 = vmatprep.subr.mxu0 %v89
    %804 = vmatpush1.msra.mxu0 %v88
    %805 = vmatprep.subr.mxu0 %v85
    %806 = vmatpush1.msra.mxu0 %v84
    %807 = vmatprep.subr.mxu0 %v81
    %808 = vmatpush1.msra.mxu0 %v80
    %809 = vmatprep.subr.mxu0 %v77
    %810 = vmatpush1.msra.mxu0 %v76
    %811 = vmatprep.subr.mxu0 %v73
    %812 = vmatpush1.msra.mxu0 %v72
    %813 = vmatprep.subr.mxu0 %v69
    %814 = vmatpush1.msra.mxu0 %v68
    %815 = vmatprep.subr.mxu0 %v65
    %816 = vmatpush1.msra.mxu0 %v64
    %817 = vmatprep.subr.mxu0 0.0
    %818 = vmatpush2.msra.mxu0 0.0
    %819 = vmatprep.subr.mxu0 0.0
    %820 = vmatpush2.msra.mxu0 0.0
    %821 = vmatprep.subr.mxu0 0.0
    %822 = vmatpush2.msra.mxu0 0.0
    %823 = vmatprep.subr.mxu0 0.0
    %824 = vmatpush2.msra.mxu0 0.0
    %825 = vmatprep.subr.mxu0 0.0
    %826 = vmatpush2.msra.mxu0 0.0
    %827 = vmatprep.subr.mxu0 0.0
    %828 = vmatpush2.msra.mxu0 0.0
    %829 = vmatprep.subr.mxu0 0.0
    %830 = vmatpush2.msra.mxu0 0.0
    %831 = vmatprep.subr.mxu0 0.0
    %832 = vmatpush2.msra.mxu0 0.0
    %833 = vmatprep.subr.mxu0 0.0
    %834 = vmatpush2.msra.mxu0 0.0
    %835 = vmatprep.subr.mxu0 0.0
    %836 = vmatpush2.msra.mxu0 0.0
    %837 = vmatprep.subr.mxu0 0.0
    %838 = vmatpush2.msra.mxu0 0.0
    %839 = vmatprep.subr.mxu0 0.0
    %840 = vmatpush2.msra.mxu0 0.0
    %841 = vmatprep.subr.mxu0 0.0
    %842 = vmatpush2.msra.mxu0 0.0
    %843 = vmatprep.subr.mxu0 0.0
    %844 = vmatpush2.msra.mxu0 0.0
    %845 = vmatprep.subr.mxu0 0.0
    %846 = vmatpush2.msra.mxu0 0.0
    %847 = vmatprep.subr.mxu0 0.0
    %848 = vmatpush2.msra.mxu0 0.0
    %849 = vmatprep.mubr.f32.mxu0 0.0
    %850 = vmatmul.mubr.f32.gmra.mxu0 %v783
    %v851 = vpop.f32.mrf.mxu0
    %v852 = vadd.f32 0.0, %v851
    %v853 = vpop.f32.mrf.mxu0
    %v854 = vadd.f32 0.0, %v853
    %855 = vdwg.mxu0
    %856 = vmatprep.subr.mxu0 %v127
    %857 = vmatpush1.msra.mxu0 %v126
    %858 = vmatprep.subr.mxu0 %v123
    %859 = vmatpush1.msra.mxu0 %v122
    %860 = vmatprep.subr.mxu0 %v119
    %861 = vmatpush1.msra.mxu0 %v118
    %862 = vmatprep.subr.mxu0 %v115
    %863 = vmatpush1.msra.mxu0 %v114
    %864 = vmatprep.subr.mxu0 %v111
    %865 = vmatpush1.msra.mxu0 %v110
    %866 = vmatprep.subr.mxu0 %v107
    %867 = vmatpush1.msra.mxu0 %v106
    %868 = vmatprep.subr.mxu0 %v103
    %869 = vmatpush1.msra.mxu0 %v102
    %870 = vmatprep.subr.mxu0 %v99
    %871 = vmatpush1.msra.mxu0 %v98
    %872 = vmatprep.subr.mxu0 %v95
    %873 = vmatpush1.msra.mxu0 %v94
    %874 = vmatprep.subr.mxu0 %v91
    %875 = vmatpush1.msra.mxu0 %v90
    %876 = vmatprep.subr.mxu0 %v87
    %877 = vmatpush1.msra.mxu0 %v86
    %878 = vmatprep.subr.mxu0 %v83
    %879 = vmatpush1.msra.mxu0 %v82
    %880 = vmatprep.subr.mxu0 %v79
    %881 = vmatpush1.msra.mxu0 %v78
    %882 = vmatprep.subr.mxu0 %v75
    %883 = vmatpush1.msra.mxu0 %v74
    %884 = vmatprep.subr.mxu0 %v71
    %885 = vmatpush1.msra.mxu0 %v70
    %886 = vmatprep.subr.mxu0 %v67
    %887 = vmatpush1.msra.mxu0 %v66
    %888 = vmatprep.subr.mxu0 0.0
    %889 = vmatpush2.msra.mxu0 0.0
    %890 = vmatprep.subr.mxu0 0.0
    %891 = vmatpush2.msra.mxu0 0.0
    %892 = vmatprep.subr.mxu0 0.0
    %893 = vmatpush2.msra.mxu0 0.0
    %894 = vmatprep.subr.mxu0 0.0
    %895 = vmatpush2.msra.mxu0 0.0
    %896 = vmatprep.subr.mxu0 0.0
    %897 = vmatpush2.msra.mxu0 0.0
    %898 = vmatprep.subr.mxu0 0.0
    %899 = vmatpush2.msra.mxu0 0.0
    %900 = vmatprep.subr.mxu0 0.0
    %901 = vmatpush2.msra.mxu0 0.0
    %902 = vmatprep.subr.mxu0 0.0
    %903 = vmatpush2.msra.mxu0 0.0
    %904 = vmatprep.subr.mxu0 0.0
    %905 = vmatpush2.msra.mxu0 0.0
    %906 = vmatprep.subr.mxu0 0.0
    %907 = vmatpush2.msra.mxu0 0.0
    %908 = vmatprep.subr.mxu0 0.0
    %909 = vmatpush2.msra.mxu0 0.0
    %910 = vmatprep.subr.mxu0 0.0
    %911 = vmatpush2.msra.mxu0 0.0
    %912 = vmatprep.subr.mxu0 0.0
    %913 = vmatpush2.msra.mxu0 0.0
    %914 = vmatprep.subr.mxu0 0.0
    %915 = vmatpush2.msra.mxu0 0.0
    %916 = vmatprep.subr.mxu0 0.0
    %917 = vmatpush2.msra.mxu0 0.0
    %918 = vmatprep.subr.mxu0 0.0
    %919 = vmatpush2.msra.mxu0 0.0
    %920 = vmatprep.mubr.f32.mxu0 0.0
    %921 = vmatmul.mubr.f32.gmra.mxu0 %v783
    %v922 = vpop.f32.mrf.mxu0
    %v923 = vadd.f32 0.0, %v922
    %v924 = vpop.f32.mrf.mxu0
    %v925 = vadd.f32 0.0, %v924
    %926 = vdwg.mxu0
    %v931 = vrot.slane %v852, 2
    %v932 = vrot.slane %v854, 2
    %v933 = vrot.slane %v923, 2
    %v934 = vrot.slane %v925, 2
    %v939 = vadd.f32 %v306, %v931
    %v940 = vadd.f32 %v308, %v932
    %v941 = vadd.f32 %v383, %v933
    %v942 = vadd.f32 %v385, %v934
    %v943 = vxor.u32 %v939, 2147483648
    %v944 = vmul.f32 %v943, 1.442695
    %v945 = vpow.pop %v944
    %v946 = vadd.f32 %v945, 1.0
    %v947 = vrcp.pop %v946
    %v948 = vmul.f32 1.0, %v947
    %v949 = vxor.u32 %v940, 2147483648
    %v950 = vmul.f32 %v949, 1.442695
    %v951 = vpow.pop %v950
    %v952 = vadd.f32 %v951, 1.0
    %v953 = vrcp.pop %v952
    %v954 = vmul.f32 1.0, %v953
    %v955 = vtanh.pop %v941
    %v956 = vxor.u32 %v942, 2147483648
    %v957 = vmul.f32 %v956, 1.442695
    %v958 = vpow.pop %v957
    %v959 = vadd.f32 %v958, 1.0
    %v960 = vrcp.pop %v959
    %v961 = vmul.f32 1.0, %v960
    %v963 = vrot.slane %v779, 6
    %v965 = vmul.f32 %v954, %v963
    %v966 = vmul.f32 %v948, %v955
    %v967 = vadd.f32 %v965, %v966
    %v968 = vtanh.pop %v967
    %v969 = vmul.f32 %v961, %v968
    %v971 = vrot.slane %v969, 6
    %973 = vmatprep.subr.mxu0 %v125
    %974 = vmatpush1.msra.mxu0 %v124
    %975 = vmatprep.subr.mxu0 %v121
    %976 = vmatpush1.msra.mxu0 %v120
    %977 = vmatprep.subr.mxu0 %v117
    %978 = vmatpush1.msra.mxu0 %v116
    %979 = vmatprep.subr.mxu0 %v113
    %980 = vmatpush1.msra.mxu0 %v112
    %981 = vmatprep.subr.mxu0 %v109
    %982 = vmatpush1.msra.mxu0 %v108
    %983 = vmatprep.subr.mxu0 %v105
    %984 = vmatpush1.msra.mxu0 %v104
    %985 = vmatprep.subr.mxu0 %v101
    %986 = vmatpush1.msra.mxu0 %v100
    %987 = vmatprep.subr.mxu0 %v97
    %988 = vmatpush1.msra.mxu0 %v96
    %989 = vmatprep.subr.mxu0 %v93
    %990 = vmatpush1.msra.mxu0 %v92
    %991 = vmatprep.subr.mxu0 %v89
    %992 = vmatpush1.msra.mxu0 %v88
    %993 = vmatprep.subr.mxu0 %v85
    %994 = vmatpush1.msra.mxu0 %v84
    %995 = vmatprep.subr.mxu0 %v81
    %996 = vmatpush1.msra.mxu0 %v80
    %997 = vmatprep.subr.mxu0 %v77
    %998 = vmatpush1.msra.mxu0 %v76
    %999 = vmatprep.subr.mxu0 %v73
    %1000 = vmatpush1.msra.mxu0 %v72
    %1001 = vmatprep.subr.mxu0 %v69
    %1002 = vmatpush1.msra.mxu0 %v68
    %1003 = vmatprep.subr.mxu0 %v65
    %1004 = vmatpush1.msra.mxu0 %v64
    %1005 = vmatprep.subr.mxu0 0.0
    %1006 = vmatpush2.msra.mxu0 0.0
    %1007 = vmatprep.subr.mxu0 0.0
    %1008 = vmatpush2.msra.mxu0 0.0
    %1009 = vmatprep.subr.mxu0 0.0
    %1010 = vmatpush2.msra.mxu0 0.0
    %1011 = vmatprep.subr.mxu0 0.0
    %1012 = vmatpush2.msra.mxu0 0.0
    %1013 = vmatprep.subr.mxu0 0.0
    %1014 = vmatpush2.msra.mxu0 0.0
    %1015 = vmatprep.subr.mxu0 0.0
    %1016 = vmatpush2.msra.mxu0 0.0
    %1017 = vmatprep.subr.mxu0 0.0
    %1018 = vmatpush2.msra.mxu0 0.0
    %1019 = vmatprep.subr.mxu0 0.0
    %1020 = vmatpush2.msra.mxu0 0.0
    %1021 = vmatprep.subr.mxu0 0.0
    %1022 = vmatpush2.msra.mxu0 0.0
    %1023 = vmatprep.subr.mxu0 0.0
    %1024 = vmatpush2.msra.mxu0 0.0
    %1025 = vmatprep.subr.mxu0 0.0
    %1026 = vmatpush2.msra.mxu0 0.0
    %1027 = vmatprep.subr.mxu0 0.0
    %1028 = vmatpush2.msra.mxu0 0.0
    %1029 = vmatprep.subr.mxu0 0.0
    %1030 = vmatpush2.msra.mxu0 0.0
    %1031 = vmatprep.subr.mxu0 0.0
    %1032 = vmatpush2.msra.mxu0 0.0
    %1033 = vmatprep.subr.mxu0 0.0
    %1034 = vmatpush2.msra.mxu0 0.0
    %1035 = vmatprep.subr.mxu0 0.0
    %1036 = vmatpush2.msra.mxu0 0.0
    %1037 = vmatprep.mubr.f32.mxu0 0.0
    %1038 = vmatmul.mubr.f32.gmra.mxu0 %v971
    %v1039 = vpop.f32.mrf.mxu0
    %v1040 = vadd.f32 0.0, %v1039
    %v1041 = vpop.f32.mrf.mxu0
    %v1042 = vadd.f32 0.0, %v1041
    %1043 = vdwg.mxu0
    %1044 = vmatprep.subr.mxu0 %v127
    %1045 = vmatpush1.msra.mxu0 %v126
    %1046 = vmatprep.subr.mxu0 %v123
    %1047 = vmatpush1.msra.mxu0 %v122
    %1048 = vmatprep.subr.mxu0 %v119
    %1049 = vmatpush1.msra.mxu0 %v118
    %1050 = vmatprep.subr.mxu0 %v115
    %1051 = vmatpush1.msra.mxu0 %v114
    %1052 = vmatprep.subr.mxu0 %v111
    %1053 = vmatpush1.msra.mxu0 %v110
    %1054 = vmatprep.subr.mxu0 %v107
    %1055 = vmatpush1.msra.mxu0 %v106
    %1056 = vmatprep.subr.mxu0 %v103
    %1057 = vmatpush1.msra.mxu0 %v102
    %1058 = vmatprep.subr.mxu0 %v99
    %1059 = vmatpush1.msra.mxu0 %v98
    %1060 = vmatprep.subr.mxu0 %v95
    %1061 = vmatpush1.msra.mxu0 %v94
    %1062 = vmatprep.subr.mxu0 %v91
    %1063 = vmatpush1.msra.mxu0 %v90
    %1064 = vmatprep.subr.mxu0 %v87
    %1065 = vmatpush1.msra.mxu0 %v86
    %1066 = vmatprep.subr.mxu0 %v83
    %1067 = vmatpush1.msra.mxu0 %v82
    %1068 = vmatprep.subr.mxu0 %v79
    %1069 = vmatpush1.msra.mxu0 %v78
    %1070 = vmatprep.subr.mxu0 %v75
    %1071 = vmatpush1.msra.mxu0 %v74
    %1072 = vmatprep.subr.mxu0 %v71
    %1073 = vmatpush1.msra.mxu0 %v70
    %1074 = vmatprep.subr.mxu0 %v67
    %1075 = vmatpush1.msra.mxu0 %v66
    %1076 = vmatprep.subr.mxu0 0.0
    %1077 = vmatpush2.msra.mxu0 0.0
    %1078 = vmatprep.subr.mxu0 0.0
    %1079 = vmatpush2.msra.mxu0 0.0
    %1080 = vmatprep.subr.mxu0 0.0
    %1081 = vmatpush2.msra.mxu0 0.0
    %1082 = vmatprep.subr.mxu0 0.0
    %1083 = vmatpush2.msra.mxu0 0.0
    %1084 = vmatprep.subr.mxu0 0.0
    %1085 = vmatpush2.msra.mxu0 0.0
    %1086 = vmatprep.subr.mxu0 0.0
    %1087 = vmatpush2.msra.mxu0 0.0
    %1088 = vmatprep.subr.mxu0 0.0
    %1089 = vmatpush2.msra.mxu0 0.0
    %1090 = vmatprep.subr.mxu0 0.0
    %1091 = vmatpush2.msra.mxu0 0.0
    %1092 = vmatprep.subr.mxu0 0.0
    %1093 = vmatpush2.msra.mxu0 0.0
    %1094 = vmatprep.subr.mxu0 0.0
    %1095 = vmatpush2.msra.mxu0 0.0
    %1096 = vmatprep.subr.mxu0 0.0
    %1097 = vmatpush2.msra.mxu0 0.0
    %1098 = vmatprep.subr.mxu0 0.0
    %1099 = vmatpush2.msra.mxu0 0.0
    %1100 = vmatprep.subr.mxu0 0.0
    %1101 = vmatpush2.msra.mxu0 0.0
    %1102 = vmatprep.subr.mxu0 0.0
    %1103 = vmatpush2.msra.mxu0 0.0
    %1104 = vmatprep.subr.mxu0 0.0
    %1105 = vmatpush2.msra.mxu0 0.0
    %1106 = vmatprep.subr.mxu0 0.0
    %1107 = vmatpush2.msra.mxu0 0.0
    %1108 = vmatprep.mubr.f32.mxu0 0.0
    %1109 = vmatmul.mubr.f32.gmra.mxu0 %v971
    %v1110 = vpop.f32.mrf.mxu0
    %v1111 = vadd.f32 0.0, %v1110
    %v1112 = vpop.f32.mrf.mxu0
    %v1113 = vadd.f32 0.0, %v1112
    %1114 = vdwg.mxu0
    %v1115 = vadd.f32 %v312, %v1040
    %v1116 = vadd.f32 %v314, %v1042
    %v1117 = vadd.f32 %v389, %v1111
    %v1118 = vadd.f32 %v391, %v1113
    %v1119 = vxor.u32 %v1115, 2147483648
    %v1120 = vmul.f32 %v1119, 1.442695
    %v1121 = vpow.pop %v1120
    %v1122 = vadd.f32 %v1121, 1.0
    %v1123 = vrcp.pop %v1122
    %v1124 = vmul.f32 1.0, %v1123
    %v1125 = vxor.u32 %v1116, 2147483648
    %v1126 = vmul.f32 %v1125, 1.442695
    %v1127 = vpow.pop %v1126
    %v1128 = vadd.f32 %v1127, 1.0
    %v1129 = vrcp.pop %v1128
    %v1130 = vmul.f32 1.0, %v1129
    %v1131 = vtanh.pop %v1117
    %v1132 = vxor.u32 %v1118, 2147483648
    %v1133 = vmul.f32 %v1132, 1.442695
    %v1134 = vpow.pop %v1133
    %v1135 = vadd.f32 %v1134, 1.0
    %v1136 = vrcp.pop %v1135
    %v1137 = vmul.f32 1.0, %v1136
    %v1139 = vrot.slane %v967, 6
    %v1141 = vmul.f32 %v1130, %v1139
    %v1142 = vmul.f32 %v1124, %v1131
    %v1143 = vadd.f32 %v1141, %v1142
    %v1144 = vtanh.pop %v1143
    %v1145 = vmul.f32 %v1137, %v1144
    %1146 = vmatprep.subr.mxu0 %v125
    %1147 = vmatpush1.msra.mxu0 %v124
    %1148 = vmatprep.subr.mxu0 %v121
    %1149 = vmatpush1.msra.mxu0 %v120
    %1150 = vmatprep.subr.mxu0 %v117
    %1151 = vmatpush1.msra.mxu0 %v116
    %1152 = vmatprep.subr.mxu0 %v113
    %1153 = vmatpush1.msra.mxu0 %v112
    %1154 = vmatprep.subr.mxu0 %v109
    %1155 = vmatpush1.msra.mxu0 %v108
    %1156 = vmatprep.subr.mxu0 %v105
    %1157 = vmatpush1.msra.mxu0 %v104
    %1158 = vmatprep.subr.mxu0 %v101
    %1159 = vmatpush1.msra.mxu0 %v100
    %1160 = vmatprep.subr.mxu0 %v97
    %1161 = vmatpush1.msra.mxu0 %v96
    %1162 = vmatprep.subr.mxu0 %v93
    %1163 = vmatpush1.msra.mxu0 %v92
    %1164 = vmatprep.subr.mxu0 %v89
    %1165 = vmatpush1.msra.mxu0 %v88
    %1166 = vmatprep.subr.mxu0 %v85
    %1167 = vmatpush1.msra.mxu0 %v84
    %1168 = vmatprep.subr.mxu0 %v81
    %1169 = vmatpush1.msra.mxu0 %v80
    %1170 = vmatprep.subr.mxu0 %v77
    %1171 = vmatpush1.msra.mxu0 %v76
    %1172 = vmatprep.subr.mxu0 %v73
    %1173 = vmatpush1.msra.mxu0 %v72
    %1174 = vmatprep.subr.mxu0 %v69
    %1175 = vmatpush1.msra.mxu0 %v68
    %1176 = vmatprep.subr.mxu0 %v65
    %1177 = vmatpush1.msra.mxu0 %v64
    %1178 = vmatprep.subr.mxu0 0.0
    %1179 = vmatpush2.msra.mxu0 0.0
    %1180 = vmatprep.subr.mxu0 0.0
    %1181 = vmatpush2.msra.mxu0 0.0
    %1182 = vmatprep.subr.mxu0 0.0
    %1183 = vmatpush2.msra.mxu0 0.0
    %1184 = vmatprep.subr.mxu0 0.0
    %1185 = vmatpush2.msra.mxu0 0.0
    %1186 = vmatprep.subr.mxu0 0.0
    %1187 = vmatpush2.msra.mxu0 0.0
    %1188 = vmatprep.subr.mxu0 0.0
    %1189 = vmatpush2.msra.mxu0 0.0
    %1190 = vmatprep.subr.mxu0 0.0
    %1191 = vmatpush2.msra.mxu0 0.0
    %1192 = vmatprep.subr.mxu0 0.0
    %1193 = vmatpush2.msra.mxu0 0.0
    %1194 = vmatprep.subr.mxu0 0.0
    %1195 = vmatpush2.msra.mxu0 0.0
    %1196 = vmatprep.subr.mxu0 0.0
    %1197 = vmatpush2.msra.mxu0 0.0
    %1198 = vmatprep.subr.mxu0 0.0
    %1199 = vmatpush2.msra.mxu0 0.0
    %1200 = vmatprep.subr.mxu0 0.0
    %1201 = vmatpush2.msra.mxu0 0.0
    %1202 = vmatprep.subr.mxu0 0.0
    %1203 = vmatpush2.msra.mxu0 0.0
    %1204 = vmatprep.subr.mxu0 0.0
    %1205 = vmatpush2.msra.mxu0 0.0
    %1206 = vmatprep.subr.mxu0 0.0
    %1207 = vmatpush2.msra.mxu0 0.0
    %1208 = vmatprep.subr.mxu0 0.0
    %1209 = vmatpush2.msra.mxu0 0.0
    %1210 = vmatprep.mubr.f32.mxu0 0.0
    %1211 = vmatmul.mubr.f32.gmra.mxu0 %v1145
    %v1212 = vpop.f32.mrf.mxu0
    %v1213 = vadd.f32 0.0, %v1212
    %v1214 = vpop.f32.mrf.mxu0
    %v1215 = vadd.f32 0.0, %v1214
    %1216 = vdwg.mxu0
    %1217 = vmatprep.subr.mxu0 %v127
    %1218 = vmatpush1.msra.mxu0 %v126
    %1219 = vmatprep.subr.mxu0 %v123
    %1220 = vmatpush1.msra.mxu0 %v122
    %1221 = vmatprep.subr.mxu0 %v119
    %1222 = vmatpush1.msra.mxu0 %v118
    %1223 = vmatprep.subr.mxu0 %v115
    %1224 = vmatpush1.msra.mxu0 %v114
    %1225 = vmatprep.subr.mxu0 %v111
    %1226 = vmatpush1.msra.mxu0 %v110
    %1227 = vmatprep.subr.mxu0 %v107
    %1228 = vmatpush1.msra.mxu0 %v106
    %1229 = vmatprep.subr.mxu0 %v103
    %1230 = vmatpush1.msra.mxu0 %v102
    %1231 = vmatprep.subr.mxu0 %v99
    %1232 = vmatpush1.msra.mxu0 %v98
    %1233 = vmatprep.subr.mxu0 %v95
    %1234 = vmatpush1.msra.mxu0 %v94
    %1235 = vmatprep.subr.mxu0 %v91
    %1236 = vmatpush1.msra.mxu0 %v90
    %1237 = vmatprep.subr.mxu0 %v87
    %1238 = vmatpush1.msra.mxu0 %v86
    %1239 = vmatprep.subr.mxu0 %v83
    %1240 = vmatpush1.msra.mxu0 %v82
    %1241 = vmatprep.subr.mxu0 %v79
    %1242 = vmatpush1.msra.mxu0 %v78
    %1243 = vmatprep.subr.mxu0 %v75
    %1244 = vmatpush1.msra.mxu0 %v74
    %1245 = vmatprep.subr.mxu0 %v71
    %1246 = vmatpush1.msra.mxu0 %v70
    %1247 = vmatprep.subr.mxu0 %v67
    %1248 = vmatpush1.msra.mxu0 %v66
    %1249 = vmatprep.subr.mxu0 0.0
    %1250 = vmatpush2.msra.mxu0 0.0
    %1251 = vmatprep.subr.mxu0 0.0
    %1252 = vmatpush2.msra.mxu0 0.0
    %1253 = vmatprep.subr.mxu0 0.0
    %1254 = vmatpush2.msra.mxu0 0.0
    %1255 = vmatprep.subr.mxu0 0.0
    %1256 = vmatpush2.msra.mxu0 0.0
    %1257 = vmatprep.subr.mxu0 0.0
    %1258 = vmatpush2.msra.mxu0 0.0
    %1259 = vmatprep.subr.mxu0 0.0
    %1260 = vmatpush2.msra.mxu0 0.0
    %1261 = vmatprep.subr.mxu0 0.0
    %1262 = vmatpush2.msra.mxu0 0.0
    %1263 = vmatprep.subr.mxu0 0.0
    %1264 = vmatpush2.msra.mxu0 0.0
    %1265 = vmatprep.subr.mxu0 0.0
    %1266 = vmatpush2.msra.mxu0 0.0
    %1267 = vmatprep.subr.mxu0 0.0
    %1268 = vmatpush2.msra.mxu0 0.0
    %1269 = vmatprep.subr.mxu0 0.0
    %1270 = vmatpush2.msra.mxu0 0.0
    %1271 = vmatprep.subr.mxu0 0.0
    %1272 = vmatpush2.msra.mxu0 0.0
    %1273 = vmatprep.subr.mxu0 0.0
    %1274 = vmatpush2.msra.mxu0 0.0
    %1275 = vmatprep.subr.mxu0 0.0
    %1276 = vmatpush2.msra.mxu0 0.0
    %1277 = vmatprep.subr.mxu0 0.0
    %1278 = vmatpush2.msra.mxu0 0.0
    %1279 = vmatprep.subr.mxu0 0.0
    %1280 = vmatpush2.msra.mxu0 0.0
    %1281 = vmatprep.mubr.f32.mxu0 0.0
    %1282 = vmatmul.mubr.f32.gmra.mxu0 %v1145
    %v1283 = vpop.f32.mrf.mxu0
    %v1284 = vadd.f32 0.0, %v1283
    %v1285 = vpop.f32.mrf.mxu0
    %v1286 = vadd.f32 0.0, %v1285
    %1287 = vdwg.mxu0
    %v1292 = vrot.slane %v1213, 6
    %v1293 = vrot.slane %v1215, 6
    %v1294 = vrot.slane %v1284, 6
    %v1295 = vrot.slane %v1286, 6
    %v1300 = vadd.f32 %v312, %v1292
    %v1301 = vadd.f32 %v314, %v1293
    %v1302 = vadd.f32 %v389, %v1294
    %v1303 = vadd.f32 %v391, %v1295
    %v1304 = vxor.u32 %v1300, 2147483648
    %v1305 = vmul.f32 %v1304, 1.442695
    %v1306 = vpow.pop %v1305
    %v1307 = vadd.f32 %v1306, 1.0
    %v1308 = vrcp.pop %v1307
    %v1309 = vmul.f32 1.0, %v1308
    %v1310 = vxor.u32 %v1301, 2147483648
    %v1311 = vmul.f32 %v1310, 1.442695
    %v1312 = vpow.pop %v1311
    %v1313 = vadd.f32 %v1312, 1.0
    %v1314 = vrcp.pop %v1313
    %v1315 = vmul.f32 1.0, %v1314
    %v1316 = vtanh.pop %v1302
    %v1317 = vxor.u32 %v1303, 2147483648
    %v1318 = vmul.f32 %v1317, 1.442695
    %v1319 = vpow.pop %v1318
    %v1320 = vadd.f32 %v1319, 1.0
    %v1321 = vrcp.pop %v1320
    %v1322 = vmul.f32 1.0, %v1321
    %v1324 = vrot.slane %v1143, 6
    %v1326 = vmul.f32 %v1315, %v1324
    %v1327 = vmul.f32 %v1309, %v1316
    %v1328 = vadd.f32 %v1326, %v1327
    %v1329 = vtanh.pop %v1328
    %v1330 = vmul.f32 %v1322, %v1329
    %v1332 = vrot.slane %v1330, 2
    %1334 = vmatprep.subr.mxu0 %v125
    %1335 = vmatpush1.msra.mxu0 %v124
    %1336 = vmatprep.subr.mxu0 %v121
    %1337 = vmatpush1.msra.mxu0 %v120
    %1338 = vmatprep.subr.mxu0 %v117
    %1339 = vmatpush1.msra.mxu0 %v116
    %1340 = vmatprep.subr.mxu0 %v113
    %1341 = vmatpush1.msra.mxu0 %v112
    %1342 = vmatprep.subr.mxu0 %v109
    %1343 = vmatpush1.msra.mxu0 %v108
    %1344 = vmatprep.subr.mxu0 %v105
    %1345 = vmatpush1.msra.mxu0 %v104
    %1346 = vmatprep.subr.mxu0 %v101
    %1347 = vmatpush1.msra.mxu0 %v100
    %1348 = vmatprep.subr.mxu0 %v97
    %1349 = vmatpush1.msra.mxu0 %v96
    %1350 = vmatprep.subr.mxu0 %v93
    %1351 = vmatpush1.msra.mxu0 %v92
    %1352 = vmatprep.subr.mxu0 %v89
    %1353 = vmatpush1.msra.mxu0 %v88
    %1354 = vmatprep.subr.mxu0 %v85
    %1355 = vmatpush1.msra.mxu0 %v84
    %1356 = vmatprep.subr.mxu0 %v81
    %1357 = vmatpush1.msra.mxu0 %v80
    %1358 = vmatprep.subr.mxu0 %v77
    %1359 = vmatpush1.msra.mxu0 %v76
    %1360 = vmatprep.subr.mxu0 %v73
    %1361 = vmatpush1.msra.mxu0 %v72
    %1362 = vmatprep.subr.mxu0 %v69
    %1363 = vmatpush1.msra.mxu0 %v68
    %1364 = vmatprep.subr.mxu0 %v65
    %1365 = vmatpush1.msra.mxu0 %v64
    %1366 = vmatprep.subr.mxu0 0.0
    %1367 = vmatpush2.msra.mxu0 0.0
    %1368 = vmatprep.subr.mxu0 0.0
    %1369 = vmatpush2.msra.mxu0 0.0
    %1370 = vmatprep.subr.mxu0 0.0
    %1371 = vmatpush2.msra.mxu0 0.0
    %1372 = vmatprep.subr.mxu0 0.0
    %1373 = vmatpush2.msra.mxu0 0.0
    %1374 = vmatprep.subr.mxu0 0.0
    %1375 = vmatpush2.msra.mxu0 0.0
    %1376 = vmatprep.subr.mxu0 0.0
    %1377 = vmatpush2.msra.mxu0 0.0
    %1378 = vmatprep.subr.mxu0 0.0
    %1379 = vmatpush2.msra.mxu0 0.0
    %1380 = vmatprep.subr.mxu0 0.0
    %1381 = vmatpush2.msra.mxu0 0.0
    %1382 = vmatprep.subr.mxu0 0.0
    %1383 = vmatpush2.msra.mxu0 0.0
    %1384 = vmatprep.subr.mxu0 0.0
    %1385 = vmatpush2.msra.mxu0 0.0
    %1386 = vmatprep.subr.mxu0 0.0
    %1387 = vmatpush2.msra.mxu0 0.0
    %1388 = vmatprep.subr.mxu0 0.0
    %1389 = vmatpush2.msra.mxu0 0.0
    %1390 = vmatprep.subr.mxu0 0.0
    %1391 = vmatpush2.msra.mxu0 0.0
    %1392 = vmatprep.subr.mxu0 0.0
    %1393 = vmatpush2.msra.mxu0 0.0
    %1394 = vmatprep.subr.mxu0 0.0
    %1395 = vmatpush2.msra.mxu0 0.0
    %1396 = vmatprep.subr.mxu0 0.0
    %1397 = vmatpush2.msra.mxu0 0.0
    %1398 = vmatprep.mubr.f32.mxu0 0.0
    %1399 = vmatmul.mubr.f32.gmra.mxu0 %v1332
    %v1400 = vpop.f32.mrf.mxu0
    %v1401 = vadd.f32 0.0, %v1400
    %v1402 = vpop.f32.mrf.mxu0
    %v1403 = vadd.f32 0.0, %v1402
    %1404 = vdwg.mxu0
    %1405 = vmatprep.subr.mxu0 %v127
    %1406 = vmatpush1.msra.mxu0 %v126
    %1407 = vmatprep.subr.mxu0 %v123
    %1408 = vmatpush1.msra.mxu0 %v122
    %1409 = vmatprep.subr.mxu0 %v119
    %1410 = vmatpush1.msra.mxu0 %v118
    %1411 = vmatprep.subr.mxu0 %v115
    %1412 = vmatpush1.msra.mxu0 %v114
    %1413 = vmatprep.subr.mxu0 %v111
    %1414 = vmatpush1.msra.mxu0 %v110
    %1415 = vmatprep.subr.mxu0 %v107
    %1416 = vmatpush1.msra.mxu0 %v106
    %1417 = vmatprep.subr.mxu0 %v103
    %1418 = vmatpush1.msra.mxu0 %v102
    %1419 = vmatprep.subr.mxu0 %v99
    %1420 = vmatpush1.msra.mxu0 %v98
    %1421 = vmatprep.subr.mxu0 %v95
    %1422 = vmatpush1.msra.mxu0 %v94
    %1423 = vmatprep.subr.mxu0 %v91
    %1424 = vmatpush1.msra.mxu0 %v90
    %1425 = vmatprep.subr.mxu0 %v87
    %1426 = vmatpush1.msra.mxu0 %v86
    %1427 = vmatprep.subr.mxu0 %v83
    %1428 = vmatpush1.msra.mxu0 %v82
    %1429 = vmatprep.subr.mxu0 %v79
    %1430 = vmatpush1.msra.mxu0 %v78
    %1431 = vmatprep.subr.mxu0 %v75
    %1432 = vmatpush1.msra.mxu0 %v74
    %1433 = vmatprep.subr.mxu0 %v71
    %1434 = vmatpush1.msra.mxu0 %v70
    %1435 = vmatprep.subr.mxu0 %v67
    %1436 = vmatpush1.msra.mxu0 %v66
    %1437 = vmatprep.subr.mxu0 0.0
    %1438 = vmatpush2.msra.mxu0 0.0
    %1439 = vmatprep.subr.mxu0 0.0
    %1440 = vmatpush2.msra.mxu0 0.0
    %1441 = vmatprep.subr.mxu0 0.0
    %1442 = vmatpush2.msra.mxu0 0.0
    %1443 = vmatprep.subr.mxu0 0.0
    %1444 = vmatpush2.msra.mxu0 0.0
    %1445 = vmatprep.subr.mxu0 0.0
    %1446 = vmatpush2.msra.mxu0 0.0
    %1447 = vmatprep.subr.mxu0 0.0
    %1448 = vmatpush2.msra.mxu0 0.0
    %1449 = vmatprep.subr.mxu0 0.0
    %1450 = vmatpush2.msra.mxu0 0.0
    %1451 = vmatprep.subr.mxu0 0.0
    %1452 = vmatpush2.msra.mxu0 0.0
    %1453 = vmatprep.subr.mxu0 0.0
    %1454 = vmatpush2.msra.mxu0 0.0
    %1455 = vmatprep.subr.mxu0 0.0
    %1456 = vmatpush2.msra.mxu0 0.0
    %1457 = vmatprep.subr.mxu0 0.0
    %1458 = vmatpush2.msra.mxu0 0.0
    %1459 = vmatprep.subr.mxu0 0.0
    %1460 = vmatpush2.msra.mxu0 0.0
    %1461 = vmatprep.subr.mxu0 0.0
    %1462 = vmatpush2.msra.mxu0 0.0
    %1463 = vmatprep.subr.mxu0 0.0
    %1464 = vmatpush2.msra.mxu0 0.0
    %1465 = vmatprep.subr.mxu0 0.0
    %1466 = vmatpush2.msra.mxu0 0.0
    %1467 = vmatprep.subr.mxu0 0.0
    %1468 = vmatpush2.msra.mxu0 0.0
    %1469 = vmatprep.mubr.f32.mxu0 0.0
    %1470 = vmatmul.mubr.f32.gmra.mxu0 %v1332
    %v1471 = vpop.f32.mrf.mxu0
    %v1472 = vadd.f32 0.0, %v1471
    %v1473 = vpop.f32.mrf.mxu0
    %v1474 = vadd.f32 0.0, %v1473
    %1475 = vdwg.mxu0
    %v1480 = vrot.slane %v1401, 4
    %v1481 = vrot.slane %v1403, 4
    %v1482 = vrot.slane %v1472, 4
    %v1483 = vrot.slane %v1474, 4
    %v1488 = vadd.f32 %v312, %v1480
    %v1489 = vadd.f32 %v314, %v1481
    %v1490 = vadd.f32 %v389, %v1482
    %v1491 = vadd.f32 %v391, %v1483
    %v1492 = vxor.u32 %v1488, 2147483648
    %v1493 = vmul.f32 %v1492, 1.442695
    %v1494 = vpow.pop %v1493
    %v1495 = vadd.f32 %v1494, 1.0
    %v1496 = vrcp.pop %v1495
    %v1497 = vmul.f32 1.0, %v1496
    %v1498 = vxor.u32 %v1489, 2147483648
    %v1499 = vmul.f32 %v1498, 1.442695
    %v1500 = vpow.pop %v1499
    %v1501 = vadd.f32 %v1500, 1.0
    %v1502 = vrcp.pop %v1501
    %v1503 = vmul.f32 1.0, %v1502
    %v1504 = vtanh.pop %v1490
    %v1505 = vxor.u32 %v1491, 2147483648
    %v1506 = vmul.f32 %v1505, 1.442695
    %v1507 = vpow.pop %v1506
    %v1508 = vadd.f32 %v1507, 1.0
    %v1509 = vrcp.pop %v1508
    %v1510 = vmul.f32 1.0, %v1509
    %v1512 = vrot.slane %v1328, 6
    %v1514 = vmul.f32 %v1503, %v1512
    %v1515 = vmul.f32 %v1497, %v1504
    %v1516 = vadd.f32 %v1514, %v1515
    %v1517 = vtanh.pop %v1516
    %v1518 = vmul.f32 %v1510, %v1517
    %v1520 = vrot.slane %v1518, 4
    %1522 = vmatprep.subr.mxu0 %v125
    %1523 = vmatpush1.msra.mxu0 %v124
    %1524 = vmatprep.subr.mxu0 %v121
    %1525 = vmatpush1.msra.mxu0 %v120
    %1526 = vmatprep.subr.mxu0 %v117
    %1527 = vmatpush1.msra.mxu0 %v116
    %1528 = vmatprep.subr.mxu0 %v113
    %1529 = vmatpush1.msra.mxu0 %v112
    %1530 = vmatprep.subr.mxu0 %v109
    %1531 = vmatpush1.msra.mxu0 %v108
    %1532 = vmatprep.subr.mxu0 %v105
    %1533 = vmatpush1.msra.mxu0 %v104
    %1534 = vmatprep.subr.mxu0 %v101
    %1535 = vmatpush1.msra.mxu0 %v100
    %1536 = vmatprep.subr.mxu0 %v97
    %1537 = vmatpush1.msra.mxu0 %v96
    %1538 = vmatprep.subr.mxu0 %v93
    %1539 = vmatpush1.msra.mxu0 %v92
    %1540 = vmatprep.subr.mxu0 %v89
    %1541 = vmatpush1.msra.mxu0 %v88
    %1542 = vmatprep.subr.mxu0 %v85
    %1543 = vmatpush1.msra.mxu0 %v84
    %1544 = vmatprep.subr.mxu0 %v81
    %1545 = vmatpush1.msra.mxu0 %v80
    %1546 = vmatprep.subr.mxu0 %v77
    %1547 = vmatpush1.msra.mxu0 %v76
    %1548 = vmatprep.subr.mxu0 %v73
    %1549 = vmatpush1.msra.mxu0 %v72
    %1550 = vmatprep.subr.mxu0 %v69
    %1551 = vmatpush1.msra.mxu0 %v68
    %1552 = vmatprep.subr.mxu0 %v65
    %1553 = vmatpush1.msra.mxu0 %v64
    %1554 = vmatprep.subr.mxu0 0.0
    %1555 = vmatpush2.msra.mxu0 0.0
    %1556 = vmatprep.subr.mxu0 0.0
    %1557 = vmatpush2.msra.mxu0 0.0
    %1558 = vmatprep.subr.mxu0 0.0
    %1559 = vmatpush2.msra.mxu0 0.0
    %1560 = vmatprep.subr.mxu0 0.0
    %1561 = vmatpush2.msra.mxu0 0.0
    %1562 = vmatprep.subr.mxu0 0.0
    %1563 = vmatpush2.msra.mxu0 0.0
    %1564 = vmatprep.subr.mxu0 0.0
    %1565 = vmatpush2.msra.mxu0 0.0
    %1566 = vmatprep.subr.mxu0 0.0
    %1567 = vmatpush2.msra.mxu0 0.0
    %1568 = vmatprep.subr.mxu0 0.0
    %1569 = vmatpush2.msra.mxu0 0.0
    %1570 = vmatprep.subr.mxu0 0.0
    %1571 = vmatpush2.msra.mxu0 0.0
    %1572 = vmatprep.subr.mxu0 0.0
    %1573 = vmatpush2.msra.mxu0 0.0
    %1574 = vmatprep.subr.mxu0 0.0
    %1575 = vmatpush2.msra.mxu0 0.0
    %1576 = vmatprep.subr.mxu0 0.0
    %1577 = vmatpush2.msra.mxu0 0.0
    %1578 = vmatprep.subr.mxu0 0.0
    %1579 = vmatpush2.msra.mxu0 0.0
    %1580 = vmatprep.subr.mxu0 0.0
    %1581 = vmatpush2.msra.mxu0 0.0
    %1582 = vmatprep.subr.mxu0 0.0
    %1583 = vmatpush2.msra.mxu0 0.0
    %1584 = vmatprep.subr.mxu0 0.0
    %1585 = vmatpush2.msra.mxu0 0.0
    %1586 = vmatprep.mubr.f32.mxu0 0.0
    %1587 = vmatmul.mubr.f32.gmra.mxu0 %v1520
    %v1588 = vpop.f32.mrf.mxu0
    %v1589 = vadd.f32 0.0, %v1588
    %v1590 = vpop.f32.mrf.mxu0
    %v1591 = vadd.f32 0.0, %v1590
    %1592 = vdwg.mxu0
    %1593 = vmatprep.subr.mxu0 %v127
    %1594 = vmatpush1.msra.mxu0 %v126
    %1595 = vmatprep.subr.mxu0 %v123
    %1596 = vmatpush1.msra.mxu0 %v122
    %1597 = vmatprep.subr.mxu0 %v119
    %1598 = vmatpush1.msra.mxu0 %v118
    %1599 = vmatprep.subr.mxu0 %v115
    %1600 = vmatpush1.msra.mxu0 %v114
    %1601 = vmatprep.subr.mxu0 %v111
    %1602 = vmatpush1.msra.mxu0 %v110
    %1603 = vmatprep.subr.mxu0 %v107
    %1604 = vmatpush1.msra.mxu0 %v106
    %1605 = vmatprep.subr.mxu0 %v103
    %1606 = vmatpush1.msra.mxu0 %v102
    %1607 = vmatprep.subr.mxu0 %v99
    %1608 = vmatpush1.msra.mxu0 %v98
    %1609 = vmatprep.subr.mxu0 %v95
    %1610 = vmatpush1.msra.mxu0 %v94
    %1611 = vmatprep.subr.mxu0 %v91
    %1612 = vmatpush1.msra.mxu0 %v90
    %1613 = vmatprep.subr.mxu0 %v87
    %1614 = vmatpush1.msra.mxu0 %v86
    %1615 = vmatprep.subr.mxu0 %v83
    %1616 = vmatpush1.msra.mxu0 %v82
    %1617 = vmatprep.subr.mxu0 %v79
    %1618 = vmatpush1.msra.mxu0 %v78
    %1619 = vmatprep.subr.mxu0 %v75
    %1620 = vmatpush1.msra.mxu0 %v74
    %1621 = vmatprep.subr.mxu0 %v71
    %1622 = vmatpush1.msra.mxu0 %v70
    %1623 = vmatprep.subr.mxu0 %v67
    %1624 = vmatpush1.msra.mxu0 %v66
    %1625 = vmatprep.subr.mxu0 0.0
    %1626 = vmatpush2.msra.mxu0 0.0
    %1627 = vmatprep.subr.mxu0 0.0
    %1628 = vmatpush2.msra.mxu0 0.0
    %1629 = vmatprep.subr.mxu0 0.0
    %1630 = vmatpush2.msra.mxu0 0.0
    %1631 = vmatprep.subr.mxu0 0.0
    %1632 = vmatpush2.msra.mxu0 0.0
    %1633 = vmatprep.subr.mxu0 0.0
    %1634 = vmatpush2.msra.mxu0 0.0
    %1635 = vmatprep.subr.mxu0 0.0
    %1636 = vmatpush2.msra.mxu0 0.0
    %1637 = vmatprep.subr.mxu0 0.0
    %1638 = vmatpush2.msra.mxu0 0.0
    %1639 = vmatprep.subr.mxu0 0.0
    %1640 = vmatpush2.msra.mxu0 0.0
    %1641 = vmatprep.subr.mxu0 0.0
    %1642 = vmatpush2.msra.mxu0 0.0
    %1643 = vmatprep.subr.mxu0 0.0
    %1644 = vmatpush2.msra.mxu0 0.0
    %1645 = vmatprep.subr.mxu0 0.0
    %1646 = vmatpush2.msra.mxu0 0.0
    %1647 = vmatprep.subr.mxu0 0.0
    %1648 = vmatpush2.msra.mxu0 0.0
    %1649 = vmatprep.subr.mxu0 0.0
    %1650 = vmatpush2.msra.mxu0 0.0
    %1651 = vmatprep.subr.mxu0 0.0
    %1652 = vmatpush2.msra.mxu0 0.0
    %1653 = vmatprep.subr.mxu0 0.0
    %1654 = vmatpush2.msra.mxu0 0.0
    %1655 = vmatprep.subr.mxu0 0.0
    %1656 = vmatpush2.msra.mxu0 0.0
    %1657 = vmatprep.mubr.f32.mxu0 0.0
    %1658 = vmatmul.mubr.f32.gmra.mxu0 %v1520
    %v1659 = vpop.f32.mrf.mxu0
    %v1660 = vadd.f32 0.0, %v1659
    %v1661 = vpop.f32.mrf.mxu0
    %v1662 = vadd.f32 0.0, %v1661
    %1663 = vdwg.mxu0
    %v1668 = vrot.slane %v1589, 2
    %v1669 = vrot.slane %v1591, 2
    %v1670 = vrot.slane %v1660, 2
    %v1671 = vrot.slane %v1662, 2
    %v1676 = vadd.f32 %v312, %v1668
    %v1677 = vadd.f32 %v314, %v1669
    %v1678 = vadd.f32 %v389, %v1670
    %v1679 = vadd.f32 %v391, %v1671
    %v1680 = vxor.u32 %v1676, 2147483648
    %v1681 = vmul.f32 %v1680, 1.442695
    %v1682 = vpow.pop %v1681
    %v1683 = vadd.f32 %v1682, 1.0
    %v1684 = vrcp.pop %v1683
    %v1685 = vmul.f32 1.0, %v1684
    %v1686 = vxor.u32 %v1677, 2147483648
    %v1687 = vmul.f32 %v1686, 1.442695
    %v1688 = vpow.pop %v1687
    %v1689 = vadd.f32 %v1688, 1.0
    %v1690 = vrcp.pop %v1689
    %v1691 = vmul.f32 1.0, %v1690
    %v1692 = vtanh.pop %v1678
    %v1693 = vxor.u32 %v1679, 2147483648
    %v1694 = vmul.f32 %v1693, 1.442695
    %v1695 = vpow.pop %v1694
    %v1696 = vadd.f32 %v1695, 1.0
    %v1697 = vrcp.pop %v1696
    %v1698 = vmul.f32 1.0, %v1697
    %v1700 = vrot.slane %v1516, 6
    %v1702 = vmul.f32 %v1691, %v1700
    %v1703 = vmul.f32 %v1685, %v1692
    %v1704 = vadd.f32 %v1702, %v1703
    %v1705 = vtanh.pop %v1704
    %v1706 = vmul.f32 %v1698, %v1705
    %v1708 = vrot.slane %v192, 2
    %v1709 = vld [vmem:[%s7] sm:$0xff]
    %v1710 = vld [vmem:[%s7 + $0x8] sm:$0xff]
    %v1711 = vld [vmem:[%s7 + $0x10] sm:$0xff]
    %v1712 = vld [vmem:[%s7 + $0x18] sm:$0xff]
    %v1713 = vld [vmem:[%s7 + $0x20] sm:$0xff]
    %v1714 = vld [vmem:[%s7 + $0x28] sm:$0xff]
    %v1715 = vld [vmem:[%s7 + $0x30] sm:$0xff]
    %v1716 = vld [vmem:[%s7 + $0x38] sm:$0xff]
    %v1717 = vld [vmem:[%s7 + $0x40] sm:$0xff]
    %v1718 = vld [vmem:[%s7 + $0x48] sm:$0xff]
    %v1719 = vld [vmem:[%s7 + $0x50] sm:$0xff]
    %v1720 = vld [vmem:[%s7 + $0x58] sm:$0xff]
    %v1721 = vld [vmem:[%s7 + $0x60] sm:$0xff]
    %v1722 = vld [vmem:[%s7 + $0x68] sm:$0xff]
    %v1723 = vld [vmem:[%s7 + $0x70] sm:$0xff]
    %v1724 = vld [vmem:[%s7 + $0x78] sm:$0xff]
    %v1725 = vld [vmem:[%s7 + $0x80] sm:$0xf]
    %v1726 = vld [vmem:[%s8] sm:$0x1]
    %v1728 = vlaneseq
    %v1729 = vshrl.u32 %v1728, 7
    %v1730 = vsub.s32 0, %v1729
    %v1731 = vrot.slane %v1726, %v1730
    %v1734 = vrot.slane %v1706, 6
    %v1735 = vrot.slane %v1708, 6
    %vm1737 = vcmask 31744
    %v1738 = vsel %vm1737, %v1735, 0
    %vm1740 = vcmask 1043456
    %v1742 = vsel %vm1740, %v1725, 0
    %1744 = vmatprep.subr.mxu0 0.0
    %1745 = vmatpush1.msra.mxu0 %v1724
    %1746 = vmatprep.subr.mxu0 0.0
    %1747 = vmatpush1.msra.mxu0 %v1723
    %1748 = vmatprep.subr.mxu0 0.0
    %1749 = vmatpush1.msra.mxu0 %v1722
    %1750 = vmatprep.subr.mxu0 0.0
    %1751 = vmatpush1.msra.mxu0 %v1721
    %1752 = vmatprep.subr.mxu0 0.0
    %1753 = vmatpush1.msra.mxu0 %v1720
    %1754 = vmatprep.subr.mxu0 0.0
    %1755 = vmatpush1.msra.mxu0 %v1719
    %1756 = vmatprep.subr.mxu0 0.0
    %1757 = vmatpush1.msra.mxu0 %v1718
    %1758 = vmatprep.subr.mxu0 0.0
    %1759 = vmatpush1.msra.mxu0 %v1717
    %1760 = vmatprep.subr.mxu0 0.0
    %1761 = vmatpush1.msra.mxu0 %v1716
    %1762 = vmatprep.subr.mxu0 0.0
    %1763 = vmatpush1.msra.mxu0 %v1715
    %1764 = vmatprep.subr.mxu0 0.0
    %1765 = vmatpush1.msra.mxu0 %v1714
    %1766 = vmatprep.subr.mxu0 0.0
    %1767 = vmatpush1.msra.mxu0 %v1713
    %1768 = vmatprep.subr.mxu0 0.0
    %1769 = vmatpush1.msra.mxu0 %v1712
    %1770 = vmatprep.subr.mxu0 0.0
    %1771 = vmatpush1.msra.mxu0 %v1711
    %1772 = vmatprep.subr.mxu0 0.0
    %1773 = vmatpush1.msra.mxu0 %v1710
    %1774 = vmatprep.subr.mxu0 0.0
    %1775 = vmatpush1.msra.mxu0 %v1709
    %1776 = vmatprep.subr.mxu0 0.0
    %1777 = vmatpush2.msra.mxu0 0.0
    %1778 = vmatprep.subr.mxu0 0.0
    %1779 = vmatpush2.msra.mxu0 0.0
    %1780 = vmatprep.subr.mxu0 0.0
    %1781 = vmatpush2.msra.mxu0 0.0
    %1782 = vmatprep.subr.mxu0 0.0
    %1783 = vmatpush2.msra.mxu0 0.0
    %1784 = vmatprep.subr.mxu0 0.0
    %1785 = vmatpush2.msra.mxu0 0.0
    %1786 = vmatprep.subr.mxu0 0.0
    %1787 = vmatpush2.msra.mxu0 0.0
    %1788 = vmatprep.subr.mxu0 0.0
    %1789 = vmatpush2.msra.mxu0 0.0
    %1790 = vmatprep.subr.mxu0 0.0
    %1791 = vmatpush2.msra.mxu0 0.0
    %1792 = vmatprep.subr.mxu0 0.0
    %1793 = vmatpush2.msra.mxu0 0.0
    %1794 = vmatprep.subr.mxu0 0.0
    %1795 = vmatpush2.msra.mxu0 0.0
    %1796 = vmatprep.subr.mxu0 0.0
    %1797 = vmatpush2.msra.mxu0 0.0
    %1798 = vmatprep.subr.mxu0 0.0
    %1799 = vmatpush2.msra.mxu0 0.0
    %1800 = vmatprep.subr.mxu0 0.0
    %1801 = vmatpush2.msra.mxu0 0.0
    %1802 = vmatprep.subr.mxu0 0.0
    %1803 = vmatpush2.msra.mxu0 0.0
    %1804 = vmatprep.subr.mxu0 0.0
    %1805 = vmatpush2.msra.mxu0 0.0
    %1806 = vmatprep.subr.mxu0 0.0
    %1807 = vmatpush2.msra.mxu0 %v1742
    %1808 = vmatprep.mubr.f32.mxu0 %v1738
    %1809 = vmatmul.mubr.f32.gmra.mxu0 %v1734
    %v1810 = vpop.f32.mrf.mxu0
    %v1811 = vadd.f32 %v1731, %v1810
    %v1812 = vpop.f32.mrf.mxu0
    %1813 = vdwg.mxu0
    %v1814 = vld [vmem:[%s9] sm:$0xff]
    %v1815 = vld [vmem:[%s9 + $0x8] sm:$0xff]
    %v1816 = vld [vmem:[%s9 + $0x10] sm:$0xff]
    %v1817 = vld [vmem:[%s9 + $0x18] sm:$0xff]
    %v1818 = vld [vmem:[%s9 + $0x20] sm:$0xff]
    %v1819 = vld [vmem:[%s9 + $0x28] sm:$0xff]
    %v1820 = vld [vmem:[%s9 + $0x30] sm:$0xff]
    %v1821 = vld [vmem:[%s9 + $0x38] sm:$0xff]
    %v1822 = vld [vmem:[%s9 + $0x40] sm:$0xff]
    %v1823 = vld [vmem:[%s9 + $0x48] sm:$0xff]
    %v1824 = vld [vmem:[%s9 + $0x50] sm:$0xff]
    %v1825 = vld [vmem:[%s9 + $0x58] sm:$0xff]
    %v1826 = vld [vmem:[%s9 + $0x60] sm:$0xff]
    %v1827 = vld [vmem:[%s9 + $0x68] sm:$0xff]
    %v1828 = vld [vmem:[%s9 + $0x70] sm:$0xff]
    %v1829 = vld [vmem:[%s9 + $0x78] sm:$0xff]
    %v1830 = vld [vmem:[%s9 + $0x80] sm:$0xf]
    %v1831 = vld [vmem:[%s10] sm:$0x1]
    %v1833 = vlaneseq
    %v1834 = vshrl.u32 %v1833, 7
    %v1835 = vsub.s32 0, %v1834
    %v1836 = vrot.slane %v1831, %v1835
    %v1839 = vsel %vm1740, %v1830, 0
    %1841 = vmatprep.subr.mxu0 0.0
    %1842 = vmatpush1.msra.mxu0 %v1829
    %1843 = vmatprep.subr.mxu0 0.0
    %1844 = vmatpush1.msra.mxu0 %v1828
    %1845 = vmatprep.subr.mxu0 0.0
    %1846 = vmatpush1.msra.mxu0 %v1827
    %1847 = vmatprep.subr.mxu0 0.0
    %1848 = vmatpush1.msra.mxu0 %v1826
    %1849 = vmatprep.subr.mxu0 0.0
    %1850 = vmatpush1.msra.mxu0 %v1825
    %1851 = vmatprep.subr.mxu0 0.0
    %1852 = vmatpush1.msra.mxu0 %v1824
    %1853 = vmatprep.subr.mxu0 0.0
    %1854 = vmatpush1.msra.mxu0 %v1823
    %1855 = vmatprep.subr.mxu0 0.0
    %1856 = vmatpush1.msra.mxu0 %v1822
    %1857 = vmatprep.subr.mxu0 0.0
    %1858 = vmatpush1.msra.mxu0 %v1821
    %1859 = vmatprep.subr.mxu0 0.0
    %1860 = vmatpush1.msra.mxu0 %v1820
    %1861 = vmatprep.subr.mxu0 0.0
    %1862 = vmatpush1.msra.mxu0 %v1819
    %1863 = vmatprep.subr.mxu0 0.0
    %1864 = vmatpush1.msra.mxu0 %v1818
    %1865 = vmatprep.subr.mxu0 0.0
    %1866 = vmatpush1.msra.mxu0 %v1817
    %1867 = vmatprep.subr.mxu0 0.0
    %1868 = vmatpush1.msra.mxu0 %v1816
    %1869 = vmatprep.subr.mxu0 0.0
    %1870 = vmatpush1.msra.mxu0 %v1815
    %1871 = vmatprep.subr.mxu0 0.0
    %1872 = vmatpush1.msra.mxu0 %v1814
    %1873 = vmatprep.subr.mxu0 0.0
    %1874 = vmatpush2.msra.mxu0 0.0
    %1875 = vmatprep.subr.mxu0 0.0
    %1876 = vmatpush2.msra.mxu0 0.0
    %1877 = vmatprep.subr.mxu0 0.0
    %1878 = vmatpush2.msra.mxu0 0.0
    %1879 = vmatprep.subr.mxu0 0.0
    %1880 = vmatpush2.msra.mxu0 0.0
    %1881 = vmatprep.subr.mxu0 0.0
    %1882 = vmatpush2.msra.mxu0 0.0
    %1883 = vmatprep.subr.mxu0 0.0
    %1884 = vmatpush2.msra.mxu0 0.0
    %1885 = vmatprep.subr.mxu0 0.0
    %1886 = vmatpush2.msra.mxu0 0.0
    %1887 = vmatprep.subr.mxu0 0.0
    %1888 = vmatpush2.msra.mxu0 0.0
    %1889 = vmatprep.subr.mxu0 0.0
    %1890 = vmatpush2.msra.mxu0 0.0
    %1891 = vmatprep.subr.mxu0 0.0
    %1892 = vmatpush2.msra.mxu0 0.0
    %1893 = vmatprep.subr.mxu0 0.0
    %1894 = vmatpush2.msra.mxu0 0.0
    %1895 = vmatprep.subr.mxu0 0.0
    %1896 = vmatpush2.msra.mxu0 0.0
    %1897 = vmatprep.subr.mxu0 0.0
    %1898 = vmatpush2.msra.mxu0 0.0
    %1899 = vmatprep.subr.mxu0 0.0
    %1900 = vmatpush2.msra.mxu0 0.0
    %1901 = vmatprep.subr.mxu0 0.0
    %1902 = vmatpush2.msra.mxu0 0.0
    %1903 = vmatprep.subr.mxu0 0.0
    %1904 = vmatpush2.msra.mxu0 %v1839
    %1905 = vmatprep.mubr.f32.mxu0 %v1738
    %1906 = vmatmul.mubr.f32.gmra.mxu0 %v1734
    %v1907 = vpop.f32.mrf.mxu0
    %v1908 = vadd.f32 %v1836, %v1907
    %v1909 = vpop.f32.mrf.mxu0
    %1910 = vdwg.mxu0
    %vm1911 = vcmask 254976
    %1912 = vst.msk [vmem:[#allocation2] sm:$0x3] %vm1911, %v1811
    %1913 = vst.msk [vmem:[#allocation4] sm:$0x3] %vm1911, %v1908
    %v1914 = vld [vmem:[%s2] sm:$0x3]
    %v1915 = vmul.f32 %v1908, 0.5
    %v1916 = vmul.f32 %v1915, 1.442695
    %v1917 = vpow.pop %v1916
    %v1918 = vmul.f32 %v1914, %v1917
    %v1919 = vadd.f32 %v1811, %v1918
    %1920 = vrot.lane.b32.xlu0 %v192, 32
    %v1921 = vpop.permute.xlu0 %1920
    %vm1923 = vcmask 261120
    %v1924 = vsel %vm1923, %v1919, %v1921
    %v1925 = vld [vmem:[%s12] sm:$0xff]
    %v1926 = vld [vmem:[%s12 + $0x8] sm:$0xff]
    %v1927 = vld [vmem:[%s12 + $0x10] sm:$0xff]
    %v1928 = vld [vmem:[%s12 + $0x18] sm:$0xff]
    %v1929 = vld [vmem:[%s12 + $0x20] sm:$0xff]
    %v1930 = vld [vmem:[%s12 + $0x28] sm:$0xff]
    %v1931 = vld [vmem:[%s12 + $0x30] sm:$0xff]
    %v1932 = vld [vmem:[%s12 + $0x38] sm:$0xff]
    %v1933 = vld [vmem:[%s12 + $0x40] sm:$0xff]
    %v1934 = vld [vmem:[%s12 + $0x48] sm:$0xff]
    %v1935 = vld [vmem:[%s12 + $0x50] sm:$0xff]
    %v1936 = vld [vmem:[%s12 + $0x58] sm:$0xff]
    %v1937 = vld [vmem:[%s12 + $0x60] sm:$0xff]
    %v1938 = vld [vmem:[%s12 + $0x68] sm:$0xff]
    %v1939 = vld [vmem:[%s12 + $0x70] sm:$0xff]
    %v1940 = vld [vmem:[%s12 + $0x78] sm:$0xff]
    %v1941 = vld [vmem:[%s12 + $0x80] sm:$0xf]
    %v1942 = vld [vmem:[%s12 + $0x88] sm:$0xf]
    %v1943 = vld [vmem:[%s12 + $0x90] sm:$0xf]
    %v1944 = vld [vmem:[%s12 + $0x98] sm:$0xf]
    %v1945 = vld [vmem:[%s13] sm:$0xf]
    %v1947 = vlaneseq
    %v1948 = vshrl.u32 %v1947, 7
    %v1949 = vsub.s32 0, %v1948
    %v1950 = vrot.slane %v1945, %v1949
    %v1951 = vlaneseq
    %v1952 = vshrl.u32 %v1951, 7
    %v1953 = vsub.s32 1, %v1952
    %v1954 = vrot.slane %v1945, %v1953
    %v1955 = vlaneseq
    %v1956 = vshrl.u32 %v1955, 7
    %v1957 = vsub.s32 2, %v1956
    %v1958 = vrot.slane %v1945, %v1957
    %v1959 = vlaneseq
    %v1960 = vshrl.u32 %v1959, 7
    %v1961 = vsub.s32 3, %v1960
    %v1962 = vrot.slane %v1945, %v1961
    %vm1967 = vcmask 293888
    %v1969 = vsel %vm1967, %v1924, 0
    %v1972 = vsel %vm1740, %v1941, 0
    %v1975 = vsel %vm1740, %v1942, 0
    %v1978 = vsel %vm1740, %v1943, 0
    %v1981 = vsel %vm1740, %v1944, 0
    %1983 = vmatprep.subr.mxu0 0.0
    %1984 = vmatpush1.msra.mxu0 0.0
    %1985 = vmatprep.subr.mxu0 0.0
    %1986 = vmatpush1.msra.mxu0 0.0
    %1987 = vmatprep.subr.mxu0 0.0
    %1988 = vmatpush1.msra.mxu0 0.0
    %1989 = vmatprep.subr.mxu0 0.0
    %1990 = vmatpush1.msra.mxu0 0.0
    %1991 = vmatprep.subr.mxu0 0.0
    %1992 = vmatpush1.msra.mxu0 0.0
    %1993 = vmatprep.subr.mxu0 0.0
    %1994 = vmatpush1.msra.mxu0 0.0
    %1995 = vmatprep.subr.mxu0 0.0
    %1996 = vmatpush1.msra.mxu0 0.0
    %1997 = vmatprep.subr.mxu0 0.0
    %1998 = vmatpush1.msra.mxu0 0.0
    %1999 = vmatprep.subr.mxu0 0.0
    %2000 = vmatpush1.msra.mxu0 0.0
    %2001 = vmatprep.subr.mxu0 0.0
    %2002 = vmatpush1.msra.mxu0 0.0
    %2003 = vmatprep.subr.mxu0 0.0
    %2004 = vmatpush1.msra.mxu0 0.0
    %2005 = vmatprep.subr.mxu0 %v1975
    %2006 = vmatpush1.msra.mxu0 %v1972
    %2007 = vmatprep.subr.mxu0 %v1938
    %2008 = vmatpush1.msra.mxu0 %v1937
    %2009 = vmatprep.subr.mxu0 %v1934
    %2010 = vmatpush1.msra.mxu0 %v1933
    %2011 = vmatprep.subr.mxu0 %v1930
    %2012 = vmatpush1.msra.mxu0 %v1929
    %2013 = vmatprep.subr.mxu0 %v1926
    %2014 = vmatpush1.msra.mxu0 %v1925
    %2015 = vmatprep.subr.mxu0 0.0
    %2016 = vmatpush2.msra.mxu0 0.0
    %2017 = vmatprep.subr.mxu0 0.0
    %2018 = vmatpush2.msra.mxu0 0.0
    %2019 = vmatprep.subr.mxu0 0.0
    %2020 = vmatpush2.msra.mxu0 0.0
    %2021 = vmatprep.subr.mxu0 0.0
    %2022 = vmatpush2.msra.mxu0 0.0
    %2023 = vmatprep.subr.mxu0 0.0
    %2024 = vmatpush2.msra.mxu0 0.0
    %2025 = vmatprep.subr.mxu0 0.0
    %2026 = vmatpush2.msra.mxu0 0.0
    %2027 = vmatprep.subr.mxu0 0.0
    %2028 = vmatpush2.msra.mxu0 0.0
    %2029 = vmatprep.subr.mxu0 0.0
    %2030 = vmatpush2.msra.mxu0 0.0
    %2031 = vmatprep.subr.mxu0 0.0
    %2032 = vmatpush2.msra.mxu0 0.0
    %2033 = vmatprep.subr.mxu0 0.0
    %2034 = vmatpush2.msra.mxu0 0.0
    %2035 = vmatprep.subr.mxu0 0.0
    %2036 = vmatpush2.msra.mxu0 0.0
    %2037 = vmatprep.subr.mxu0 0.0
    %2038 = vmatpush2.msra.mxu0 0.0
    %2039 = vmatprep.subr.mxu0 0.0
    %2040 = vmatpush2.msra.mxu0 0.0
    %2041 = vmatprep.subr.mxu0 0.0
    %2042 = vmatpush2.msra.mxu0 0.0
    %2043 = vmatprep.subr.mxu0 0.0
    %2044 = vmatpush2.msra.mxu0 0.0
    %2045 = vmatprep.subr.mxu0 0.0
    %2046 = vmatpush2.msra.mxu0 0.0
    %2047 = vmatprep.mubr.f32.mxu0 0.0
    %2048 = vmatmul.mubr.f32.gmra.mxu0 %v1969
    %v2049 = vpop.f32.mrf.mxu0
    %v2050 = vadd.f32 %v1950, %v2049
    %v2051 = vpop.f32.mrf.mxu0
    %v2052 = vadd.f32 %v1954, %v2051
    %2053 = vdwg.mxu0
    %2054 = vmatprep.subr.mxu0 0.0
    %2055 = vmatpush1.msra.mxu0 0.0
    %2056 = vmatprep.subr.mxu0 0.0
    %2057 = vmatpush1.msra.mxu0 0.0
    %2058 = vmatprep.subr.mxu0 0.0
    %2059 = vmatpush1.msra.mxu0 0.0
    %2060 = vmatprep.subr.mxu0 0.0
    %2061 = vmatpush1.msra.mxu0 0.0
    %2062 = vmatprep.subr.mxu0 0.0
    %2063 = vmatpush1.msra.mxu0 0.0
    %2064 = vmatprep.subr.mxu0 0.0
    %2065 = vmatpush1.msra.mxu0 0.0
    %2066 = vmatprep.subr.mxu0 0.0
    %2067 = vmatpush1.msra.mxu0 0.0
    %2068 = vmatprep.subr.mxu0 0.0
    %2069 = vmatpush1.msra.mxu0 0.0
    %2070 = vmatprep.subr.mxu0 0.0
    %2071 = vmatpush1.msra.mxu0 0.0
    %2072 = vmatprep.subr.mxu0 0.0
    %2073 = vmatpush1.msra.mxu0 0.0
    %2074 = vmatprep.subr.mxu0 0.0
    %2075 = vmatpush1.msra.mxu0 0.0
    %2076 = vmatprep.subr.mxu0 %v1981
    %2077 = vmatpush1.msra.mxu0 %v1978
    %2078 = vmatprep.subr.mxu0 %v1940
    %2079 = vmatpush1.msra.mxu0 %v1939
    %2080 = vmatprep.subr.mxu0 %v1936
    %2081 = vmatpush1.msra.mxu0 %v1935
    %2082 = vmatprep.subr.mxu0 %v1932
    %2083 = vmatpush1.msra.mxu0 %v1931
    %2084 = vmatprep.subr.mxu0 %v1928
    %2085 = vmatpush1.msra.mxu0 %v1927
    %2086 = vmatprep.subr.mxu0 0.0
    %2087 = vmatpush2.msra.mxu0 0.0
    %2088 = vmatprep.subr.mxu0 0.0
    %2089 = vmatpush2.msra.mxu0 0.0
    %2090 = vmatprep.subr.mxu0 0.0
    %2091 = vmatpush2.msra.mxu0 0.0
    %2092 = vmatprep.subr.mxu0 0.0
    %2093 = vmatpush2.msra.mxu0 0.0
    %2094 = vmatprep.subr.mxu0 0.0
    %2095 = vmatpush2.msra.mxu0 0.0
    %2096 = vmatprep.subr.mxu0 0.0
    %2097 = vmatpush2.msra.mxu0 0.0
    %2098 = vmatprep.subr.mxu0 0.0
    %2099 = vmatpush2.msra.mxu0 0.0
    %2100 = vmatprep.subr.mxu0 0.0
    %2101 = vmatpush2.msra.mxu0 0.0
    %2102 = vmatprep.subr.mxu0 0.0
    %2103 = vmatpush2.msra.mxu0 0.0
    %2104 = vmatprep.subr.mxu0 0.0
    %2105 = vmatpush2.msra.mxu0 0.0
    %2106 = vmatprep.subr.mxu0 0.0
    %2107 = vmatpush2.msra.mxu0 0.0
    %2108 = vmatprep.subr.mxu0 0.0
    %2109 = vmatpush2.msra.mxu0 0.0
    %2110 = vmatprep.subr.mxu0 0.0
    %2111 = vmatpush2.msra.mxu0 0.0
    %2112 = vmatprep.subr.mxu0 0.0
    %2113 = vmatpush2.msra.mxu0 0.0
    %2114 = vmatprep.subr.mxu0 0.0
    %2115 = vmatpush2.msra.mxu0 0.0
    %2116 = vmatprep.subr.mxu0 0.0
    %2117 = vmatpush2.msra.mxu0 0.0
    %2118 = vmatprep.mubr.f32.mxu0 0.0
    %2119 = vmatmul.mubr.f32.gmra.mxu0 %v1969
    %v2120 = vpop.f32.mrf.mxu0
    %v2121 = vadd.f32 %v1958, %v2120
    %v2122 = vpop.f32.mrf.mxu0
    %v2123 = vadd.f32 %v1962, %v2122
    %2124 = vdwg.mxu0
    %v2125 = vld [vmem:[%s15] sm:$0xf]
    %v2127 = vlaneseq
    %v2128 = vshrl.u32 %v2127, 7
    %v2129 = vsub.s32 0, %v2128
    %v2130 = vrot.slane %v2125, %v2129
    %v2131 = vlaneseq
    %v2132 = vshrl.u32 %v2131, 7
    %v2133 = vsub.s32 1, %v2132
    %v2134 = vrot.slane %v2125, %v2133
    %v2135 = vlaneseq
    %v2136 = vshrl.u32 %v2135, 7
    %v2137 = vsub.s32 2, %v2136
    %v2138 = vrot.slane %v2125, %v2137
    %v2139 = vlaneseq
    %v2140 = vshrl.u32 %v2139, 7
    %v2141 = vsub.s32 3, %v2140
    %v2142 = vrot.slane %v2125, %v2141
    %v2147 = vadd.f32 %v2050, %v2130
    %v2148 = vadd.f32 %v2052, %v2134
    %v2149 = vadd.f32 %v2121, %v2138
    %v2150 = vadd.f32 %v2123, %v2142
    %v2151 = vld [vmem:[%s3] sm:$0x3]
    %v2152 = vld [vmem:[%s11] sm:$0xff]
    %v2154 = vcombine.high %v2152, %v2152
    %v2156 = vunpack.c.l.s4 1983009808
    %v2157 = vunpack.c.0.s8 %v2156
    %v2158 = vlaneseq
    %v2159 = vshrl.u32 %v2158, 7
    %v2160 = vsub.s32 %v2157, %v2159
    %v2161 = vrot.slane %v2152, %v2160
    %v2163 = vunpack.c.l.s4 1983009808
    %v2164 = vunpack.c.0.s8 %v2163
    %v2165 = vlaneseq
    %v2166 = vshrl.u32 %v2165, 7
    %v2167 = vsub.s32 %v2164, %v2166
    %v2168 = vrot.slane %v2154, %v2167
    %v2169 = vcombine.high %v2161, %v2161
    %v2170 = vcombine.high %v2168, %v2168
    %vm2171 = vcmask 15360
    %v2173 = vsel %vm2171, %v2151, 0
    %vm2175 = vcmask 1041408
    %v2176 = vsel %vm2175, %v2161, 0
    %v2178 = vsel %vm2175, %v2169, 0
    %v2180 = vsel %vm2175, %v2168, 0
    %v2182 = vsel %vm2175, %v2170, 0
    %2184 = vmatprep.subr.mxu0 0.0
    %2185 = vmatpush1.msra.mxu0 0.0
    %2186 = vmatprep.subr.mxu0 0.0
    %2187 = vmatpush1.msra.mxu0 0.0
    %2188 = vmatprep.subr.mxu0 0.0
    %2189 = vmatpush1.msra.mxu0 0.0
    %2190 = vmatprep.subr.mxu0 0.0
    %2191 = vmatpush1.msra.mxu0 0.0
    %2192 = vmatprep.subr.mxu0 0.0
    %2193 = vmatpush1.msra.mxu0 0.0
    %2194 = vmatprep.subr.mxu0 0.0
    %2195 = vmatpush1.msra.mxu0 0.0
    %2196 = vmatprep.subr.mxu0 0.0
    %2197 = vmatpush1.msra.mxu0 0.0
    %2198 = vmatprep.subr.mxu0 0.0
    %2199 = vmatpush1.msra.mxu0 0.0
    %2200 = vmatprep.subr.mxu0 0.0
    %2201 = vmatpush1.msra.mxu0 0.0
    %2202 = vmatprep.subr.mxu0 0.0
    %2203 = vmatpush1.msra.mxu0 0.0
    %2204 = vmatprep.subr.mxu0 0.0
    %2205 = vmatpush1.msra.mxu0 0.0
    %2206 = vmatprep.subr.mxu0 0.0
    %2207 = vmatpush1.msra.mxu0 0.0
    %2208 = vmatprep.subr.mxu0 0.0
    %2209 = vmatpush1.msra.mxu0 0.0
    %2210 = vmatprep.subr.mxu0 0.0
    %2211 = vmatpush1.msra.mxu0 0.0
    %2212 = vmatprep.subr.mxu0 0.0
    %2213 = vmatpush1.msra.mxu0 0.0
    %2214 = vmatprep.subr.mxu0 %v2178
    %2215 = vmatpush1.msra.mxu0 %v2176
    %2216 = vmatprep.subr.mxu0 0.0
    %2217 = vmatpush2.msra.mxu0 0.0
    %2218 = vmatprep.subr.mxu0 0.0
    %2219 = vmatpush2.msra.mxu0 0.0
    %2220 = vmatprep.subr.mxu0 0.0
    %2221 = vmatpush2.msra.mxu0 0.0
    %2222 = vmatprep.subr.mxu0 0.0
    %2223 = vmatpush2.msra.mxu0 0.0
    %2224 = vmatprep.subr.mxu0 0.0
    %2225 = vmatpush2.msra.mxu0 0.0
    %2226 = vmatprep.subr.mxu0 0.0
    %2227 = vmatpush2.msra.mxu0 0.0
    %2228 = vmatprep.subr.mxu0 0.0
    %2229 = vmatpush2.msra.mxu0 0.0
    %2230 = vmatprep.subr.mxu0 0.0
    %2231 = vmatpush2.msra.mxu0 0.0
    %2232 = vmatprep.subr.mxu0 0.0
    %2233 = vmatpush2.msra.mxu0 0.0
    %2234 = vmatprep.subr.mxu0 0.0
    %2235 = vmatpush2.msra.mxu0 0.0
    %2236 = vmatprep.subr.mxu0 0.0
    %2237 = vmatpush2.msra.mxu0 0.0
    %2238 = vmatprep.subr.mxu0 0.0
    %2239 = vmatpush2.msra.mxu0 0.0
    %2240 = vmatprep.subr.mxu0 0.0
    %2241 = vmatpush2.msra.mxu0 0.0
    %2242 = vmatprep.subr.mxu0 0.0
    %2243 = vmatpush2.msra.mxu0 0.0
    %2244 = vmatprep.subr.mxu0 0.0
    %2245 = vmatpush2.msra.mxu0 0.0
    %2246 = vmatprep.subr.mxu0 0.0
    %2247 = vmatpush2.msra.mxu0 0.0
    %2248 = vmatprep.mubr.f32.mxu0 0.0
    %2249 = vmatmul.mubr.f32.gmra.mxu0 %v2173
    %v2250 = vpop.f32.mrf.mxu0
    %v2251 = vadd.f32 %v2050, %v2250
    %v2252 = vpop.f32.mrf.mxu0
    %2253 = vdwg.mxu0
    %2254 = vmatprep.subr.mxu0 0.0
    %2255 = vmatpush1.msra.mxu0 0.0
    %2256 = vmatprep.subr.mxu0 0.0
    %2257 = vmatpush1.msra.mxu0 0.0
    %2258 = vmatprep.subr.mxu0 0.0
    %2259 = vmatpush1.msra.mxu0 0.0
    %2260 = vmatprep.subr.mxu0 0.0
    %2261 = vmatpush1.msra.mxu0 0.0
    %2262 = vmatprep.subr.mxu0 0.0
    %2263 = vmatpush1.msra.mxu0 0.0
    %2264 = vmatprep.subr.mxu0 0.0
    %2265 = vmatpush1.msra.mxu0 0.0
    %2266 = vmatprep.subr.mxu0 0.0
    %2267 = vmatpush1.msra.mxu0 0.0
    %2268 = vmatprep.subr.mxu0 0.0
    %2269 = vmatpush1.msra.mxu0 0.0
    %2270 = vmatprep.subr.mxu0 0.0
    %2271 = vmatpush1.msra.mxu0 0.0
    %2272 = vmatprep.subr.mxu0 0.0
    %2273 = vmatpush1.msra.mxu0 0.0
    %2274 = vmatprep.subr.mxu0 0.0
    %2275 = vmatpush1.msra.mxu0 0.0
    %2276 = vmatprep.subr.mxu0 0.0
    %2277 = vmatpush1.msra.mxu0 0.0
    %2278 = vmatprep.subr.mxu0 0.0
    %2279 = vmatpush1.msra.mxu0 0.0
    %2280 = vmatprep.subr.mxu0 0.0
    %2281 = vmatpush1.msra.mxu0 0.0
    %2282 = vmatprep.subr.mxu0 0.0
    %2283 = vmatpush1.msra.mxu0 0.0
    %2284 = vmatprep.subr.mxu0 %v2182
    %2285 = vmatpush1.msra.mxu0 %v2180
    %2286 = vmatprep.subr.mxu0 0.0
    %2287 = vmatpush2.msra.mxu0 0.0
    %2288 = vmatprep.subr.mxu0 0.0
    %2289 = vmatpush2.msra.mxu0 0.0
    %2290 = vmatprep.subr.mxu0 0.0
    %2291 = vmatpush2.msra.mxu0 0.0
    %2292 = vmatprep.subr.mxu0 0.0
    %2293 = vmatpush2.msra.mxu0 0.0
    %2294 = vmatprep.subr.mxu0 0.0
    %2295 = vmatpush2.msra.mxu0 0.0
    %2296 = vmatprep.subr.mxu0 0.0
    %2297 = vmatpush2.msra.mxu0 0.0
    %2298 = vmatprep.subr.mxu0 0.0
    %2299 = vmatpush2.msra.mxu0 0.0
    %2300 = vmatprep.subr.mxu0 0.0
    %2301 = vmatpush2.msra.mxu0 0.0
    %2302 = vmatprep.subr.mxu0 0.0
    %2303 = vmatpush2.msra.mxu0 0.0
    %2304 = vmatprep.subr.mxu0 0.0
    %2305 = vmatpush2.msra.mxu0 0.0
    %2306 = vmatprep.subr.mxu0 0.0
    %2307 = vmatpush2.msra.mxu0 0.0
    %2308 = vmatprep.subr.mxu0 0.0
    %2309 = vmatpush2.msra.mxu0 0.0
    %2310 = vmatprep.subr.mxu0 0.0
    %2311 = vmatpush2.msra.mxu0 0.0
    %2312 = vmatprep.subr.mxu0 0.0
    %2313 = vmatpush2.msra.mxu0 0.0
    %2314 = vmatprep.subr.mxu0 0.0
    %2315 = vmatpush2.msra.mxu0 0.0
    %2316 = vmatprep.subr.mxu0 0.0
    %2317 = vmatpush2.msra.mxu0 0.0
    %2318 = vmatprep.mubr.f32.mxu0 0.0
    %2319 = vmatmul.mubr.f32.gmra.mxu0 %v2173
    %v2320 = vpop.f32.mrf.mxu0
    %v2321 = vadd.f32 %v2121, %v2320
    %v2322 = vpop.f32.mrf.mxu0
    %v2323 = vadd.f32 %v2123, %v2322
    %2324 = vdwg.mxu0
    %v2325 = vxor.u32 %v2251, 2147483648
    %v2326 = vmul.f32 %v2325, 1.442695
    %v2327 = vpow.pop %v2326
    %v2328 = vadd.f32 %v2327, 1.0
    %v2329 = vrcp.pop %v2328
    %v2330 = vmul.f32 1.0, %v2329
    %v2331 = vtanh.pop %v2321
    %v2332 = vxor.u32 %v2323, 2147483648
    %v2333 = vmul.f32 %v2332, 1.442695
    %v2334 = vpow.pop %v2333
    %v2335 = vadd.f32 %v2334, 1.0
    %v2336 = vrcp.pop %v2335
    %v2337 = vmul.f32 1.0, %v2336
    %v2338 = vmul.f32 %v2330, %v2331
    %v2339 = vtanh.pop %v2338
    %v2340 = vmul.f32 %v2337, %v2339
    %2341 = vmatprep.subr.mxu0 %v189
    %2342 = vmatpush1.msra.mxu0 %v188
    %2343 = vmatprep.subr.mxu0 %v185
    %2344 = vmatpush1.msra.mxu0 %v184
    %2345 = vmatprep.subr.mxu0 %v181
    %2346 = vmatpush1.msra.mxu0 %v180
    %2347 = vmatprep.subr.mxu0 %v177
    %2348 = vmatpush1.msra.mxu0 %v176
    %2349 = vmatprep.subr.mxu0 %v173
    %2350 = vmatpush1.msra.mxu0 %v172
    %2351 = vmatprep.subr.mxu0 %v169
    %2352 = vmatpush1.msra.mxu0 %v168
    %2353 = vmatprep.subr.mxu0 %v165
    %2354 = vmatpush1.msra.mxu0 %v164
    %2355 = vmatprep.subr.mxu0 %v161
    %2356 = vmatpush1.msra.mxu0 %v160
    %2357 = vmatprep.subr.mxu0 %v157
    %2358 = vmatpush1.msra.mxu0 %v156
    %2359 = vmatprep.subr.mxu0 %v153
    %2360 = vmatpush1.msra.mxu0 %v152
    %2361 = vmatprep.subr.mxu0 %v149
    %2362 = vmatpush1.msra.mxu0 %v148
    %2363 = vmatprep.subr.mxu0 %v145
    %2364 = vmatpush1.msra.mxu0 %v144
    %2365 = vmatprep.subr.mxu0 %v141
    %2366 = vmatpush1.msra.mxu0 %v140
    %2367 = vmatprep.subr.mxu0 %v137
    %2368 = vmatpush1.msra.mxu0 %v136
    %2369 = vmatprep.subr.mxu0 %v133
    %2370 = vmatpush1.msra.mxu0 %v132
    %2371 = vmatprep.subr.mxu0 %v129
    %2372 = vmatpush1.msra.mxu0 %v128
    %2373 = vmatprep.subr.mxu0 0.0
    %2374 = vmatpush2.msra.mxu0 0.0
    %2375 = vmatprep.subr.mxu0 0.0
    %2376 = vmatpush2.msra.mxu0 0.0
    %2377 = vmatprep.subr.mxu0 0.0
    %2378 = vmatpush2.msra.mxu0 0.0
    %2379 = vmatprep.subr.mxu0 0.0
    %2380 = vmatpush2.msra.mxu0 0.0
    %2381 = vmatprep.subr.mxu0 0.0
    %2382 = vmatpush2.msra.mxu0 0.0
    %2383 = vmatprep.subr.mxu0 0.0
    %2384 = vmatpush2.msra.mxu0 0.0
    %2385 = vmatprep.subr.mxu0 0.0
    %2386 = vmatpush2.msra.mxu0 0.0
    %2387 = vmatprep.subr.mxu0 0.0
    %2388 = vmatpush2.msra.mxu0 0.0
    %2389 = vmatprep.subr.mxu0 0.0
    %2390 = vmatpush2.msra.mxu0 0.0
    %2391 = vmatprep.subr.mxu0 0.0
    %2392 = vmatpush2.msra.mxu0 0.0
    %2393 = vmatprep.subr.mxu0 0.0
    %2394 = vmatpush2.msra.mxu0 0.0
    %2395 = vmatprep.subr.mxu0 0.0
    %2396 = vmatpush2.msra.mxu0 0.0
    %2397 = vmatprep.subr.mxu0 0.0
    %2398 = vmatpush2.msra.mxu0 0.0
    %2399 = vmatprep.subr.mxu0 0.0
    %2400 = vmatpush2.msra.mxu0 0.0
    %2401 = vmatprep.subr.mxu0 0.0
    %2402 = vmatpush2.msra.mxu0 0.0
    %2403 = vmatprep.subr.mxu0 0.0
    %2404 = vmatpush2.msra.mxu0 0.0
    %2405 = vmatprep.mubr.f32.mxu0 0.0
    %2406 = vmatmul.mubr.f32.gmra.mxu0 %v2340
    %v2407 = vpop.f32.mrf.mxu0
    %v2408 = vadd.f32 %v2147, %v2407
    %v2409 = vpop.f32.mrf.mxu0
    %v2410 = vadd.f32 %v2148, %v2409
    %2411 = vdwg.mxu0
    %2412 = vmatprep.subr.mxu0 %v191
    %2413 = vmatpush1.msra.mxu0 %v190
    %2414 = vmatprep.subr.mxu0 %v187
    %2415 = vmatpush1.msra.mxu0 %v186
    %2416 = vmatprep.subr.mxu0 %v183
    %2417 = vmatpush1.msra.mxu0 %v182
    %2418 = vmatprep.subr.mxu0 %v179
    %2419 = vmatpush1.msra.mxu0 %v178
    %2420 = vmatprep.subr.mxu0 %v175
    %2421 = vmatpush1.msra.mxu0 %v174
    %2422 = vmatprep.subr.mxu0 %v171
    %2423 = vmatpush1.msra.mxu0 %v170
    %2424 = vmatprep.subr.mxu0 %v167
    %2425 = vmatpush1.msra.mxu0 %v166
    %2426 = vmatprep.subr.mxu0 %v163
    %2427 = vmatpush1.msra.mxu0 %v162
    %2428 = vmatprep.subr.mxu0 %v159
    %2429 = vmatpush1.msra.mxu0 %v158
    %2430 = vmatprep.subr.mxu0 %v155
    %2431 = vmatpush1.msra.mxu0 %v154
    %2432 = vmatprep.subr.mxu0 %v151
    %2433 = vmatpush1.msra.mxu0 %v150
    %2434 = vmatprep.subr.mxu0 %v147
    %2435 = vmatpush1.msra.mxu0 %v146
    %2436 = vmatprep.subr.mxu0 %v143
    %2437 = vmatpush1.msra.mxu0 %v142
    %2438 = vmatprep.subr.mxu0 %v139
    %2439 = vmatpush1.msra.mxu0 %v138
    %2440 = vmatprep.subr.mxu0 %v135
    %2441 = vmatpush1.msra.mxu0 %v134
    %2442 = vmatprep.subr.mxu0 %v131
    %2443 = vmatpush1.msra.mxu0 %v130
    %2444 = vmatprep.subr.mxu0 0.0
    %2445 = vmatpush2.msra.mxu0 0.0
    %2446 = vmatprep.subr.mxu0 0.0
    %2447 = vmatpush2.msra.mxu0 0.0
    %2448 = vmatprep.subr.mxu0 0.0
    %2449 = vmatpush2.msra.mxu0 0.0
    %2450 = vmatprep.subr.mxu0 0.0
    %2451 = vmatpush2.msra.mxu0 0.0
    %2452 = vmatprep.subr.mxu0 0.0
    %2453 = vmatpush2.msra.mxu0 0.0
    %2454 = vmatprep.subr.mxu0 0.0
    %2455 = vmatpush2.msra.mxu0 0.0
    %2456 = vmatprep.subr.mxu0 0.0
    %2457 = vmatpush2.msra.mxu0 0.0
    %2458 = vmatprep.subr.mxu0 0.0
    %2459 = vmatpush2.msra.mxu0 0.0
    %2460 = vmatprep.subr.mxu0 0.0
    %2461 = vmatpush2.msra.mxu0 0.0
    %2462 = vmatprep.subr.mxu0 0.0
    %2463 = vmatpush2.msra.mxu0 0.0
    %2464 = vmatprep.subr.mxu0 0.0
    %2465 = vmatpush2.msra.mxu0 0.0
    %2466 = vmatprep.subr.mxu0 0.0
    %2467 = vmatpush2.msra.mxu0 0.0
    %2468 = vmatprep.subr.mxu0 0.0
    %2469 = vmatpush2.msra.mxu0 0.0
    %2470 = vmatprep.subr.mxu0 0.0
    %2471 = vmatpush2.msra.mxu0 0.0
    %2472 = vmatprep.subr.mxu0 0.0
    %2473 = vmatpush2.msra.mxu0 0.0
    %2474 = vmatprep.subr.mxu0 0.0
    %2475 = vmatpush2.msra.mxu0 0.0
    %2476 = vmatprep.mubr.f32.mxu0 0.0
    %2477 = vmatmul.mubr.f32.gmra.mxu0 %v2340
    %v2478 = vpop.f32.mrf.mxu0
    %v2479 = vadd.f32 %v2149, %v2478
    %v2480 = vpop.f32.mrf.mxu0
    %v2481 = vadd.f32 %v2150, %v2480
    %2482 = vdwg.mxu0
    %v2483 = vxor.u32 %v2408, 2147483648
    %v2484 = vmul.f32 %v2483, 1.442695
    %v2485 = vpow.pop %v2484
    %v2486 = vadd.f32 %v2485, 1.0
    %v2487 = vrcp.pop %v2486
    %v2488 = vmul.f32 1.0, %v2487
    %v2489 = vxor.u32 %v2410, 2147483648
    %v2490 = vmul.f32 %v2489, 1.442695
    %v2491 = vpow.pop %v2490
    %v2492 = vadd.f32 %v2491, 1.0
    %v2493 = vrcp.pop %v2492
    %v2494 = vmul.f32 1.0, %v2493
    %v2495 = vtanh.pop %v2479
    %v2496 = vxor.u32 %v2481, 2147483648
    %v2497 = vmul.f32 %v2496, 1.442695
    %v2498 = vpow.pop %v2497
    %v2499 = vadd.f32 %v2498, 1.0
    %v2500 = vrcp.pop %v2499
    %v2501 = vmul.f32 1.0, %v2500
    %v2502 = vmul.f32 %v2494, %v2338
    %v2503 = vmul.f32 %v2488, %v2495
    %v2504 = vadd.f32 %v2502, %v2503
    %v2505 = vtanh.pop %v2504
    %v2506 = vmul.f32 %v2501, %v2505
    %2507 = vmatprep.subr.mxu0 %v189
    %2508 = vmatpush1.msra.mxu0 %v188
    %2509 = vmatprep.subr.mxu0 %v185
    %2510 = vmatpush1.msra.mxu0 %v184
    %2511 = vmatprep.subr.mxu0 %v181
    %2512 = vmatpush1.msra.mxu0 %v180
    %2513 = vmatprep.subr.mxu0 %v177
    %2514 = vmatpush1.msra.mxu0 %v176
    %2515 = vmatprep.subr.mxu0 %v173
    %2516 = vmatpush1.msra.mxu0 %v172
    %2517 = vmatprep.subr.mxu0 %v169
    %2518 = vmatpush1.msra.mxu0 %v168
    %2519 = vmatprep.subr.mxu0 %v165
    %2520 = vmatpush1.msra.mxu0 %v164
    %2521 = vmatprep.subr.mxu0 %v161
    %2522 = vmatpush1.msra.mxu0 %v160
    %2523 = vmatprep.subr.mxu0 %v157
    %2524 = vmatpush1.msra.mxu0 %v156
    %2525 = vmatprep.subr.mxu0 %v153
    %2526 = vmatpush1.msra.mxu0 %v152
    %2527 = vmatprep.subr.mxu0 %v149
    %2528 = vmatpush1.msra.mxu0 %v148
    %2529 = vmatprep.subr.mxu0 %v145
    %2530 = vmatpush1.msra.mxu0 %v144
    %2531 = vmatprep.subr.mxu0 %v141
    %2532 = vmatpush1.msra.mxu0 %v140
    %2533 = vmatprep.subr.mxu0 %v137
    %2534 = vmatpush1.msra.mxu0 %v136
    %2535 = vmatprep.subr.mxu0 %v133
    %2536 = vmatpush1.msra.mxu0 %v132
    %2537 = vmatprep.subr.mxu0 %v129
    %2538 = vmatpush1.msra.mxu0 %v128
    %2539 = vmatprep.subr.mxu0 0.0
    %2540 = vmatpush2.msra.mxu0 0.0
    %2541 = vmatprep.subr.mxu0 0.0
    %2542 = vmatpush2.msra.mxu0 0.0
    %2543 = vmatprep.subr.mxu0 0.0
    %2544 = vmatpush2.msra.mxu0 0.0
    %2545 = vmatprep.subr.mxu0 0.0
    %2546 = vmatpush2.msra.mxu0 0.0
    %2547 = vmatprep.subr.mxu0 0.0
    %2548 = vmatpush2.msra.mxu0 0.0
    %2549 = vmatprep.subr.mxu0 0.0
    %2550 = vmatpush2.msra.mxu0 0.0
    %2551 = vmatprep.subr.mxu0 0.0
    %2552 = vmatpush2.msra.mxu0 0.0
    %2553 = vmatprep.subr.mxu0 0.0
    %2554 = vmatpush2.msra.mxu0 0.0
    %2555 = vmatprep.subr.mxu0 0.0
    %2556 = vmatpush2.msra.mxu0 0.0
    %2557 = vmatprep.subr.mxu0 0.0
    %2558 = vmatpush2.msra.mxu0 0.0
    %2559 = vmatprep.subr.mxu0 0.0
    %2560 = vmatpush2.msra.mxu0 0.0
    %2561 = vmatprep.subr.mxu0 0.0
    %2562 = vmatpush2.msra.mxu0 0.0
    %2563 = vmatprep.subr.mxu0 0.0
    %2564 = vmatpush2.msra.mxu0 0.0
    %2565 = vmatprep.subr.mxu0 0.0
    %2566 = vmatpush2.msra.mxu0 0.0
    %2567 = vmatprep.subr.mxu0 0.0
    %2568 = vmatpush2.msra.mxu0 0.0
    %2569 = vmatprep.subr.mxu0 0.0
    %2570 = vmatpush2.msra.mxu0 0.0
    %2571 = vmatprep.mubr.f32.mxu0 0.0
    %2572 = vmatmul.mubr.f32.gmra.mxu0 %v2506
    %v2573 = vpop.f32.mrf.mxu0
    %v2574 = vadd.f32 %v2147, %v2573
    %v2575 = vpop.f32.mrf.mxu0
    %v2576 = vadd.f32 %v2148, %v2575
    %2577 = vdwg.mxu0
    %2578 = vmatprep.subr.mxu0 %v191
    %2579 = vmatpush1.msra.mxu0 %v190
    %2580 = vmatprep.subr.mxu0 %v187
    %2581 = vmatpush1.msra.mxu0 %v186
    %2582 = vmatprep.subr.mxu0 %v183
    %2583 = vmatpush1.msra.mxu0 %v182
    %2584 = vmatprep.subr.mxu0 %v179
    %2585 = vmatpush1.msra.mxu0 %v178
    %2586 = vmatprep.subr.mxu0 %v175
    %2587 = vmatpush1.msra.mxu0 %v174
    %2588 = vmatprep.subr.mxu0 %v171
    %2589 = vmatpush1.msra.mxu0 %v170
    %2590 = vmatprep.subr.mxu0 %v167
    %2591 = vmatpush1.msra.mxu0 %v166
    %2592 = vmatprep.subr.mxu0 %v163
    %2593 = vmatpush1.msra.mxu0 %v162
    %2594 = vmatprep.subr.mxu0 %v159
    %2595 = vmatpush1.msra.mxu0 %v158
    %2596 = vmatprep.subr.mxu0 %v155
    %2597 = vmatpush1.msra.mxu0 %v154
    %2598 = vmatprep.subr.mxu0 %v151
    %2599 = vmatpush1.msra.mxu0 %v150
    %2600 = vmatprep.subr.mxu0 %v147
    %2601 = vmatpush1.msra.mxu0 %v146
    %2602 = vmatprep.subr.mxu0 %v143
    %2603 = vmatpush1.msra.mxu0 %v142
    %2604 = vmatprep.subr.mxu0 %v139
    %2605 = vmatpush1.msra.mxu0 %v138
    %2606 = vmatprep.subr.mxu0 %v135
    %2607 = vmatpush1.msra.mxu0 %v134
    %2608 = vmatprep.subr.mxu0 %v131
    %2609 = vmatpush1.msra.mxu0 %v130
    %2610 = vmatprep.subr.mxu0 0.0
    %2611 = vmatpush2.msra.mxu0 0.0
    %2612 = vmatprep.subr.mxu0 0.0
    %2613 = vmatpush2.msra.mxu0 0.0
    %2614 = vmatprep.subr.mxu0 0.0
    %2615 = vmatpush2.msra.mxu0 0.0
    %2616 = vmatprep.subr.mxu0 0.0
    %2617 = vmatpush2.msra.mxu0 0.0
    %2618 = vmatprep.subr.mxu0 0.0
    %2619 = vmatpush2.msra.mxu0 0.0
    %2620 = vmatprep.subr.mxu0 0.0
    %2621 = vmatpush2.msra.mxu0 0.0
    %2622 = vmatprep.subr.mxu0 0.0
    %2623 = vmatpush2.msra.mxu0 0.0
    %2624 = vmatprep.subr.mxu0 0.0
    %2625 = vmatpush2.msra.mxu0 0.0
    %2626 = vmatprep.subr.mxu0 0.0
    %2627 = vmatpush2.msra.mxu0 0.0
    %2628 = vmatprep.subr.mxu0 0.0
    %2629 = vmatpush2.msra.mxu0 0.0
    %2630 = vmatprep.subr.mxu0 0.0
    %2631 = vmatpush2.msra.mxu0 0.0
    %2632 = vmatprep.subr.mxu0 0.0
    %2633 = vmatpush2.msra.mxu0 0.0
    %2634 = vmatprep.subr.mxu0 0.0
    %2635 = vmatpush2.msra.mxu0 0.0
    %2636 = vmatprep.subr.mxu0 0.0
    %2637 = vmatpush2.msra.mxu0 0.0
    %2638 = vmatprep.subr.mxu0 0.0
    %2639 = vmatpush2.msra.mxu0 0.0
    %2640 = vmatprep.subr.mxu0 0.0
    %2641 = vmatpush2.msra.mxu0 0.0
    %2642 = vmatprep.mubr.f32.mxu0 0.0
    %2643 = vmatmul.mubr.f32.gmra.mxu0 %v2506
    %v2644 = vpop.f32.mrf.mxu0
    %v2645 = vadd.f32 %v2149, %v2644
    %v2646 = vpop.f32.mrf.mxu0
    %v2647 = vadd.f32 %v2150, %v2646
    %2648 = vdwg.mxu0
    %v2649 = vxor.u32 %v2574, 2147483648
    %v2650 = vmul.f32 %v2649, 1.442695
    %v2651 = vpow.pop %v2650
    %v2652 = vadd.f32 %v2651, 1.0
    %v2653 = vrcp.pop %v2652
    %v2654 = vmul.f32 1.0, %v2653
    %v2655 = vxor.u32 %v2576, 2147483648
    %v2656 = vmul.f32 %v2655, 1.442695
    %v2657 = vpow.pop %v2656
    %v2658 = vadd.f32 %v2657, 1.0
    %v2659 = vrcp.pop %v2658
    %v2660 = vmul.f32 1.0, %v2659
    %v2661 = vtanh.pop %v2645
    %v2662 = vxor.u32 %v2647, 2147483648
    %v2663 = vmul.f32 %v2662, 1.442695
    %v2664 = vpow.pop %v2663
    %v2665 = vadd.f32 %v2664, 1.0
    %v2666 = vrcp.pop %v2665
    %v2667 = vmul.f32 1.0, %v2666
    %v2668 = vmul.f32 %v2660, %v2504
    %v2669 = vmul.f32 %v2654, %v2661
    %v2670 = vadd.f32 %v2668, %v2669
    %v2671 = vtanh.pop %v2670
    %v2672 = vmul.f32 %v2667, %v2671
    %2673 = vmatprep.subr.mxu0 %v189
    %2674 = vmatpush1.msra.mxu0 %v188
    %2675 = vmatprep.subr.mxu0 %v185
    %2676 = vmatpush1.msra.mxu0 %v184
    %2677 = vmatprep.subr.mxu0 %v181
    %2678 = vmatpush1.msra.mxu0 %v180
    %2679 = vmatprep.subr.mxu0 %v177
    %2680 = vmatpush1.msra.mxu0 %v176
    %2681 = vmatprep.subr.mxu0 %v173
    %2682 = vmatpush1.msra.mxu0 %v172
    %2683 = vmatprep.subr.mxu0 %v169
    %2684 = vmatpush1.msra.mxu0 %v168
    %2685 = vmatprep.subr.mxu0 %v165
    %2686 = vmatpush1.msra.mxu0 %v164
    %2687 = vmatprep.subr.mxu0 %v161
    %2688 = vmatpush1.msra.mxu0 %v160
    %2689 = vmatprep.subr.mxu0 %v157
    %2690 = vmatpush1.msra.mxu0 %v156
    %2691 = vmatprep.subr.mxu0 %v153
    %2692 = vmatpush1.msra.mxu0 %v152
    %2693 = vmatprep.subr.mxu0 %v149
    %2694 = vmatpush1.msra.mxu0 %v148
    %2695 = vmatprep.subr.mxu0 %v145
    %2696 = vmatpush1.msra.mxu0 %v144
    %2697 = vmatprep.subr.mxu0 %v141
    %2698 = vmatpush1.msra.mxu0 %v140
    %2699 = vmatprep.subr.mxu0 %v137
    %2700 = vmatpush1.msra.mxu0 %v136
    %2701 = vmatprep.subr.mxu0 %v133
    %2702 = vmatpush1.msra.mxu0 %v132
    %2703 = vmatprep.subr.mxu0 %v129
    %2704 = vmatpush1.msra.mxu0 %v128
    %2705 = vmatprep.subr.mxu0 0.0
    %2706 = vmatpush2.msra.mxu0 0.0
    %2707 = vmatprep.subr.mxu0 0.0
    %2708 = vmatpush2.msra.mxu0 0.0
    %2709 = vmatprep.subr.mxu0 0.0
    %2710 = vmatpush2.msra.mxu0 0.0
    %2711 = vmatprep.subr.mxu0 0.0
    %2712 = vmatpush2.msra.mxu0 0.0
    %2713 = vmatprep.subr.mxu0 0.0
    %2714 = vmatpush2.msra.mxu0 0.0
    %2715 = vmatprep.subr.mxu0 0.0
    %2716 = vmatpush2.msra.mxu0 0.0
    %2717 = vmatprep.subr.mxu0 0.0
    %2718 = vmatpush2.msra.mxu0 0.0
    %2719 = vmatprep.subr.mxu0 0.0
    %2720 = vmatpush2.msra.mxu0 0.0
    %2721 = vmatprep.subr.mxu0 0.0
    %2722 = vmatpush2.msra.mxu0 0.0
    %2723 = vmatprep.subr.mxu0 0.0
    %2724 = vmatpush2.msra.mxu0 0.0
    %2725 = vmatprep.subr.mxu0 0.0
    %2726 = vmatpush2.msra.mxu0 0.0
    %2727 = vmatprep.subr.mxu0 0.0
    %2728 = vmatpush2.msra.mxu0 0.0
    %2729 = vmatprep.subr.mxu0 0.0
    %2730 = vmatpush2.msra.mxu0 0.0
    %2731 = vmatprep.subr.mxu0 0.0
    %2732 = vmatpush2.msra.mxu0 0.0
    %2733 = vmatprep.subr.mxu0 0.0
    %2734 = vmatpush2.msra.mxu0 0.0
    %2735 = vmatprep.subr.mxu0 0.0
    %2736 = vmatpush2.msra.mxu0 0.0
    %2737 = vmatprep.mubr.f32.mxu0 0.0
    %2738 = vmatmul.mubr.f32.gmra.mxu0 %v2672
    %v2739 = vpop.f32.mrf.mxu0
    %v2740 = vadd.f32 %v2147, %v2739
    %v2741 = vpop.f32.mrf.mxu0
    %v2742 = vadd.f32 %v2148, %v2741
    %2743 = vdwg.mxu0
    %2744 = vmatprep.subr.mxu0 %v191
    %2745 = vmatpush1.msra.mxu0 %v190
    %2746 = vmatprep.subr.mxu0 %v187
    %2747 = vmatpush1.msra.mxu0 %v186
    %2748 = vmatprep.subr.mxu0 %v183
    %2749 = vmatpush1.msra.mxu0 %v182
    %2750 = vmatprep.subr.mxu0 %v179
    %2751 = vmatpush1.msra.mxu0 %v178
    %2752 = vmatprep.subr.mxu0 %v175
    %2753 = vmatpush1.msra.mxu0 %v174
    %2754 = vmatprep.subr.mxu0 %v171
    %2755 = vmatpush1.msra.mxu0 %v170
    %2756 = vmatprep.subr.mxu0 %v167
    %2757 = vmatpush1.msra.mxu0 %v166
    %2758 = vmatprep.subr.mxu0 %v163
    %2759 = vmatpush1.msra.mxu0 %v162
    %2760 = vmatprep.subr.mxu0 %v159
    %2761 = vmatpush1.msra.mxu0 %v158
    %2762 = vmatprep.subr.mxu0 %v155
    %2763 = vmatpush1.msra.mxu0 %v154
    %2764 = vmatprep.subr.mxu0 %v151
    %2765 = vmatpush1.msra.mxu0 %v150
    %2766 = vmatprep.subr.mxu0 %v147
    %2767 = vmatpush1.msra.mxu0 %v146
    %2768 = vmatprep.subr.mxu0 %v143
    %2769 = vmatpush1.msra.mxu0 %v142
    %2770 = vmatprep.subr.mxu0 %v139
    %2771 = vmatpush1.msra.mxu0 %v138
    %2772 = vmatprep.subr.mxu0 %v135
    %2773 = vmatpush1.msra.mxu0 %v134
    %2774 = vmatprep.subr.mxu0 %v131
    %2775 = vmatpush1.msra.mxu0 %v130
    %2776 = vmatprep.subr.mxu0 0.0
    %2777 = vmatpush2.msra.mxu0 0.0
    %2778 = vmatprep.subr.mxu0 0.0
    %2779 = vmatpush2.msra.mxu0 0.0
    %2780 = vmatprep.subr.mxu0 0.0
    %2781 = vmatpush2.msra.mxu0 0.0
    %2782 = vmatprep.subr.mxu0 0.0
    %2783 = vmatpush2.msra.mxu0 0.0
    %2784 = vmatprep.subr.mxu0 0.0
    %2785 = vmatpush2.msra.mxu0 0.0
    %2786 = vmatprep.subr.mxu0 0.0
    %2787 = vmatpush2.msra.mxu0 0.0
    %2788 = vmatprep.subr.mxu0 0.0
    %2789 = vmatpush2.msra.mxu0 0.0
    %2790 = vmatprep.subr.mxu0 0.0
    %2791 = vmatpush2.msra.mxu0 0.0
    %2792 = vmatprep.subr.mxu0 0.0
    %2793 = vmatpush2.msra.mxu0 0.0
    %2794 = vmatprep.subr.mxu0 0.0
    %2795 = vmatpush2.msra.mxu0 0.0
    %2796 = vmatprep.subr.mxu0 0.0
    %2797 = vmatpush2.msra.mxu0 0.0
    %2798 = vmatprep.subr.mxu0 0.0
    %2799 = vmatpush2.msra.mxu0 0.0
    %2800 = vmatprep.subr.mxu0 0.0
    %2801 = vmatpush2.msra.mxu0 0.0
    %2802 = vmatprep.subr.mxu0 0.0
    %2803 = vmatpush2.msra.mxu0 0.0
    %2804 = vmatprep.subr.mxu0 0.0
    %2805 = vmatpush2.msra.mxu0 0.0
    %2806 = vmatprep.subr.mxu0 0.0
    %2807 = vmatpush2.msra.mxu0 0.0
    %2808 = vmatprep.mubr.f32.mxu0 0.0
    %2809 = vmatmul.mubr.f32.gmra.mxu0 %v2672
    %v2810 = vpop.f32.mrf.mxu0
    %v2811 = vadd.f32 %v2149, %v2810
    %v2812 = vpop.f32.mrf.mxu0
    %v2813 = vadd.f32 %v2150, %v2812
    %2814 = vdwg.mxu0
    %v2815 = vxor.u32 %v2740, 2147483648
    %v2816 = vmul.f32 %v2815, 1.442695
    %v2817 = vpow.pop %v2816
    %v2818 = vadd.f32 %v2817, 1.0
    %v2819 = vrcp.pop %v2818
    %v2820 = vmul.f32 1.0, %v2819
    %v2821 = vxor.u32 %v2742, 2147483648
    %v2822 = vmul.f32 %v2821, 1.442695
    %v2823 = vpow.pop %v2822
    %v2824 = vadd.f32 %v2823, 1.0
    %v2825 = vrcp.pop %v2824
    %v2826 = vmul.f32 1.0, %v2825
    %v2827 = vtanh.pop %v2811
    %v2828 = vxor.u32 %v2813, 2147483648
    %v2829 = vmul.f32 %v2828, 1.442695
    %v2830 = vpow.pop %v2829
    %v2831 = vadd.f32 %v2830, 1.0
    %v2832 = vrcp.pop %v2831
    %v2833 = vmul.f32 1.0, %v2832
    %v2834 = vmul.f32 %v2826, %v2670
    %v2835 = vmul.f32 %v2820, %v2827
    %v2836 = vadd.f32 %v2834, %v2835
    %v2837 = vtanh.pop %v2836
    %v2838 = vmul.f32 %v2833, %v2837
    %2839 = vmatprep.subr.mxu0 %v189
    %2840 = vmatpush1.msra.mxu0 %v188
    %2841 = vmatprep.subr.mxu0 %v185
    %2842 = vmatpush1.msra.mxu0 %v184
    %2843 = vmatprep.subr.mxu0 %v181
    %2844 = vmatpush1.msra.mxu0 %v180
    %2845 = vmatprep.subr.mxu0 %v177
    %2846 = vmatpush1.msra.mxu0 %v176
    %2847 = vmatprep.subr.mxu0 %v173
    %2848 = vmatpush1.msra.mxu0 %v172
    %2849 = vmatprep.subr.mxu0 %v169
    %2850 = vmatpush1.msra.mxu0 %v168
    %2851 = vmatprep.subr.mxu0 %v165
    %2852 = vmatpush1.msra.mxu0 %v164
    %2853 = vmatprep.subr.mxu0 %v161
    %2854 = vmatpush1.msra.mxu0 %v160
    %2855 = vmatprep.subr.mxu0 %v157
    %2856 = vmatpush1.msra.mxu0 %v156
    %2857 = vmatprep.subr.mxu0 %v153
    %2858 = vmatpush1.msra.mxu0 %v152
    %2859 = vmatprep.subr.mxu0 %v149
    %2860 = vmatpush1.msra.mxu0 %v148
    %2861 = vmatprep.subr.mxu0 %v145
    %2862 = vmatpush1.msra.mxu0 %v144
    %2863 = vmatprep.subr.mxu0 %v141
    %2864 = vmatpush1.msra.mxu0 %v140
    %2865 = vmatprep.subr.mxu0 %v137
    %2866 = vmatpush1.msra.mxu0 %v136
    %2867 = vmatprep.subr.mxu0 %v133
    %2868 = vmatpush1.msra.mxu0 %v132
    %2869 = vmatprep.subr.mxu0 %v129
    %2870 = vmatpush1.msra.mxu0 %v128
    %2871 = vmatprep.subr.mxu0 0.0
    %2872 = vmatpush2.msra.mxu0 0.0
    %2873 = vmatprep.subr.mxu0 0.0
    %2874 = vmatpush2.msra.mxu0 0.0
    %2875 = vmatprep.subr.mxu0 0.0
    %2876 = vmatpush2.msra.mxu0 0.0
    %2877 = vmatprep.subr.mxu0 0.0
    %2878 = vmatpush2.msra.mxu0 0.0
    %2879 = vmatprep.subr.mxu0 0.0
    %2880 = vmatpush2.msra.mxu0 0.0
    %2881 = vmatprep.subr.mxu0 0.0
    %2882 = vmatpush2.msra.mxu0 0.0
    %2883 = vmatprep.subr.mxu0 0.0
    %2884 = vmatpush2.msra.mxu0 0.0
    %2885 = vmatprep.subr.mxu0 0.0
    %2886 = vmatpush2.msra.mxu0 0.0
    %2887 = vmatprep.subr.mxu0 0.0
    %2888 = vmatpush2.msra.mxu0 0.0
    %2889 = vmatprep.subr.mxu0 0.0
    %2890 = vmatpush2.msra.mxu0 0.0
    %2891 = vmatprep.subr.mxu0 0.0
    %2892 = vmatpush2.msra.mxu0 0.0
    %2893 = vmatprep.subr.mxu0 0.0
    %2894 = vmatpush2.msra.mxu0 0.0
    %2895 = vmatprep.subr.mxu0 0.0
    %2896 = vmatpush2.msra.mxu0 0.0
    %2897 = vmatprep.subr.mxu0 0.0
    %2898 = vmatpush2.msra.mxu0 0.0
    %2899 = vmatprep.subr.mxu0 0.0
    %2900 = vmatpush2.msra.mxu0 0.0
    %2901 = vmatprep.subr.mxu0 0.0
    %2902 = vmatpush2.msra.mxu0 0.0
    %2903 = vmatprep.mubr.f32.mxu0 0.0
    %2904 = vmatmul.mubr.f32.gmra.mxu0 %v2838
    %v2905 = vpop.f32.mrf.mxu0
    %v2906 = vadd.f32 %v2147, %v2905
    %v2907 = vpop.f32.mrf.mxu0
    %v2908 = vadd.f32 %v2148, %v2907
    %2909 = vdwg.mxu0
    %2910 = vmatprep.subr.mxu0 %v191
    %2911 = vmatpush1.msra.mxu0 %v190
    %2912 = vmatprep.subr.mxu0 %v187
    %2913 = vmatpush1.msra.mxu0 %v186
    %2914 = vmatprep.subr.mxu0 %v183
    %2915 = vmatpush1.msra.mxu0 %v182
    %2916 = vmatprep.subr.mxu0 %v179
    %2917 = vmatpush1.msra.mxu0 %v178
    %2918 = vmatprep.subr.mxu0 %v175
    %2919 = vmatpush1.msra.mxu0 %v174
    %2920 = vmatprep.subr.mxu0 %v171
    %2921 = vmatpush1.msra.mxu0 %v170
    %2922 = vmatprep.subr.mxu0 %v167
    %2923 = vmatpush1.msra.mxu0 %v166
    %2924 = vmatprep.subr.mxu0 %v163
    %2925 = vmatpush1.msra.mxu0 %v162
    %2926 = vmatprep.subr.mxu0 %v159
    %2927 = vmatpush1.msra.mxu0 %v158
    %2928 = vmatprep.subr.mxu0 %v155
    %2929 = vmatpush1.msra.mxu0 %v154
    %2930 = vmatprep.subr.mxu0 %v151
    %2931 = vmatpush1.msra.mxu0 %v150
    %2932 = vmatprep.subr.mxu0 %v147
    %2933 = vmatpush1.msra.mxu0 %v146
    %2934 = vmatprep.subr.mxu0 %v143
    %2935 = vmatpush1.msra.mxu0 %v142
    %2936 = vmatprep.subr.mxu0 %v139
    %2937 = vmatpush1.msra.mxu0 %v138
    %2938 = vmatprep.subr.mxu0 %v135
    %2939 = vmatpush1.msra.mxu0 %v134
    %2940 = vmatprep.subr.mxu0 %v131
    %2941 = vmatpush1.msra.mxu0 %v130
    %2942 = vmatprep.subr.mxu0 0.0
    %2943 = vmatpush2.msra.mxu0 0.0
    %2944 = vmatprep.subr.mxu0 0.0
    %2945 = vmatpush2.msra.mxu0 0.0
    %2946 = vmatprep.subr.mxu0 0.0
    %2947 = vmatpush2.msra.mxu0 0.0
    %2948 = vmatprep.subr.mxu0 0.0
    %2949 = vmatpush2.msra.mxu0 0.0
    %2950 = vmatprep.subr.mxu0 0.0
    %2951 = vmatpush2.msra.mxu0 0.0
    %2952 = vmatprep.subr.mxu0 0.0
    %2953 = vmatpush2.msra.mxu0 0.0
    %2954 = vmatprep.subr.mxu0 0.0
    %2955 = vmatpush2.msra.mxu0 0.0
    %2956 = vmatprep.subr.mxu0 0.0
    %2957 = vmatpush2.msra.mxu0 0.0
    %2958 = vmatprep.subr.mxu0 0.0
    %2959 = vmatpush2.msra.mxu0 0.0
    %2960 = vmatprep.subr.mxu0 0.0
    %2961 = vmatpush2.msra.mxu0 0.0
    %2962 = vmatprep.subr.mxu0 0.0
    %2963 = vmatpush2.msra.mxu0 0.0
    %2964 = vmatprep.subr.mxu0 0.0
    %2965 = vmatpush2.msra.mxu0 0.0
    %2966 = vmatprep.subr.mxu0 0.0
    %2967 = vmatpush2.msra.mxu0 0.0
    %2968 = vmatprep.subr.mxu0 0.0
    %2969 = vmatpush2.msra.mxu0 0.0
    %2970 = vmatprep.subr.mxu0 0.0
    %2971 = vmatpush2.msra.mxu0 0.0
    %2972 = vmatprep.subr.mxu0 0.0
    %2973 = vmatpush2.msra.mxu0 0.0
    %2974 = vmatprep.mubr.f32.mxu0 0.0
    %2975 = vmatmul.mubr.f32.gmra.mxu0 %v2838
    %v2976 = vpop.f32.mrf.mxu0
    %v2977 = vadd.f32 %v2149, %v2976
    %v2978 = vpop.f32.mrf.mxu0
    %v2979 = vadd.f32 %v2150, %v2978
    %2980 = vdwg.mxu0
    %v2981 = vxor.u32 %v2906, 2147483648
    %v2982 = vmul.f32 %v2981, 1.442695
    %v2983 = vpow.pop %v2982
    %v2984 = vadd.f32 %v2983, 1.0
    %v2985 = vrcp.pop %v2984
    %v2986 = vmul.f32 1.0, %v2985
    %v2987 = vxor.u32 %v2908, 2147483648
    %v2988 = vmul.f32 %v2987, 1.442695
    %v2989 = vpow.pop %v2988
    %v2990 = vadd.f32 %v2989, 1.0
    %v2991 = vrcp.pop %v2990
    %v2992 = vmul.f32 1.0, %v2991
    %v2993 = vtanh.pop %v2977
    %v2994 = vxor.u32 %v2979, 2147483648
    %v2995 = vmul.f32 %v2994, 1.442695
    %v2996 = vpow.pop %v2995
    %v2997 = vadd.f32 %v2996, 1.0
    %v2998 = vrcp.pop %v2997
    %v2999 = vmul.f32 1.0, %v2998
    %v3000 = vmul.f32 %v2992, %v2836
    %v3001 = vmul.f32 %v2986, %v2993
    %v3002 = vadd.f32 %v3000, %v3001
    %v3003 = vtanh.pop %v3002
    %v3004 = vmul.f32 %v2999, %v3003
    %3005 = vmatprep.subr.mxu0 %v189
    %3006 = vmatpush1.msra.mxu0 %v188
    %3007 = vmatprep.subr.mxu0 %v185
    %3008 = vmatpush1.msra.mxu0 %v184
    %3009 = vmatprep.subr.mxu0 %v181
    %3010 = vmatpush1.msra.mxu0 %v180
    %3011 = vmatprep.subr.mxu0 %v177
    %3012 = vmatpush1.msra.mxu0 %v176
    %3013 = vmatprep.subr.mxu0 %v173
    %3014 = vmatpush1.msra.mxu0 %v172
    %3015 = vmatprep.subr.mxu0 %v169
    %3016 = vmatpush1.msra.mxu0 %v168
    %3017 = vmatprep.subr.mxu0 %v165
    %3018 = vmatpush1.msra.mxu0 %v164
    %3019 = vmatprep.subr.mxu0 %v161
    %3020 = vmatpush1.msra.mxu0 %v160
    %3021 = vmatprep.subr.mxu0 %v157
    %3022 = vmatpush1.msra.mxu0 %v156
    %3023 = vmatprep.subr.mxu0 %v153
    %3024 = vmatpush1.msra.mxu0 %v152
    %3025 = vmatprep.subr.mxu0 %v149
    %3026 = vmatpush1.msra.mxu0 %v148
    %3027 = vmatprep.subr.mxu0 %v145
    %3028 = vmatpush1.msra.mxu0 %v144
    %3029 = vmatprep.subr.mxu0 %v141
    %3030 = vmatpush1.msra.mxu0 %v140
    %3031 = vmatprep.subr.mxu0 %v137
    %3032 = vmatpush1.msra.mxu0 %v136
    %3033 = vmatprep.subr.mxu0 %v133
    %3034 = vmatpush1.msra.mxu0 %v132
    %3035 = vmatprep.subr.mxu0 %v129
    %3036 = vmatpush1.msra.mxu0 %v128
    %3037 = vmatprep.subr.mxu0 0.0
    %3038 = vmatpush2.msra.mxu0 0.0
    %3039 = vmatprep.subr.mxu0 0.0
    %3040 = vmatpush2.msra.mxu0 0.0
    %3041 = vmatprep.subr.mxu0 0.0
    %3042 = vmatpush2.msra.mxu0 0.0
    %3043 = vmatprep.subr.mxu0 0.0
    %3044 = vmatpush2.msra.mxu0 0.0
    %3045 = vmatprep.subr.mxu0 0.0
    %3046 = vmatpush2.msra.mxu0 0.0
    %3047 = vmatprep.subr.mxu0 0.0
    %3048 = vmatpush2.msra.mxu0 0.0
    %3049 = vmatprep.subr.mxu0 0.0
    %3050 = vmatpush2.msra.mxu0 0.0
    %3051 = vmatprep.subr.mxu0 0.0
    %3052 = vmatpush2.msra.mxu0 0.0
    %3053 = vmatprep.subr.mxu0 0.0
    %3054 = vmatpush2.msra.mxu0 0.0
    %3055 = vmatprep.subr.mxu0 0.0
    %3056 = vmatpush2.msra.mxu0 0.0
    %3057 = vmatprep.subr.mxu0 0.0
    %3058 = vmatpush2.msra.mxu0 0.0
    %3059 = vmatprep.subr.mxu0 0.0
    %3060 = vmatpush2.msra.mxu0 0.0
    %3061 = vmatprep.subr.mxu0 0.0
    %3062 = vmatpush2.msra.mxu0 0.0
    %3063 = vmatprep.subr.mxu0 0.0
    %3064 = vmatpush2.msra.mxu0 0.0
    %3065 = vmatprep.subr.mxu0 0.0
    %3066 = vmatpush2.msra.mxu0 0.0
    %3067 = vmatprep.subr.mxu0 0.0
    %3068 = vmatpush2.msra.mxu0 0.0
    %3069 = vmatprep.mubr.f32.mxu0 0.0
    %3070 = vmatmul.mubr.f32.gmra.mxu0 %v3004
    %v3071 = vpop.f32.mrf.mxu0
    %v3072 = vadd.f32 %v2147, %v3071
    %v3073 = vpop.f32.mrf.mxu0
    %v3074 = vadd.f32 %v2148, %v3073
    %3075 = vdwg.mxu0
    %3076 = vmatprep.subr.mxu0 %v191
    %3077 = vmatpush1.msra.mxu0 %v190
    %3078 = vmatprep.subr.mxu0 %v187
    %3079 = vmatpush1.msra.mxu0 %v186
    %3080 = vmatprep.subr.mxu0 %v183
    %3081 = vmatpush1.msra.mxu0 %v182
    %3082 = vmatprep.subr.mxu0 %v179
    %3083 = vmatpush1.msra.mxu0 %v178
    %3084 = vmatprep.subr.mxu0 %v175
    %3085 = vmatpush1.msra.mxu0 %v174
    %3086 = vmatprep.subr.mxu0 %v171
    %3087 = vmatpush1.msra.mxu0 %v170
    %3088 = vmatprep.subr.mxu0 %v167
    %3089 = vmatpush1.msra.mxu0 %v166
    %3090 = vmatprep.subr.mxu0 %v163
    %3091 = vmatpush1.msra.mxu0 %v162
    %3092 = vmatprep.subr.mxu0 %v159
    %3093 = vmatpush1.msra.mxu0 %v158
    %3094 = vmatprep.subr.mxu0 %v155
    %3095 = vmatpush1.msra.mxu0 %v154
    %3096 = vmatprep.subr.mxu0 %v151
    %3097 = vmatpush1.msra.mxu0 %v150
    %3098 = vmatprep.subr.mxu0 %v147
    %3099 = vmatpush1.msra.mxu0 %v146
    %3100 = vmatprep.subr.mxu0 %v143
    %3101 = vmatpush1.msra.mxu0 %v142
    %3102 = vmatprep.subr.mxu0 %v139
    %3103 = vmatpush1.msra.mxu0 %v138
    %3104 = vmatprep.subr.mxu0 %v135
    %3105 = vmatpush1.msra.mxu0 %v134
    %3106 = vmatprep.subr.mxu0 %v131
    %3107 = vmatpush1.msra.mxu0 %v130
    %3108 = vmatprep.subr.mxu0 0.0
    %3109 = vmatpush2.msra.mxu0 0.0
    %3110 = vmatprep.subr.mxu0 0.0
    %3111 = vmatpush2.msra.mxu0 0.0
    %3112 = vmatprep.subr.mxu0 0.0
    %3113 = vmatpush2.msra.mxu0 0.0
    %3114 = vmatprep.subr.mxu0 0.0
    %3115 = vmatpush2.msra.mxu0 0.0
    %3116 = vmatprep.subr.mxu0 0.0
    %3117 = vmatpush2.msra.mxu0 0.0
    %3118 = vmatprep.subr.mxu0 0.0
    %3119 = vmatpush2.msra.mxu0 0.0
    %3120 = vmatprep.subr.mxu0 0.0
    %3121 = vmatpush2.msra.mxu0 0.0
    %3122 = vmatprep.subr.mxu0 0.0
    %3123 = vmatpush2.msra.mxu0 0.0
    %3124 = vmatprep.subr.mxu0 0.0
    %3125 = vmatpush2.msra.mxu0 0.0
    %3126 = vmatprep.subr.mxu0 0.0
    %3127 = vmatpush2.msra.mxu0 0.0
    %3128 = vmatprep.subr.mxu0 0.0
    %3129 = vmatpush2.msra.mxu0 0.0
    %3130 = vmatprep.subr.mxu0 0.0
    %3131 = vmatpush2.msra.mxu0 0.0
    %3132 = vmatprep.subr.mxu0 0.0
    %3133 = vmatpush2.msra.mxu0 0.0
    %3134 = vmatprep.subr.mxu0 0.0
    %3135 = vmatpush2.msra.mxu0 0.0
    %3136 = vmatprep.subr.mxu0 0.0
    %3137 = vmatpush2.msra.mxu0 0.0
    %3138 = vmatprep.subr.mxu0 0.0
    %3139 = vmatpush2.msra.mxu0 0.0
    %3140 = vmatprep.mubr.f32.mxu0 0.0
    %3141 = vmatmul.mubr.f32.gmra.mxu0 %v3004
    %v3142 = vpop.f32.mrf.mxu0
    %v3143 = vadd.f32 %v2149, %v3142
    %v3144 = vpop.f32.mrf.mxu0
    %v3145 = vadd.f32 %v2150, %v3144
    %3146 = vdwg.mxu0
    %v3147 = vxor.u32 %v3072, 2147483648
    %v3148 = vmul.f32 %v3147, 1.442695
    %v3149 = vpow.pop %v3148
    %v3150 = vadd.f32 %v3149, 1.0
    %v3151 = vrcp.pop %v3150
    %v3152 = vmul.f32 1.0, %v3151
    %v3153 = vxor.u32 %v3074, 2147483648
    %v3154 = vmul.f32 %v3153, 1.442695
    %v3155 = vpow.pop %v3154
    %v3156 = vadd.f32 %v3155, 1.0
    %v3157 = vrcp.pop %v3156
    %v3158 = vmul.f32 1.0, %v3157
    %v3159 = vtanh.pop %v3143
    %v3160 = vxor.u32 %v3145, 2147483648
    %v3161 = vmul.f32 %v3160, 1.442695
    %v3162 = vpow.pop %v3161
    %v3163 = vadd.f32 %v3162, 1.0
    %v3164 = vrcp.pop %v3163
    %v3165 = vmul.f32 1.0, %v3164
    %v3166 = vmul.f32 %v3158, %v3002
    %v3167 = vmul.f32 %v3152, %v3159
    %v3168 = vadd.f32 %v3166, %v3167
    %v3169 = vtanh.pop %v3168
    %v3170 = vmul.f32 %v3165, %v3169
    %3171 = vmatprep.subr.mxu0 %v189
    %3172 = vmatpush1.msra.mxu0 %v188
    %3173 = vmatprep.subr.mxu0 %v185
    %3174 = vmatpush1.msra.mxu0 %v184
    %3175 = vmatprep.subr.mxu0 %v181
    %3176 = vmatpush1.msra.mxu0 %v180
    %3177 = vmatprep.subr.mxu0 %v177
    %3178 = vmatpush1.msra.mxu0 %v176
    %3179 = vmatprep.subr.mxu0 %v173
    %3180 = vmatpush1.msra.mxu0 %v172
    %3181 = vmatprep.subr.mxu0 %v169
    %3182 = vmatpush1.msra.mxu0 %v168
    %3183 = vmatprep.subr.mxu0 %v165
    %3184 = vmatpush1.msra.mxu0 %v164
    %3185 = vmatprep.subr.mxu0 %v161
    %3186 = vmatpush1.msra.mxu0 %v160
    %3187 = vmatprep.subr.mxu0 %v157
    %3188 = vmatpush1.msra.mxu0 %v156
    %3189 = vmatprep.subr.mxu0 %v153
    %3190 = vmatpush1.msra.mxu0 %v152
    %3191 = vmatprep.subr.mxu0 %v149
    %3192 = vmatpush1.msra.mxu0 %v148
    %3193 = vmatprep.subr.mxu0 %v145
    %3194 = vmatpush1.msra.mxu0 %v144
    %3195 = vmatprep.subr.mxu0 %v141
    %3196 = vmatpush1.msra.mxu0 %v140
    %3197 = vmatprep.subr.mxu0 %v137
    %3198 = vmatpush1.msra.mxu0 %v136
    %3199 = vmatprep.subr.mxu0 %v133
    %3200 = vmatpush1.msra.mxu0 %v132
    %3201 = vmatprep.subr.mxu0 %v129
    %3202 = vmatpush1.msra.mxu0 %v128
    %3203 = vmatprep.subr.mxu0 0.0
    %3204 = vmatpush2.msra.mxu0 0.0
    %3205 = vmatprep.subr.mxu0 0.0
    %3206 = vmatpush2.msra.mxu0 0.0
    %3207 = vmatprep.subr.mxu0 0.0
    %3208 = vmatpush2.msra.mxu0 0.0
    %3209 = vmatprep.subr.mxu0 0.0
    %3210 = vmatpush2.msra.mxu0 0.0
    %3211 = vmatprep.subr.mxu0 0.0
    %3212 = vmatpush2.msra.mxu0 0.0
    %3213 = vmatprep.subr.mxu0 0.0
    %3214 = vmatpush2.msra.mxu0 0.0
    %3215 = vmatprep.subr.mxu0 0.0
    %3216 = vmatpush2.msra.mxu0 0.0
    %3217 = vmatprep.subr.mxu0 0.0
    %3218 = vmatpush2.msra.mxu0 0.0
    %3219 = vmatprep.subr.mxu0 0.0
    %3220 = vmatpush2.msra.mxu0 0.0
    %3221 = vmatprep.subr.mxu0 0.0
    %3222 = vmatpush2.msra.mxu0 0.0
    %3223 = vmatprep.subr.mxu0 0.0
    %3224 = vmatpush2.msra.mxu0 0.0
    %3225 = vmatprep.subr.mxu0 0.0
    %3226 = vmatpush2.msra.mxu0 0.0
    %3227 = vmatprep.subr.mxu0 0.0
    %3228 = vmatpush2.msra.mxu0 0.0
    %3229 = vmatprep.subr.mxu0 0.0
    %3230 = vmatpush2.msra.mxu0 0.0
    %3231 = vmatprep.subr.mxu0 0.0
    %3232 = vmatpush2.msra.mxu0 0.0
    %3233 = vmatprep.subr.mxu0 0.0
    %3234 = vmatpush2.msra.mxu0 0.0
    %3235 = vmatprep.mubr.f32.mxu0 0.0
    %3236 = vmatmul.mubr.f32.gmra.mxu0 %v3170
    %v3237 = vpop.f32.mrf.mxu0
    %v3238 = vadd.f32 %v2147, %v3237
    %v3239 = vpop.f32.mrf.mxu0
    %v3240 = vadd.f32 %v2148, %v3239
    %3241 = vdwg.mxu0
    %3242 = vmatprep.subr.mxu0 %v191
    %3243 = vmatpush1.msra.mxu0 %v190
    %3244 = vmatprep.subr.mxu0 %v187
    %3245 = vmatpush1.msra.mxu0 %v186
    %3246 = vmatprep.subr.mxu0 %v183
    %3247 = vmatpush1.msra.mxu0 %v182
    %3248 = vmatprep.subr.mxu0 %v179
    %3249 = vmatpush1.msra.mxu0 %v178
    %3250 = vmatprep.subr.mxu0 %v175
    %3251 = vmatpush1.msra.mxu0 %v174
    %3252 = vmatprep.subr.mxu0 %v171
    %3253 = vmatpush1.msra.mxu0 %v170
    %3254 = vmatprep.subr.mxu0 %v167
    %3255 = vmatpush1.msra.mxu0 %v166
    %3256 = vmatprep.subr.mxu0 %v163
    %3257 = vmatpush1.msra.mxu0 %v162
    %3258 = vmatprep.subr.mxu0 %v159
    %3259 = vmatpush1.msra.mxu0 %v158
    %3260 = vmatprep.subr.mxu0 %v155
    %3261 = vmatpush1.msra.mxu0 %v154
    %3262 = vmatprep.subr.mxu0 %v151
    %3263 = vmatpush1.msra.mxu0 %v150
    %3264 = vmatprep.subr.mxu0 %v147
    %3265 = vmatpush1.msra.mxu0 %v146
    %3266 = vmatprep.subr.mxu0 %v143
    %3267 = vmatpush1.msra.mxu0 %v142
    %3268 = vmatprep.subr.mxu0 %v139
    %3269 = vmatpush1.msra.mxu0 %v138
    %3270 = vmatprep.subr.mxu0 %v135
    %3271 = vmatpush1.msra.mxu0 %v134
    %3272 = vmatprep.subr.mxu0 %v131
    %3273 = vmatpush1.msra.mxu0 %v130
    %3274 = vmatprep.subr.mxu0 0.0
    %3275 = vmatpush2.msra.mxu0 0.0
    %3276 = vmatprep.subr.mxu0 0.0
    %3277 = vmatpush2.msra.mxu0 0.0
    %3278 = vmatprep.subr.mxu0 0.0
    %3279 = vmatpush2.msra.mxu0 0.0
    %3280 = vmatprep.subr.mxu0 0.0
    %3281 = vmatpush2.msra.mxu0 0.0
    %3282 = vmatprep.subr.mxu0 0.0
    %3283 = vmatpush2.msra.mxu0 0.0
    %3284 = vmatprep.subr.mxu0 0.0
    %3285 = vmatpush2.msra.mxu0 0.0
    %3286 = vmatprep.subr.mxu0 0.0
    %3287 = vmatpush2.msra.mxu0 0.0
    %3288 = vmatprep.subr.mxu0 0.0
    %3289 = vmatpush2.msra.mxu0 0.0
    %3290 = vmatprep.subr.mxu0 0.0
    %3291 = vmatpush2.msra.mxu0 0.0
    %3292 = vmatprep.subr.mxu0 0.0
    %3293 = vmatpush2.msra.mxu0 0.0
    %3294 = vmatprep.subr.mxu0 0.0
    %3295 = vmatpush2.msra.mxu0 0.0
    %3296 = vmatprep.subr.mxu0 0.0
    %3297 = vmatpush2.msra.mxu0 0.0
    %3298 = vmatprep.subr.mxu0 0.0
    %3299 = vmatpush2.msra.mxu0 0.0
    %3300 = vmatprep.subr.mxu0 0.0
    %3301 = vmatpush2.msra.mxu0 0.0
    %3302 = vmatprep.subr.mxu0 0.0
    %3303 = vmatpush2.msra.mxu0 0.0
    %3304 = vmatprep.subr.mxu0 0.0
    %3305 = vmatpush2.msra.mxu0 0.0
    %3306 = vmatprep.mubr.f32.mxu0 0.0
    %3307 = vmatmul.mubr.f32.gmra.mxu0 %v3170
    %v3308 = vpop.f32.mrf.mxu0
    %v3309 = vadd.f32 %v2149, %v3308
    %v3310 = vpop.f32.mrf.mxu0
    %v3311 = vadd.f32 %v2150, %v3310
    %3312 = vdwg.mxu0
    %v3313 = vxor.u32 %v3238, 2147483648
    %v3314 = vmul.f32 %v3313, 1.442695
    %v3315 = vpow.pop %v3314
    %v3316 = vadd.f32 %v3315, 1.0
    %v3317 = vrcp.pop %v3316
    %v3318 = vmul.f32 1.0, %v3317
    %v3319 = vxor.u32 %v3240, 2147483648
    %v3320 = vmul.f32 %v3319, 1.442695
    %v3321 = vpow.pop %v3320
    %v3322 = vadd.f32 %v3321, 1.0
    %v3323 = vrcp.pop %v3322
    %v3324 = vmul.f32 1.0, %v3323
    %v3325 = vtanh.pop %v3309
    %v3326 = vxor.u32 %v3311, 2147483648
    %v3327 = vmul.f32 %v3326, 1.442695
    %v3328 = vpow.pop %v3327
    %v3329 = vadd.f32 %v3328, 1.0
    %v3330 = vrcp.pop %v3329
    %v3331 = vmul.f32 1.0, %v3330
    %v3332 = vmul.f32 %v3324, %v3168
    %v3333 = vmul.f32 %v3318, %v3325
    %v3334 = vadd.f32 %v3332, %v3333
    %v3335 = vtanh.pop %v3334
    %v3336 = vmul.f32 %v3331, %v3335
    %3337 = vmatprep.subr.mxu0 %v189
    %3338 = vmatpush1.msra.mxu0 %v188
    %3339 = vmatprep.subr.mxu0 %v185
    %3340 = vmatpush1.msra.mxu0 %v184
    %3341 = vmatprep.subr.mxu0 %v181
    %3342 = vmatpush1.msra.mxu0 %v180
    %3343 = vmatprep.subr.mxu0 %v177
    %3344 = vmatpush1.msra.mxu0 %v176
    %3345 = vmatprep.subr.mxu0 %v173
    %3346 = vmatpush1.msra.mxu0 %v172
    %3347 = vmatprep.subr.mxu0 %v169
    %3348 = vmatpush1.msra.mxu0 %v168
    %3349 = vmatprep.subr.mxu0 %v165
    %3350 = vmatpush1.msra.mxu0 %v164
    %3351 = vmatprep.subr.mxu0 %v161
    %3352 = vmatpush1.msra.mxu0 %v160
    %3353 = vmatprep.subr.mxu0 %v157
    %3354 = vmatpush1.msra.mxu0 %v156
    %3355 = vmatprep.subr.mxu0 %v153
    %3356 = vmatpush1.msra.mxu0 %v152
    %3357 = vmatprep.subr.mxu0 %v149
    %3358 = vmatpush1.msra.mxu0 %v148
    %3359 = vmatprep.subr.mxu0 %v145
    %3360 = vmatpush1.msra.mxu0 %v144
    %3361 = vmatprep.subr.mxu0 %v141
    %3362 = vmatpush1.msra.mxu0 %v140
    %3363 = vmatprep.subr.mxu0 %v137
    %3364 = vmatpush1.msra.mxu0 %v136
    %3365 = vmatprep.subr.mxu0 %v133
    %3366 = vmatpush1.msra.mxu0 %v132
    %3367 = vmatprep.subr.mxu0 %v129
    %3368 = vmatpush1.msra.mxu0 %v128
    %3369 = vmatprep.subr.mxu0 0.0
    %3370 = vmatpush2.msra.mxu0 0.0
    %3371 = vmatprep.subr.mxu0 0.0
    %3372 = vmatpush2.msra.mxu0 0.0
    %3373 = vmatprep.subr.mxu0 0.0
    %3374 = vmatpush2.msra.mxu0 0.0
    %3375 = vmatprep.subr.mxu0 0.0
    %3376 = vmatpush2.msra.mxu0 0.0
    %3377 = vmatprep.subr.mxu0 0.0
    %3378 = vmatpush2.msra.mxu0 0.0
    %3379 = vmatprep.subr.mxu0 0.0
    %3380 = vmatpush2.msra.mxu0 0.0
    %3381 = vmatprep.subr.mxu0 0.0
    %3382 = vmatpush2.msra.mxu0 0.0
    %3383 = vmatprep.subr.mxu0 0.0
    %3384 = vmatpush2.msra.mxu0 0.0
    %3385 = vmatprep.subr.mxu0 0.0
    %3386 = vmatpush2.msra.mxu0 0.0
    %3387 = vmatprep.subr.mxu0 0.0
    %3388 = vmatpush2.msra.mxu0 0.0
    %3389 = vmatprep.subr.mxu0 0.0
    %3390 = vmatpush2.msra.mxu0 0.0
    %3391 = vmatprep.subr.mxu0 0.0
    %3392 = vmatpush2.msra.mxu0 0.0
    %3393 = vmatprep.subr.mxu0 0.0
    %3394 = vmatpush2.msra.mxu0 0.0
    %3395 = vmatprep.subr.mxu0 0.0
    %3396 = vmatpush2.msra.mxu0 0.0
    %3397 = vmatprep.subr.mxu0 0.0
    %3398 = vmatpush2.msra.mxu0 0.0
    %3399 = vmatprep.subr.mxu0 0.0
    %3400 = vmatpush2.msra.mxu0 0.0
    %3401 = vmatprep.mubr.f32.mxu0 0.0
    %3402 = vmatmul.mubr.f32.gmra.mxu0 %v3336
    %v3403 = vpop.f32.mrf.mxu0
    %v3404 = vadd.f32 %v2147, %v3403
    %v3405 = vpop.f32.mrf.mxu0
    %v3406 = vadd.f32 %v2148, %v3405
    %3407 = vdwg.mxu0
    %3408 = vmatprep.subr.mxu0 %v191
    %3409 = vmatpush1.msra.mxu0 %v190
    %3410 = vmatprep.subr.mxu0 %v187
    %3411 = vmatpush1.msra.mxu0 %v186
    %3412 = vmatprep.subr.mxu0 %v183
    %3413 = vmatpush1.msra.mxu0 %v182
    %3414 = vmatprep.subr.mxu0 %v179
    %3415 = vmatpush1.msra.mxu0 %v178
    %3416 = vmatprep.subr.mxu0 %v175
    %3417 = vmatpush1.msra.mxu0 %v174
    %3418 = vmatprep.subr.mxu0 %v171
    %3419 = vmatpush1.msra.mxu0 %v170
    %3420 = vmatprep.subr.mxu0 %v167
    %3421 = vmatpush1.msra.mxu0 %v166
    %3422 = vmatprep.subr.mxu0 %v163
    %3423 = vmatpush1.msra.mxu0 %v162
    %3424 = vmatprep.subr.mxu0 %v159
    %3425 = vmatpush1.msra.mxu0 %v158
    %3426 = vmatprep.subr.mxu0 %v155
    %3427 = vmatpush1.msra.mxu0 %v154
    %3428 = vmatprep.subr.mxu0 %v151
    %3429 = vmatpush1.msra.mxu0 %v150
    %3430 = vmatprep.subr.mxu0 %v147
    %3431 = vmatpush1.msra.mxu0 %v146
    %3432 = vmatprep.subr.mxu0 %v143
    %3433 = vmatpush1.msra.mxu0 %v142
    %3434 = vmatprep.subr.mxu0 %v139
    %3435 = vmatpush1.msra.mxu0 %v138
    %3436 = vmatprep.subr.mxu0 %v135
    %3437 = vmatpush1.msra.mxu0 %v134
    %3438 = vmatprep.subr.mxu0 %v131
    %3439 = vmatpush1.msra.mxu0 %v130
    %3440 = vmatprep.subr.mxu0 0.0
    %3441 = vmatpush2.msra.mxu0 0.0
    %3442 = vmatprep.subr.mxu0 0.0
    %3443 = vmatpush2.msra.mxu0 0.0
    %3444 = vmatprep.subr.mxu0 0.0
    %3445 = vmatpush2.msra.mxu0 0.0
    %3446 = vmatprep.subr.mxu0 0.0
    %3447 = vmatpush2.msra.mxu0 0.0
    %3448 = vmatprep.subr.mxu0 0.0
    %3449 = vmatpush2.msra.mxu0 0.0
    %3450 = vmatprep.subr.mxu0 0.0
    %3451 = vmatpush2.msra.mxu0 0.0
    %3452 = vmatprep.subr.mxu0 0.0
    %3453 = vmatpush2.msra.mxu0 0.0
    %3454 = vmatprep.subr.mxu0 0.0
    %3455 = vmatpush2.msra.mxu0 0.0
    %3456 = vmatprep.subr.mxu0 0.0
    %3457 = vmatpush2.msra.mxu0 0.0
    %3458 = vmatprep.subr.mxu0 0.0
    %3459 = vmatpush2.msra.mxu0 0.0
    %3460 = vmatprep.subr.mxu0 0.0
    %3461 = vmatpush2.msra.mxu0 0.0
    %3462 = vmatprep.subr.mxu0 0.0
    %3463 = vmatpush2.msra.mxu0 0.0
    %3464 = vmatprep.subr.mxu0 0.0
    %3465 = vmatpush2.msra.mxu0 0.0
    %3466 = vmatprep.subr.mxu0 0.0
    %3467 = vmatpush2.msra.mxu0 0.0
    %3468 = vmatprep.subr.mxu0 0.0
    %3469 = vmatpush2.msra.mxu0 0.0
    %3470 = vmatprep.subr.mxu0 0.0
    %3471 = vmatpush2.msra.mxu0 0.0
    %3472 = vmatprep.mubr.f32.mxu0 0.0
    %3473 = vmatmul.mubr.f32.gmra.mxu0 %v3336
    %v3474 = vpop.f32.mrf.mxu0
    %v3475 = vadd.f32 %v2149, %v3474
    %v3476 = vpop.f32.mrf.mxu0
    %v3477 = vadd.f32 %v2150, %v3476
    %3478 = vdwg.mxu0
    %v3479 = vxor.u32 %v3404, 2147483648
    %v3480 = vmul.f32 %v3479, 1.442695
    %v3481 = vpow.pop %v3480
    %v3482 = vadd.f32 %v3481, 1.0
    %v3483 = vrcp.pop %v3482
    %v3484 = vmul.f32 1.0, %v3483
    %v3485 = vxor.u32 %v3406, 2147483648
    %v3486 = vmul.f32 %v3485, 1.442695
    %v3487 = vpow.pop %v3486
    %v3488 = vadd.f32 %v3487, 1.0
    %v3489 = vrcp.pop %v3488
    %v3490 = vmul.f32 1.0, %v3489
    %v3491 = vtanh.pop %v3475
    %v3492 = vxor.u32 %v3477, 2147483648
    %v3493 = vmul.f32 %v3492, 1.442695
    %v3494 = vpow.pop %v3493
    %v3495 = vadd.f32 %v3494, 1.0
    %v3496 = vrcp.pop %v3495
    %v3497 = vmul.f32 1.0, %v3496
    %v3498 = vmul.f32 %v3490, %v3334
    %v3499 = vmul.f32 %v3484, %v3491
    %v3500 = vadd.f32 %v3498, %v3499
    %v3501 = vtanh.pop %v3500
    %v3502 = vmul.f32 %v3497, %v3501
    %v3504 = vrot.slane %v2506, 6
    %v3507 = vrot.slane %v2672, 4
    %v3510 = vrot.slane %v2838, 2
    %v3513 = vrot.slane %v3170, 6
    %v3516 = vrot.slane %v3336, 4
    %v3519 = vrot.slane %v3502, 2
    %v3521 = vsel %vm2175, %v2340, %v3504
    %v3522 = vsel %vm1740, %v3521, %v3507
    %vm3523 = vcmask 1045504
    %v3524 = vsel %vm3523, %v3522, %v3510
    %v3525 = vsel %vm2175, %v3004, %v3513
    %v3526 = vsel %vm1740, %v3525, %v3516
    %v3527 = vsel %vm3523, %v3526, %v3519
    %v3528 = vld [vmem:[%s16] sm:$0xff]
    %v3529 = vld [vmem:[%s16 + $0x8] sm:$0xff]
    %v3530 = vld [vmem:[%s16 + $0x10] sm:$0xff]
    %v3531 = vld [vmem:[%s16 + $0x18] sm:$0xff]
    %v3532 = vld [vmem:[%s16 + $0x20] sm:$0xff]
    %v3533 = vld [vmem:[%s16 + $0x28] sm:$0xff]
    %v3534 = vld [vmem:[%s16 + $0x30] sm:$0xff]
    %v3535 = vld [vmem:[%s16 + $0x38] sm:$0xff]
    %v3536 = vld [vmem:[%s16 + $0x40] sm:$0xff]
    %v3537 = vld [vmem:[%s16 + $0x48] sm:$0xff]
    %v3538 = vld [vmem:[%s16 + $0x50] sm:$0xff]
    %v3539 = vld [vmem:[%s16 + $0x58] sm:$0xff]
    %v3540 = vld [vmem:[%s16 + $0x60] sm:$0xff]
    %v3541 = vld [vmem:[%s16 + $0x68] sm:$0xff]
    %v3542 = vld [vmem:[%s16 + $0x70] sm:$0xff]
    %v3543 = vld [vmem:[%s16 + $0x78] sm:$0xff]
    %v3544 = vld [vmem:[%s17] sm:$0x1]
    %v3546 = vlaneseq
    %v3547 = vshrl.u32 %v3546, 7
    %v3548 = vsub.s32 0, %v3547
    %v3549 = vrot.slane %v3544, %v3548
    %3551 = vmatprep.subr.mxu0 0.0
    %3552 = vmatpush1.msra.mxu0 %v3543
    %3553 = vmatprep.subr.mxu0 0.0
    %3554 = vmatpush1.msra.mxu0 %v3542
    %3555 = vmatprep.subr.mxu0 0.0
    %3556 = vmatpush1.msra.mxu0 %v3541
    %3557 = vmatprep.subr.mxu0 0.0
    %3558 = vmatpush1.msra.mxu0 %v3540
    %3559 = vmatprep.subr.mxu0 0.0
    %3560 = vmatpush1.msra.mxu0 %v3539
    %3561 = vmatprep.subr.mxu0 0.0
    %3562 = vmatpush1.msra.mxu0 %v3538
    %3563 = vmatprep.subr.mxu0 0.0
    %3564 = vmatpush1.msra.mxu0 %v3537
    %3565 = vmatprep.subr.mxu0 0.0
    %3566 = vmatpush1.msra.mxu0 %v3536
    %3567 = vmatprep.subr.mxu0 0.0
    %3568 = vmatpush1.msra.mxu0 %v3535
    %3569 = vmatprep.subr.mxu0 0.0
    %3570 = vmatpush1.msra.mxu0 %v3534
    %3571 = vmatprep.subr.mxu0 0.0
    %3572 = vmatpush1.msra.mxu0 %v3533
    %3573 = vmatprep.subr.mxu0 0.0
    %3574 = vmatpush1.msra.mxu0 %v3532
    %3575 = vmatprep.subr.mxu0 0.0
    %3576 = vmatpush1.msra.mxu0 %v3531
    %3577 = vmatprep.subr.mxu0 0.0
    %3578 = vmatpush1.msra.mxu0 %v3530
    %3579 = vmatprep.subr.mxu0 0.0
    %3580 = vmatpush1.msra.mxu0 %v3529
    %3581 = vmatprep.subr.mxu0 0.0
    %3582 = vmatpush1.msra.mxu0 %v3528
    %3583 = vmatprep.subr.mxu0 0.0
    %3584 = vmatpush2.msra.mxu0 0.0
    %3585 = vmatprep.subr.mxu0 0.0
    %3586 = vmatpush2.msra.mxu0 0.0
    %3587 = vmatprep.subr.mxu0 0.0
    %3588 = vmatpush2.msra.mxu0 0.0
    %3589 = vmatprep.subr.mxu0 0.0
    %3590 = vmatpush2.msra.mxu0 0.0
    %3591 = vmatprep.subr.mxu0 0.0
    %3592 = vmatpush2.msra.mxu0 0.0
    %3593 = vmatprep.subr.mxu0 0.0
    %3594 = vmatpush2.msra.mxu0 0.0
    %3595 = vmatprep.subr.mxu0 0.0
    %3596 = vmatpush2.msra.mxu0 0.0
    %3597 = vmatprep.subr.mxu0 0.0
    %3598 = vmatpush2.msra.mxu0 0.0
    %3599 = vmatprep.subr.mxu0 0.0
    %3600 = vmatpush2.msra.mxu0 0.0
    %3601 = vmatprep.subr.mxu0 0.0
    %3602 = vmatpush2.msra.mxu0 0.0
    %3603 = vmatprep.subr.mxu0 0.0
    %3604 = vmatpush2.msra.mxu0 0.0
    %3605 = vmatprep.subr.mxu0 0.0
    %3606 = vmatpush2.msra.mxu0 0.0
    %3607 = vmatprep.subr.mxu0 0.0
    %3608 = vmatpush2.msra.mxu0 0.0
    %3609 = vmatprep.subr.mxu0 0.0
    %3610 = vmatpush2.msra.mxu0 0.0
    %3611 = vmatprep.subr.mxu0 0.0
    %3612 = vmatpush2.msra.mxu0 0.0
    %3613 = vmatprep.subr.mxu0 0.0
    %3614 = vmatpush2.msra.mxu0 0.0
    %3615 = vmatprep.mubr.f32.mxu0 0.0
    %3616 = vmatmul.mubr.f32.gmra.mxu0 %v3524
    %v3617 = vpop.f32.mrf.mxu0
    %v3618 = vadd.f32 %v3549, %v3617
    %v3619 = vpop.f32.mrf.mxu0
    %3620 = vmatprep.mubr.f32.mxu0 0.0
    %3621 = vmatmul.mubr.f32.gmra.mxu0 %v3527
    %v3622 = vpop.f32.mrf.mxu0
    %v3623 = vadd.f32 %v3549, %v3622
    %v3624 = vpop.f32.mrf.mxu0
    %3625 = vdwg.mxu0
    %3626 = vst.msk [vmem:[%s18] sm:$0xff] %vm2171, %v3618
    %3627 = vst.msk [vmem:[%s18 + $0x8] sm:$0xff] %vm2171, %v3623
    // Predicated region
    $region74: #{cvae_forward.1} parent=1 // pred_check
      _
    $region75: #{cvae_forward.1} parent=1 // pred_check_branch
      %3629 = sbr.rel (0) target = $region77
    $region76: #{cvae_forward.1} parent=1 // pred_region
      _
    $region77: #{cvae_forward.1} parent=1 // pred_fallthru
      _
    // Predicated region
    $region78: #{cvae_forward.1} parent=1 // pred_check
      _
    $region79: #{cvae_forward.1} parent=1 // pred_check_branch
      %3631 = sbr.rel (0) target = $region81
    $region80: #{cvae_forward.1} parent=1 // pred_region
      %s3633 = ssub.s32 32, 32
      %3634 = vsyncadd [#allocation3], %s3633
      %s3636 = sshll.u32 [#allocation2], 4
      %s3637 = int_to_ptr.vmem [resolvable:$true] %s3636
      %3639 = dma.vmem_to_hbm [thread:$0]  %s3637, 32, %s19, [#allocation3]
    $region81: #{cvae_forward.1} parent=1 // pred_fallthru
      _
    // Predicated region
    $region82: #{cvae_forward.1} parent=1 // pred_check
      _
    $region83: #{cvae_forward.1} parent=1 // pred_check_branch
      %3641 = sbr.rel (0) target = $region85
    $region84: #{cvae_forward.1} parent=1 // pred_region
      %s3643 = ssub.s32 32, 32
      %3644 = vsyncadd [#allocation5], %s3643
      %s3646 = sshll.u32 [#allocation4], 4
      %s3647 = int_to_ptr.vmem [resolvable:$true] %s3646
      %3649 = dma.vmem_to_hbm [thread:$0]  %s3647, 32, %s20, [#allocation5]
    $region85: #{cvae_forward.1} parent=1 // pred_fallthru
      _
    // Predicated region
    $region86: #{cvae_forward.1} parent=1 // pred_check
      _
    $region87: #{cvae_forward.1} parent=1 // pred_check_branch
      %3651 = sbr.rel (0) target = $region89
    $region88: #{cvae_forward.1} parent=1 // pred_region
      _
    $region89: #{cvae_forward.1} parent=1 // pred_fallthru
      _
    // Predicated region
    $region90: #{cvae_forward.1} parent=1 // pred_check
      _
    $region91: #{cvae_forward.1} parent=1 // pred_check_branch
      %3653 = sbr.rel (0) target = $region93
    $region92: #{cvae_forward.1} parent=1 // pred_region
      %3654 = dma.done [#allocation3], 32
    $region93: #{cvae_forward.1} parent=1 // pred_fallthru
      _
    // Predicated region
    $region94: #{cvae_forward.1} parent=1 // pred_check
      _
    $region95: #{cvae_forward.1} parent=1 // pred_check_branch
      %3656 = sbr.rel (0) target = $region97
    $region96: #{cvae_forward.1} parent=1 // pred_region
      %3657 = dma.done [#allocation5], 32
    $region97: #{cvae_forward.1} parent=1 // pred_fallthru
      _
    %3658 = vsyncpa [#allocation3], 1
    %3659 = vsyncpa [#allocation5], 1

</llo_original>
